<compile_context>
chip_gen: v7x
topology: tpu7x:2x2x1
jax: 0.10.0
libtpu: 0.0.40
codegen_flags: <defaults>
</compile_context>

<pallas_src>
import functools

import jax
import jax.numpy as jnp
from jax import lax
from jax.experimental import pallas as pl
from jax.experimental.pallas import tpu as pltpu

_EPS = 1e-5
_EXPANSION = 4

# VMEM budgeting: keep live (double-buffered) blocks well under the 32 MiB
# scoped default and v7x's 64 MiB physical VMEM, and raise the scoped limit.
_TILE_BUDGET = 20 * 1024 * 1024
_VMEM_LIMIT = 48 * 1024 * 1024


# --------------------------------------------------------------------------
# Tile-size heuristics (VMEM-aware).
# --------------------------------------------------------------------------
def _k_tile(cin):
    if cin <= 1024:
        return cin
    for tk in (1024, 512, 256, 128):
        if cin % tk == 0:
            return tk
    return cin


def _m_tile(m, tk, nk, cout, in_dtype, out_dtype, has_res):
    bi = jnp.dtype(in_dtype).itemsize
    bo = jnp.dtype(out_dtype).itemsize
    tm = 1024
    while tm > 128:
        need = tm * 2 * (tk * bi + cout * bo)          # x + out blocks (double-buffered)
        if has_res:
            need += tm * 2 * cout * bi                 # residual blocks
        need += 2 * tk * cout * bi                     # weight block
        if nk > 1:
            need += tm * cout * 4                      # f32 accumulator scratch
        if need <= _TILE_BUDGET:
            break
        tm //= 2
    return tm if m > tm else m


def _row_tile(h, w, cin, cout, s, dtype):
    b = jnp.dtype(dtype).itemsize
    hi = max(s, h // 2)                # prefer >= 2 row steps per image (megacore / pipelining)
    for th in range(hi, s - 1, -1):
        if h % th or th % s:
            continue
        need = (2 * th * w * cin * b                    # centre block (double-buffered)
                + 9 * th * w * cin * b                  # im2col patches
                + th * w * cout * 4                     # f32 pre-pool accumulator
                + 2 * (th // s) * (w // s) * cout * b   # output block
                + 2 * 9 * cin * cout * b)               # weights
        if need <= _TILE_BUDGET:
            return th
    return h


# --------------------------------------------------------------------------
# Kernel 1: flat 1x1 conv (matmul over channels, BN scale pre-folded into W)
#           + bias + optional residual add + optional ReLU.
# --------------------------------------------------------------------------
def _mm_bias_kernel(x_ref, w_ref, b_ref, *rest, relu, has_res):
    if has_res:
        r_ref, o_ref = rest
    else:
        (o_ref,) = rest
    acc = jnp.dot(x_ref[...], w_ref[...], preferred_element_type=jnp.float32)
    acc = acc + b_ref[...]
    if has_res:
        acc = acc + r_ref[...].astype(jnp.float32)
    if relu:
        acc = jnp.maximum(acc, 0.0)
    o_ref[...] = acc.astype(o_ref.dtype)


def _mm_bias_ktiled_kernel(x_ref, w_ref, b_ref, *rest, relu, has_res):
    if has_res:
        r_ref, o_ref, acc_ref = rest
    else:
        o_ref, acc_ref = rest

    @pl.when(pl.program_id(1) == 0)
    def _():
        acc_ref[...] = jnp.zeros_like(acc_ref)

    acc_ref[...] += jnp.dot(x_ref[...], w_ref[...],
                            preferred_element_type=jnp.float32)

    @pl.when(pl.program_id(1) == pl.num_programs(1) - 1)
    def _():
        acc = acc_ref[...] + b_ref[...]
        if has_res:
            acc = acc + r_ref[...].astype(jnp.float32)
        if relu:
            acc = jnp.maximum(acc, 0.0)
        o_ref[...] = acc.astype(o_ref.dtype)


def conv1x1_bn(x2d, wmat, bias, *, relu, residual=None, out_dtype=None):
    """x2d: (M, Cin); wmat: (Cin, Cout) with BN scale pre-folded; bias: (Cout,)."""
    m, cin = x2d.shape
    cout = wmat.shape[1]
    out_dtype = x2d.dtype if out_dtype is None else out_dtype
    has_res = residual is not None
    bias2 = bias.reshape(1, cout).astype(jnp.float32)

    tk = _k_tile(cin)
    nk = cin // tk
    tm = _m_tile(m, tk, nk, cout, x2d.dtype, out_dtype, has_res)
    nm = pl.cdiv(m, tm)   # partial tail block handled by Pallas (no giant TM=M fallback)

    args = [x2d, wmat, bias2] + ([residual] if has_res else [])
    out_shape = jax.ShapeDtypeStruct((m, cout), out_dtype)
    params = pltpu.CompilerParams(
        dimension_semantics=(("parallel",) if nk == 1
                             else ("parallel", "arbitrary")),
        vmem_limit_bytes=_VMEM_LIMIT)

    # TODO(synk): weight/bias blocks are constant-index; pipeline_mode=pl.Buffered(1)
    # (or a persistent VMEM scratch) would halve their footprint.
    if nk == 1:
        in_specs = [
            pl.BlockSpec((tm, cin), lambda i: (i, 0)),
            pl.BlockSpec((cin, cout), lambda i: (0, 0)),
            pl.BlockSpec((1, cout), lambda i: (0, 0)),
        ]
        if has_res:
            in_specs.append(pl.BlockSpec((tm, cout), lambda i: (i, 0)))
        kernel = functools.partial(_mm_bias_kernel, relu=relu, has_res=has_res)
        return pl.pallas_call(
            kernel, out_shape=out_shape, grid=(nm,),
            in_specs=in_specs,
            out_specs=pl.BlockSpec((tm, cout), lambda i: (i, 0)),
            compiler_params=params,
        )(*args)

    in_specs = [
        pl.BlockSpec((tm, tk), lambda i, k: (i, k)),
        pl.BlockSpec((tk, cout), lambda i, k: (k, 0)),
        pl.BlockSpec((1, cout), lambda i, k: (0, 0)),
    ]
    if has_res:
        in_specs.append(pl.BlockSpec((tm, cout), lambda i, k: (i, 0)))
    kernel = functools.partial(_mm_bias_ktiled_kernel, relu=relu, has_res=has_res)
    return pl.pallas_call(
        kernel, out_shape=out_shape, grid=(nm, nk),
        in_specs=in_specs,
        out_specs=pl.BlockSpec((tm, cout), lambda i, k: (i, 0)),
        scratch_shapes=[pltpu.VMEM((tm, cout), jnp.float32)],
        compiler_params=params,
    )(*args)


# --------------------------------------------------------------------------
# Kernel 2: row-tiled 3x3 conv (pad=1) + folded BN + ReLU + fused AvgPool(s).
#   - halo rows come in as clamped single-row blocks (zeroed at image edges)
#   - 9 taps are gathered along the channel (lane) axis -> single im2col matmul
# --------------------------------------------------------------------------
def _conv3x3_kernel(xc_ref, xt_ref, xb_ref, w_ref, b_ref, o_ref, *,
                    th, w, s, n_rows):
    i = pl.program_id(1)
    cin = xc_ref.shape[-1]
    cout = o_ref.shape[-1]

    xc = xc_ref[0]                                     # (th, w, cin)
    top = xt_ref[0]                                    # (1, w, cin)
    bot = xb_ref[0]
    top = jnp.where(i > 0, top, jnp.zeros_like(top))           # zero halo at image edge
    bot = jnp.where(i < n_rows - 1, bot, jnp.zeros_like(bot))
    zcol = jnp.zeros((th + 2, 1, cin), xc.dtype)
    xpad = jnp.concatenate([top, xc, bot], axis=0)             # (th+2, w, cin)
    xpad = jnp.concatenate([zcol, xpad, zcol], axis=1)         # (th+2, w+2, cin)

    taps = [xpad[dy:dy + th, dx:dx + w, :]
            for dy in range(3) for dx in range(3)]
    patches = jnp.concatenate(taps, axis=-1).reshape(th * w, 9 * cin)
    acc = jnp.dot(patches, w_ref[...], preferred_element_type=jnp.float32)

    acc = jnp.maximum(acc + b_ref[...], 0.0)           # folded bn2 bias + ReLU
    out = acc.reshape(th, w, cout)
    if s > 1:                                          # fused AvgPool2d(s)
        out = out.reshape(th // s, s, w, cout).sum(axis=1)
        out = out.reshape(th // s, w // s, s, cout).sum(axis=2) * (1.0 / (s * s))
    o_ref[...] = out[None].astype(o_ref.dtype)


def conv3x3_bn_relu_pool(x_nhwc, w9, bias, *, stride):
    n, h, w, cin = x_nhwc.shape
    cout = w9.shape[-1]
    s = stride if stride > 1 else 1
    assert h % s == 0 and w % s == 0
    th = _row_tile(h, w, cin, cout, s, x_nhwc.dtype)
    n_rows = h // th
    bias2 = bias.reshape(1, cout).astype(jnp.float32)
    kernel = functools.partial(_conv3x3_kernel, th=th, w=w, s=s, n_rows=n_rows)
    return pl.pallas_call(
        kernel,
        out_shape=jax.ShapeDtypeStruct((n, h // s, w // s, cout), x_nhwc.dtype),
        grid=(n, n_rows),
        in_specs=[
            pl.BlockSpec((1, th, w, cin), lambda b, i: (b, i, 0, 0)),
            pl.BlockSpec((1, 1, w, cin),
                         lambda b, i: (b, jnp.maximum(i * th - 1, 0), 0, 0)),
            pl.BlockSpec((1, 1, w, cin),
                         lambda b, i: (b, jnp.minimum(i * th + th, h - 1), 0, 0)),
            pl.BlockSpec((9 * cin, cout), lambda b, i: (0, 0)),
            pl.BlockSpec((1, cout), lambda b, i: (0, 0)),
        ],
        out_specs=pl.BlockSpec((1, th // s, w // s, cout),
                               lambda b, i: (b, i, 0, 0)),
        compiler_params=pltpu.CompilerParams(
            dimension_semantics=("parallel", "parallel"),
            vmem_limit_bytes=_VMEM_LIMIT),
    )(x_nhwc, x_nhwc, x_nhwc, w9, bias2)


# --------------------------------------------------------------------------
# Kernel 3: downsample path: AvgPool2d(s) + 1x1 conv + folded BN, fused.
# --------------------------------------------------------------------------
def _pool_conv1x1_kernel(x_ref, w_ref, b_ref, o_ref, *, th, w, s):
    cin = x_ref.shape[-1]
    cout = o_ref.shape[-1]
    x = x_ref[0].astype(jnp.float32)                   # (th, w, cin)
    x = x.reshape(th // s, s, w, cin).sum(axis=1)
    x = x.reshape(th // s, w // s, s, cin).sum(axis=2) * (1.0 / (s * s))
    x = x.reshape((th // s) * (w // s), cin).astype(x_ref.dtype)
    acc = jnp.dot(x, w_ref[...], preferred_element_type=jnp.float32)
    acc = acc + b_ref[...]
    o_ref[...] = acc.reshape(1, th // s, w // s, cout).astype(o_ref.dtype)


def pool_conv1x1_bn(x_nhwc, wmat, bias, *, stride):
    n, h, w, cin = x_nhwc.shape
    cout = wmat.shape[-1]
    s = stride
    assert h % s == 0 and w % s == 0
    th = _row_tile(h, w, cin, cout, s, x_nhwc.dtype)
    n_rows = h // th
    bias2 = bias.reshape(1, cout).astype(jnp.float32)
    kernel = functools.partial(_pool_conv1x1_kernel, th=th, w=w, s=s)
    return pl.pallas_call(
        kernel,
        out_shape=jax.ShapeDtypeStruct((n, h // s, w // s, cout), x_nhwc.dtype),
        grid=(n, n_rows),
        in_specs=[
            pl.BlockSpec((1, th, w, cin), lambda b, i: (b, i, 0, 0)),
            pl.BlockSpec((cin, cout), lambda b, i: (0, 0)),
            pl.BlockSpec((1, cout), lambda b, i: (0, 0)),
        ],
        out_specs=pl.BlockSpec((1, th // s, w // s, cout),
                               lambda b, i: (b, i, 0, 0)),
        compiler_params=pltpu.CompilerParams(
            dimension_semantics=("parallel", "parallel"),
            vmem_limit_bytes=_VMEM_LIMIT),
    )(x_nhwc, wmat, bias2)


# --------------------------------------------------------------------------
# Parameter setup (deterministic, synthetic) and BN folding.
# --------------------------------------------------------------------------
def _fold_bn(bn):
    scale = bn["gamma"] / jnp.sqrt(bn["var"] + _EPS)
    shift = bn["beta"] - bn["mean"] * scale
    return scale, shift


def init_params(key, inplanes, planes, stride):
    keys = jax.random.split(key, 8)

    def conv_w(k, cout, cin, kh, kw):
        fan_in = cin * kh * kw
        return jax.random.normal(k, (cout, cin, kh, kw), jnp.float32) / jnp.sqrt(
            float(fan_in))

    def bn_p(k, c):
        k1, k2, k3, k4 = jax.random.split(k, 4)
        return dict(
            gamma=1.0 + 0.1 * jax.random.normal(k1, (c,), jnp.float32),
            beta=0.1 * jax.random.normal(k2, (c,), jnp.float32),
            mean=0.1 * jax.random.normal(k3, (c,), jnp.float32),
            var=0.5 + jax.random.uniform(k4, (c,), jnp.float32),
        )

    p = dict(
        w1=conv_w(keys[0], planes, inplanes, 1, 1), bn1=bn_p(keys[1], planes),
        w2=conv_w(keys[2], planes, planes, 3, 3), bn2=bn_p(keys[3], planes),
        w3=conv_w(keys[4], planes * _EXPANSION, planes, 1, 1),
        bn3=bn_p(keys[5], planes * _EXPANSION),
    )
    if stride > 1 or inplanes != planes * _EXPANSION:
        p["wd"] = conv_w(keys[6], planes * _EXPANSION, inplanes, 1, 1)
        p["bnd"] = bn_p(keys[7], planes * _EXPANSION)
    return p


# --------------------------------------------------------------------------
# Bottleneck forward (wrapper gluing the Pallas kernels together).
# --------------------------------------------------------------------------
def bottleneck_forward(x_nchw, p, stride, compute_dtype=jnp.bfloat16):
    n, cin, h, w = x_nchw.shape
    planes = p["w1"].shape[0]
    cout = planes * _EXPANSION
    cdt = compute_dtype

    # TODO(synk): the NCHW<->NHWC boundary transposes could be folded into the
    # first/last matmul kernels; kept as XLA transposes here.
    # TODO(synk): for v5e, sub-128 output channels could be padded to 128 to
    # avoid masked partial stores; not done at these shapes.
    x = jnp.transpose(x_nchw, (0, 2, 3, 1)).astype(cdt)            # NCHW -> NHWC

    # conv1 (1x1) + bn1 + relu  (BN scale folded into W)
    s1, b1 = _fold_bn(p["bn1"])
    w1 = (p["w1"][:, :, 0, 0].T * s1[None, :]).astype(cdt)          # (cin, planes)
    out = conv1x1_bn(x.reshape(n * h * w, cin), w1, b1, relu=True)
    out = out.reshape(n, h, w, planes)

    # conv2 (3x3, pad=1) + bn2 + relu + fused avgpool(stride)
    s2, b2 = _fold_bn(p["bn2"])
    w2 = (jnp.transpose(p["w2"], (2, 3, 1, 0)) * s2)                 # OIHW -> HWIO, scale folded
    w2 = w2.reshape(9 * planes, planes).astype(cdt)
    out = conv3x3_bn_relu_pool(out, w2, b2, stride=stride)
    _, ho, wo, _ = out.shape

    # identity / downsample path
    if "wd" in p:
        sd, bd = _fold_bn(p["bnd"])
        wd = (p["wd"][:, :, 0, 0].T * sd[None, :]).astype(cdt)       # (cin, cout)
        if stride > 1:
            identity = pool_conv1x1_bn(x, wd, bd, stride=stride)     # fused pool+conv+bn
            identity = identity.reshape(n * ho * wo, cout)
        else:
            identity = conv1x1_bn(x.reshape(n * h * w, cin), wd, bd, relu=False)
    else:
        identity = x.reshape(n * h * w, cin)

    # conv3 (1x1) + bn3 + residual add + relu (fully fused), f32 output
    s3, b3 = _fold_bn(p["bn3"])
    w3 = (p["w3"][:, :, 0, 0].T * s3[None, :]).astype(cdt)           # (planes, cout)
    out = conv1x1_bn(out.reshape(n * ho * wo, planes), w3, b3,
                     relu=True, residual=identity, out_dtype=jnp.float32)
    out = out.reshape(n, ho, wo, cout)
    return jnp.transpose(out, (0, 3, 1, 2))                          # NHWC -> NCHW


# --------------------------------------------------------------------------
# Pure-JAX reference (NCHW, mirrors the PyTorch forward in eval mode).
# --------------------------------------------------------------------------
def ref_forward(x, p, stride):
    def bn_apply(v, b):
        s = b["gamma"] / jnp.sqrt(b["var"] + _EPS)
        sh = b["beta"] - b["mean"] * s
        return v * s[None, :, None, None] + sh[None, :, None, None]

    def conv(v, wgt, pad):
        return lax.conv_general_dilated(
            v, wgt, (1, 1), pad, dimension_numbers=("NCHW", "OIHW", "NCHW"))

    def pool(v, s):
        if s <= 1:
            return v
        n, c, h, w = v.shape
        return v.reshape(n, c, h // s, s, w // s, s).mean(axis=(3, 5))

    out = jax.nn.relu(bn_apply(conv(x, p["w1"], "VALID"), p["bn1"]))
    out = jax.nn.relu(bn_apply(conv(out, p["w2"], ((1, 1), (1, 1))), p["bn2"]))
    out = pool(out, stride)
    out = bn_apply(conv(out, p["w3"], "VALID"), p["bn3"])
    if "wd" in p:
        identity = bn_apply(conv(pool(x, stride), p["wd"], "VALID"), p["bnd"])
    else:
        identity = x
    return jax.nn.relu(out + identity)


def _check_case(name, key, n, inplanes, planes, stride, h, w):
    kx, kp = jax.random.split(key)
    x = jax.random.normal(kx, (n, inplanes, h, w), jnp.float32)
    params = init_params(kp, inplanes, planes, stride)
    ref = ref_forward(x, params, stride)

    fwd = jax.jit(bottleneck_forward, static_argnums=(2, 3))

    # f32 compute path: tight check against the reference.
    out32 = jax.block_until_ready(fwd(x, params, stride, jnp.float32))
    assert out32.shape == (n, planes * _EXPANSION, h // stride, w // stride)
    err32 = float(jnp.max(jnp.abs(out32 - ref)))
    assert err32 < 2e-3, f"{name}: f32 mismatch vs reference: {err32}"

    # bf16 storage + f32 accumulation (default fast path): relative check.
    out16 = jax.block_until_ready(fwd(x, params, stride, jnp.bfloat16))
    rel16 = (float(jnp.max(jnp.abs(out16 - ref)))
             / (float(jnp.max(jnp.abs(ref))) + 1e-6))
    assert rel16 < 5e-2, f"{name}: bf16 mismatch vs reference: {rel16}"


if __name__ == "__main__":
    key = jax.random.PRNGKey(0)
    k1, k2 = jax.random.split(key)
    # Downsample path: stride 2, inplanes != planes * 4.
    _check_case("stride2", k1, 2, 16, 8, 2, 16, 16)
    # Identity path: stride 1, inplanes == planes * 4.
    _check_case("stride1", k2, 2, 32, 8, 1, 8, 8)
    print("KERNEL_OK")
</pallas_src>

<mosaic_0001>
module attributes {stable_mosaic.version = 11 : i64} {
  func.func @_conv3x3_kernel(%arg0: i32, %arg1: i32, %arg2: memref<1x8x16x8xf32, #tpu.memory_space<vmem>>, %arg3: memref<1x1x16x8xf32, #tpu.memory_space<vmem>>, %arg4: memref<1x1x16x8xf32, #tpu.memory_space<vmem>>, %arg5: memref<72x8xf32, #tpu.memory_space<vmem>>, %arg6: memref<1x8xf32, #tpu.memory_space<vmem>>, %arg7: memref<1x4x8x8xf32, #tpu.memory_space<vmem>>) attributes {dimension_semantics = [#tpu.dimension_semantics<parallel>, #tpu.dimension_semantics<parallel>], iteration_bounds = array<i64: 2, 2>, scalar_prefetch = 0 : i64, scratch_operands = 0 : i64, tpu.core_type = #tpu.core_type<tc>, window_params = [{transform_indices = @transform_0, window_bounds = array<i64: 1, 8, 16, 8>}, {transform_indices = @transform_1, window_bounds = array<i64: 1, 1, 16, 8>}, {transform_indices = @transform_2, window_bounds = array<i64: 1, 1, 16, 8>}, {pipeline_mode = #tpu.pipeline_mode<synchronous>, transform_indices = @transform_3, window_bounds = array<i64: 72, 8>}, {pipeline_mode = #tpu.pipeline_mode<synchronous>, transform_indices = @transform_4, window_bounds = array<i64: 1, 8>}, {transform_indices = @transform_5, window_bounds = array<i64: 1, 4, 8, 8>}]} {
    %c0 = arith.constant 0 : index
    %c0_0 = arith.constant 0 : index
    %c0_1 = arith.constant 0 : index
    %c0_2 = arith.constant 0 : index
    %0 = vector.load %arg2[%c0, %c0_0, %c0_1, %c0_2] : memref<1x8x16x8xf32, #tpu.memory_space<vmem>>, vector<1x8x16x8xf32>
    %1 = vector.shape_cast %0 : vector<1x8x16x8xf32> to vector<8x16x8xf32>
    %c0_3 = arith.constant 0 : index
    %c0_4 = arith.constant 0 : index
    %c0_5 = arith.constant 0 : index
    %c0_6 = arith.constant 0 : index
    %2 = vector.load %arg3[%c0_3, %c0_4, %c0_5, %c0_6] : memref<1x1x16x8xf32, #tpu.memory_space<vmem>>, vector<1x1x16x8xf32>
    %3 = vector.shape_cast %2 : vector<1x1x16x8xf32> to vector<1x16x8xf32>
    %c0_7 = arith.constant 0 : index
    %c0_8 = arith.constant 0 : index
    %c0_9 = arith.constant 0 : index
    %c0_10 = arith.constant 0 : index
    %4 = vector.load %arg4[%c0_7, %c0_8, %c0_9, %c0_10] : memref<1x1x16x8xf32, #tpu.memory_space<vmem>>, vector<1x1x16x8xf32>
    %5 = vector.shape_cast %4 : vector<1x1x16x8xf32> to vector<1x16x8xf32>
    %c0_i32 = arith.constant 0 : i32
    %6 = arith.cmpi sgt, %arg1, %c0_i32 : i32
    %cst = arith.constant 0.000000e+00 : f32
    %7 = vector.broadcast %cst : f32 to vector<1x16x8xf32>
    %8 = arith.select %6, %3, %7 : vector<1x16x8xf32>
    %c1_i32 = arith.constant 1 : i32
    %9 = arith.cmpi slt, %arg1, %c1_i32 : i32
    %cst_11 = arith.constant 0.000000e+00 : f32
    %10 = vector.broadcast %cst_11 : f32 to vector<1x16x8xf32>
    %11 = arith.select %9, %5, %10 : vector<1x16x8xf32>
    %cst_12 = arith.constant 0.000000e+00 : f32
    %12 = vector.broadcast %cst_12 : f32 to vector<10x1x8xf32>
    %13 = tpu.concatenate %8, %1, %11 in 0 : vector<1x16x8xf32>, vector<8x16x8xf32>, vector<1x16x8xf32> -> vector<10x16x8xf32>
    %14 = tpu.concatenate %12, %13, %12 in 1 : vector<10x1x8xf32>, vector<10x16x8xf32>, vector<10x1x8xf32> -> vector<10x18x8xf32>
    %15 = vector.extract_strided_slice %14 {offsets = [0, 0, 0], sizes = [8, 16, 8], strides = [1, 1, 1]} : vector<10x18x8xf32> to vector<8x16x8xf32>
    %16 = vector.extract_strided_slice %14 {offsets = [0, 1, 0], sizes = [8, 16, 8], strides = [1, 1, 1]} : vector<10x18x8xf32> to vector<8x16x8xf32>
    %17 = vector.extract_strided_slice %14 {offsets = [0, 2, 0], sizes = [8, 16, 8], strides = [1, 1, 1]} : vector<10x18x8xf32> to vector<8x16x8xf32>
    %18 = vector.extract_strided_slice %14 {offsets = [1, 0, 0], sizes = [8, 16, 8], strides = [1, 1, 1]} : vector<10x18x8xf32> to vector<8x16x8xf32>
    %19 = vector.extract_strided_slice %14 {offsets = [1, 1, 0], sizes = [8, 16, 8], strides = [1, 1, 1]} : vector<10x18x8xf32> to vector<8x16x8xf32>
    %20 = vector.extract_strided_slice %14 {offsets = [1, 2, 0], sizes = [8, 16, 8], strides = [1, 1, 1]} : vector<10x18x8xf32> to vector<8x16x8xf32>
    %21 = vector.extract_strided_slice %14 {offsets = [2, 0, 0], sizes = [8, 16, 8], strides = [1, 1, 1]} : vector<10x18x8xf32> to vector<8x16x8xf32>
    %22 = vector.extract_strided_slice %14 {offsets = [2, 1, 0], sizes = [8, 16, 8], strides = [1, 1, 1]} : vector<10x18x8xf32> to vector<8x16x8xf32>
    %23 = vector.extract_strided_slice %14 {offsets = [2, 2, 0], sizes = [8, 16, 8], strides = [1, 1, 1]} : vector<10x18x8xf32> to vector<8x16x8xf32>
    %24 = tpu.concatenate %15, %16, %17, %18, %19, %20, %21, %22, %23 in 2 : vector<8x16x8xf32>, vector<8x16x8xf32>, vector<8x16x8xf32>, vector<8x16x8xf32>, vector<8x16x8xf32>, vector<8x16x8xf32>, vector<8x16x8xf32>, vector<8x16x8xf32>, vector<8x16x8xf32> -> vector<8x16x72xf32>
    %25 = vector.shape_cast %24 : vector<8x16x72xf32> to vector<128x72xf32>
    %c0_13 = arith.constant 0 : index
    %c0_14 = arith.constant 0 : index
    %26 = vector.load %arg5[%c0_13, %c0_14] : memref<72x8xf32, #tpu.memory_space<vmem>>, vector<72x8xf32>
    %cst_15 = arith.constant dense<0.000000e+00> : vector<128x8xf32>
    %27 = tpu.matmul %25, %26, %cst_15 {dimension_numbers = #tpu.dot_dimension_numbers<[1], [0], [0], [1], [0, 0, 1, 1], [], []>} : vector<128x72xf32>, vector<72x8xf32>, vector<128x8xf32> -> vector<128x8xf32>
    %c0_16 = arith.constant 0 : index
    %c0_17 = arith.constant 0 : index
    %28 = vector.load %arg6[%c0_16, %c0_17] : memref<1x8xf32, #tpu.memory_space<vmem>>, vector<1x8xf32>
    %29 = vector.broadcast %28 : vector<1x8xf32> to vector<128x8xf32>
    %30 = arith.addf %27, %29 : vector<128x8xf32>
    %cst_18 = arith.constant 0.000000e+00 : f32
    %31 = vector.broadcast %cst_18 : f32 to vector<128x8xf32>
    %32 = arith.maximumf %30, %31 : vector<128x8xf32>
    %33 = vector.shape_cast %32 : vector<128x8xf32> to vector<8x16x8xf32>
    %34 = vector.shape_cast %33 : vector<8x16x8xf32> to vector<4x2x16x8xf32>
    %cst_19 = arith.constant dense<0.000000e+00> : vector<4x16x8xf32>
    %35 = vector.multi_reduction <add>, %34, %cst_19 [1] : vector<4x2x16x8xf32> to vector<4x16x8xf32>
    %36 = vector.shape_cast %35 : vector<4x16x8xf32> to vector<4x8x2x8xf32>
    %cst_20 = arith.constant dense<0.000000e+00> : vector<4x8x8xf32>
    %37 = vector.multi_reduction <add>, %36, %cst_20 [2] : vector<4x8x2x8xf32> to vector<4x8x8xf32>
    %cst_21 = arith.constant 2.500000e-01 : f32
    %38 = vector.broadcast %cst_21 : f32 to vector<4x8x8xf32>
    %39 = arith.mulf %37, %38 : vector<4x8x8xf32>
    %40 = vector.shape_cast %39 : vector<4x8x8xf32> to vector<1x4x8x8xf32>
    %c0_22 = arith.constant 0 : index
    %c0_23 = arith.constant 0 : index
    %c0_24 = arith.constant 0 : index
    %c0_25 = arith.constant 0 : index
    %41 = vector.load %arg7[%c0_22, %c0_23, %c0_24, %c0_25] : memref<1x4x8x8xf32, #tpu.memory_space<vmem>>, vector<1x4x8x8xf32>
    tpu.vector_store %arg7[%c0_22, %c0_23, %c0_24, %c0_25], %40 {strides = array<i32>} : memref<1x4x8x8xf32, #tpu.memory_space<vmem>>, vector<1x4x8x8xf32>,
    return
  }
  func.func @transform_0(%arg0: i32, %arg1: i32) -> (i32, i32, i32, i32) {
    %c0_i32 = arith.constant 0 : i32
    %c0_i32_0 = arith.constant 0 : i32
    %c0_i32_1 = arith.constant 0 : i32
    return %arg0, %arg1, %c0_i32, %c0_i32_0 : i32, i32, i32, i32
  }
  func.func @transform_1(%arg0: i32, %arg1: i32) -> (i32, i32, i32, i32) {
    %c8_i32 = arith.constant 8 : i32
    %0 = arith.muli %arg1, %c8_i32 : i32
    %c1_i32 = arith.constant 1 : i32
    %1 = arith.subi %0, %c1_i32 : i32
    %c0_i32 = arith.constant 0 : i32
    %2 = arith.maxsi %1, %c0_i32 : i32
    %c0_i32_0 = arith.constant 0 : i32
    %c0_i32_1 = arith.constant 0 : i32
    %c0_i32_2 = arith.constant 0 : i32
    return %arg0, %2, %c0_i32_0, %c0_i32_1 : i32, i32, i32, i32
  }
  func.func @transform_2(%arg0: i32, %arg1: i32) -> (i32, i32, i32, i32) {
    %c8_i32 = arith.constant 8 : i32
    %0 = arith.muli %arg1, %c8_i32 : i32
    %c8_i32_0 = arith.constant 8 : i32
    %1 = arith.addi %0, %c8_i32_0 : i32
    %c15_i32 = arith.constant 15 : i32
    %2 = arith.minsi %1, %c15_i32 : i32
    %c0_i32 = arith.constant 0 : i32
    %c0_i32_1 = arith.constant 0 : i32
    %c0_i32_2 = arith.constant 0 : i32
    return %arg0, %2, %c0_i32, %c0_i32_1 : i32, i32, i32, i32
  }
  func.func @transform_3(%arg0: i32, %arg1: i32) -> (i32, i32) {
    %c0_i32 = arith.constant 0 : i32
    %c0_i32_0 = arith.constant 0 : i32
    %c0_i32_1 = arith.constant 0 : i32
    return %c0_i32, %c0_i32_0 : i32, i32
  }
  func.func @transform_4(%arg0: i32, %arg1: i32) -> (i32, i32) {
    %c0_i32 = arith.constant 0 : i32
    %c0_i32_0 = arith.constant 0 : i32
    %c0_i32_1 = arith.constant 0 : i32
    return %c0_i32, %c0_i32_0 : i32, i32
  }
  func.func @transform_5(%arg0: i32, %arg1: i32) -> (i32, i32, i32, i32) {
    %c0_i32 = arith.constant 0 : i32
    %c0_i32_0 = arith.constant 0 : i32
    %c0_i32_1 = arith.constant 0 : i32
    return %arg0, %arg1, %c0_i32, %c0_i32_0 : i32, i32, i32, i32
  }
}

module attributes {stable_mosaic.version = 11 : i64} {
  func.func @_mm_bias_kernel(%arg0: i32, %arg1: memref<512x16xf32, #tpu.memory_space<vmem>>, %arg2: memref<16x8xf32, #tpu.memory_space<vmem>>, %arg3: memref<1x8xf32, #tpu.memory_space<vmem>>, %arg4: memref<512x8xf32, #tpu.memory_space<vmem>>) attributes {dimension_semantics = [#tpu.dimension_semantics<parallel>], iteration_bounds = array<i64: 1>, scalar_prefetch = 0 : i64, scratch_operands = 0 : i64, tpu.core_type = #tpu.core_type<tc>, window_params = [{transform_indices = @transform_0, window_bounds = array<i64: 512, 16>}, {pipeline_mode = #tpu.pipeline_mode<synchronous>, transform_indices = @transform_1, window_bounds = array<i64: 16, 8>}, {pipeline_mode = #tpu.pipeline_mode<synchronous>, transform_indices = @transform_2, window_bounds = array<i64: 1, 8>}, {transform_indices = @transform_3, window_bounds = array<i64: 512, 8>}]} {
    %c0 = arith.constant 0 : index
    %c0_0 = arith.constant 0 : index
    %0 = vector.load %arg1[%c0, %c0_0] : memref<512x16xf32, #tpu.memory_space<vmem>>, vector<512x16xf32>
    %c0_1 = arith.constant 0 : index
    %c0_2 = arith.constant 0 : index
    %1 = vector.load %arg2[%c0_1, %c0_2] : memref<16x8xf32, #tpu.memory_space<vmem>>, vector<16x8xf32>
    %cst = arith.constant dense<0.000000e+00> : vector<512x8xf32>
    %2 = tpu.matmul %0, %1, %cst {dimension_numbers = #tpu.dot_dimension_numbers<[1], [0], [0], [1], [0, 0, 1, 1], [], []>} : vector<512x16xf32>, vector<16x8xf32>, vector<512x8xf32> -> vector<512x8xf32>
    %c0_3 = arith.constant 0 : index
    %c0_4 = arith.constant 0 : index
    %3 = vector.load %arg3[%c0_3, %c0_4] : memref<1x8xf32, #tpu.memory_space<vmem>>, vector<1x8xf32>
    %4 = vector.broadcast %3 : vector<1x8xf32> to vector<512x8xf32>
    %5 = arith.addf %2, %4 : vector<512x8xf32>
    %cst_5 = arith.constant 0.000000e+00 : f32
    %6 = vector.broadcast %cst_5 : f32 to vector<512x8xf32>
    %7 = arith.maximumf %5, %6 : vector<512x8xf32>
    %c0_6 = arith.constant 0 : index
    %c0_7 = arith.constant 0 : index
    %8 = vector.load %arg4[%c0_6, %c0_7] : memref<512x8xf32, #tpu.memory_space<vmem>>, vector<512x8xf32>
    tpu.vector_store %arg4[%c0_6, %c0_7], %7 {strides = array<i32>} : memref<512x8xf32, #tpu.memory_space<vmem>>, vector<512x8xf32>,
    return
  }
  func.func @transform_0(%arg0: i32) -> (i32, i32) {
    %c0_i32 = arith.constant 0 : i32
    %c0_i32_0 = arith.constant 0 : i32
    return %arg0, %c0_i32 : i32, i32
  }
  func.func @transform_1(%arg0: i32) -> (i32, i32) {
    %c0_i32 = arith.constant 0 : i32
    %c0_i32_0 = arith.constant 0 : i32
    %c0_i32_1 = arith.constant 0 : i32
    return %c0_i32, %c0_i32_0 : i32, i32
  }
  func.func @transform_2(%arg0: i32) -> (i32, i32) {
    %c0_i32 = arith.constant 0 : i32
    %c0_i32_0 = arith.constant 0 : i32
    %c0_i32_1 = arith.constant 0 : i32
    return %c0_i32, %c0_i32_0 : i32, i32
  }
  func.func @transform_3(%arg0: i32) -> (i32, i32) {
    %c0_i32 = arith.constant 0 : i32
    %c0_i32_0 = arith.constant 0 : i32
    return %arg0, %c0_i32 : i32, i32
  }
}

module attributes {stable_mosaic.version = 11 : i64} {
  func.func @_pool_conv1x1_kernel(%arg0: i32, %arg1: i32, %arg2: memref<1x8x16x16xf32, #tpu.memory_space<vmem>>, %arg3: memref<16x32xf32, #tpu.memory_space<vmem>>, %arg4: memref<1x32xf32, #tpu.memory_space<vmem>>, %arg5: memref<1x4x8x32xf32, #tpu.memory_space<vmem>>) attributes {dimension_semantics = [#tpu.dimension_semantics<parallel>, #tpu.dimension_semantics<parallel>], iteration_bounds = array<i64: 2, 2>, scalar_prefetch = 0 : i64, scratch_operands = 0 : i64, tpu.core_type = #tpu.core_type<tc>, window_params = [{transform_indices = @transform_0, window_bounds = array<i64: 1, 8, 16, 16>}, {pipeline_mode = #tpu.pipeline_mode<synchronous>, transform_indices = @transform_1, window_bounds = array<i64: 16, 32>}, {pipeline_mode = #tpu.pipeline_mode<synchronous>, transform_indices = @transform_2, window_bounds = array<i64: 1, 32>}, {transform_indices = @transform_3, window_bounds = array<i64: 1, 4, 8, 32>}]} {
    %c0 = arith.constant 0 : index
    %c0_0 = arith.constant 0 : index
    %c0_1 = arith.constant 0 : index
    %c0_2 = arith.constant 0 : index
    %0 = vector.load %arg2[%c0, %c0_0, %c0_1, %c0_2] : memref<1x8x16x16xf32, #tpu.memory_space<vmem>>, vector<1x8x16x16xf32>
    %1 = vector.shape_cast %0 : vector<1x8x16x16xf32> to vector<8x16x16xf32>
    %2 = vector.shape_cast %1 : vector<8x16x16xf32> to vector<4x2x16x16xf32>
    %cst = arith.constant dense<0.000000e+00> : vector<4x16x16xf32>
    %3 = vector.multi_reduction <add>, %2, %cst [1] : vector<4x2x16x16xf32> to vector<4x16x16xf32>
    %4 = vector.shape_cast %3 : vector<4x16x16xf32> to vector<4x8x2x16xf32>
    %cst_3 = arith.constant dense<0.000000e+00> : vector<4x8x16xf32>
    %5 = vector.multi_reduction <add>, %4, %cst_3 [2] : vector<4x8x2x16xf32> to vector<4x8x16xf32>
    %cst_4 = arith.constant 2.500000e-01 : f32
    %6 = vector.broadcast %cst_4 : f32 to vector<4x8x16xf32>
    %7 = arith.mulf %5, %6 : vector<4x8x16xf32>
    %8 = vector.shape_cast %7 : vector<4x8x16xf32> to vector<32x16xf32>
    %c0_5 = arith.constant 0 : index
    %c0_6 = arith.constant 0 : index
    %9 = vector.load %arg3[%c0_5, %c0_6] : memref<16x32xf32, #tpu.memory_space<vmem>>, vector<16x32xf32>
    %cst_7 = arith.constant dense<0.000000e+00> : vector<32x32xf32>
    %10 = tpu.matmul %8, %9, %cst_7 {dimension_numbers = #tpu.dot_dimension_numbers<[1], [0], [0], [1], [0, 0, 1, 1], [], []>} : vector<32x16xf32>, vector<16x32xf32>, vector<32x32xf32> -> vector<32x32xf32>
    %c0_8 = arith.constant 0 : index
    %c0_9 = arith.constant 0 : index
    %11 = vector.load %arg4[%c0_8, %c0_9] : memref<1x32xf32, #tpu.memory_space<vmem>>, vector<1x32xf32>
    %12 = vector.broadcast %11 : vector<1x32xf32> to vector<32x32xf32>
    %13 = arith.addf %10, %12 : vector<32x32xf32>
    %14 = vector.shape_cast %13 : vector<32x32xf32> to vector<1x4x8x32xf32>
    %c0_10 = arith.constant 0 : index
    %c0_11 = arith.constant 0 : index
    %c0_12 = arith.constant 0 : index
    %c0_13 = arith.constant 0 : index
    %15 = vector.load %arg5[%c0_10, %c0_11, %c0_12, %c0_13] : memref<1x4x8x32xf32, #tpu.memory_space<vmem>>, vector<1x4x8x32xf32>
    tpu.vector_store %arg5[%c0_10, %c0_11, %c0_12, %c0_13], %14 {strides = array<i32>} : memref<1x4x8x32xf32, #tpu.memory_space<vmem>>, vector<1x4x8x32xf32>,
    return
  }
  func.func @transform_0(%arg0: i32, %arg1: i32) -> (i32, i32, i32, i32) {
    %c0_i32 = arith.constant 0 : i32
    %c0_i32_0 = arith.constant 0 : i32
    %c0_i32_1 = arith.constant 0 : i32
    return %arg0, %arg1, %c0_i32, %c0_i32_0 : i32, i32, i32, i32
  }
  func.func @transform_1(%arg0: i32, %arg1: i32) -> (i32, i32) {
    %c0_i32 = arith.constant 0 : i32
    %c0_i32_0 = arith.constant 0 : i32
    %c0_i32_1 = arith.constant 0 : i32
    return %c0_i32, %c0_i32_0 : i32, i32
  }
  func.func @transform_2(%arg0: i32, %arg1: i32) -> (i32, i32) {
    %c0_i32 = arith.constant 0 : i32
    %c0_i32_0 = arith.constant 0 : i32
    %c0_i32_1 = arith.constant 0 : i32
    return %c0_i32, %c0_i32_0 : i32, i32
  }
  func.func @transform_3(%arg0: i32, %arg1: i32) -> (i32, i32, i32, i32) {
    %c0_i32 = arith.constant 0 : i32
    %c0_i32_0 = arith.constant 0 : i32
    %c0_i32_1 = arith.constant 0 : i32
    return %arg0, %arg1, %c0_i32, %c0_i32_0 : i32, i32, i32, i32
  }
}

module attributes {stable_mosaic.version = 11 : i64} {
  func.func @_mm_bias_kernel(%arg0: i32, %arg1: memref<128x8xf32, #tpu.memory_space<vmem>>, %arg2: memref<8x32xf32, #tpu.memory_space<vmem>>, %arg3: memref<1x32xf32, #tpu.memory_space<vmem>>, %arg4: memref<128x32xf32, #tpu.memory_space<vmem>>, %arg5: memref<128x32xf32, #tpu.memory_space<vmem>>) attributes {dimension_semantics = [#tpu.dimension_semantics<parallel>], iteration_bounds = array<i64: 1>, scalar_prefetch = 0 : i64, scratch_operands = 0 : i64, tpu.core_type = #tpu.core_type<tc>, window_params = [{transform_indices = @transform_0, window_bounds = array<i64: 128, 8>}, {pipeline_mode = #tpu.pipeline_mode<synchronous>, transform_indices = @transform_1, window_bounds = array<i64: 8, 32>}, {pipeline_mode = #tpu.pipeline_mode<synchronous>, transform_indices = @transform_2, window_bounds = array<i64: 1, 32>}, {transform_indices = @transform_3, window_bounds = array<i64: 128, 32>}, {transform_indices = @transform_4, window_bounds = array<i64: 128, 32>}]} {
    %c0 = arith.constant 0 : index
    %c0_0 = arith.constant 0 : index
    %0 = vector.load %arg1[%c0, %c0_0] : memref<128x8xf32, #tpu.memory_space<vmem>>, vector<128x8xf32>
    %c0_1 = arith.constant 0 : index
    %c0_2 = arith.constant 0 : index
    %1 = vector.load %arg2[%c0_1, %c0_2] : memref<8x32xf32, #tpu.memory_space<vmem>>, vector<8x32xf32>
    %cst = arith.constant dense<0.000000e+00> : vector<128x32xf32>
    %2 = tpu.matmul %0, %1, %cst {dimension_numbers = #tpu.dot_dimension_numbers<[1], [0], [0], [1], [0, 0, 1, 1], [], []>} : vector<128x8xf32>, vector<8x32xf32>, vector<128x32xf32> -> vector<128x32xf32>
    %c0_3 = arith.constant 0 : index
    %c0_4 = arith.constant 0 : index
    %3 = vector.load %arg3[%c0_3, %c0_4] : memref<1x32xf32, #tpu.memory_space<vmem>>, vector<1x32xf32>
    %4 = vector.broadcast %3 : vector<1x32xf32> to vector<128x32xf32>
    %5 = arith.addf %2, %4 : vector<128x32xf32>
    %c0_5 = arith.constant 0 : index
    %c0_6 = arith.constant 0 : index
    %6 = vector.load %arg4[%c0_5, %c0_6] : memref<128x32xf32, #tpu.memory_space<vmem>>, vector<128x32xf32>
    %7 = arith.addf %5, %6 : vector<128x32xf32>
    %cst_7 = arith.constant 0.000000e+00 : f32
    %8 = vector.broadcast %cst_7 : f32 to vector<128x32xf32>
    %9 = arith.maximumf %7, %8 : vector<128x32xf32>
    %c0_8 = arith.constant 0 : index
    %c0_9 = arith.constant 0 : index
    %10 = vector.load %arg5[%c0_8, %c0_9] : memref<128x32xf32, #tpu.memory_space<vmem>>, vector<128x32xf32>
    tpu.vector_store %arg5[%c0_8, %c0_9], %9 {strides = array<i32>} : memref<128x32xf32, #tpu.memory_space<vmem>>, vector<128x32xf32>,
    return
  }
  func.func @transform_0(%arg0: i32) -> (i32, i32) {
    %c0_i32 = arith.constant 0 : i32
    %c0_i32_0 = arith.constant 0 : i32
    return %arg0, %c0_i32 : i32, i32
  }
  func.func @transform_1(%arg0: i32) -> (i32, i32) {
    %c0_i32 = arith.constant 0 : i32
    %c0_i32_0 = arith.constant 0 : i32
    %c0_i32_1 = arith.constant 0 : i32
    return %c0_i32, %c0_i32_0 : i32, i32
  }
  func.func @transform_2(%arg0: i32) -> (i32, i32) {
    %c0_i32 = arith.constant 0 : i32
    %c0_i32_0 = arith.constant 0 : i32
    %c0_i32_1 = arith.constant 0 : i32
    return %c0_i32, %c0_i32_0 : i32, i32
  }
  func.func @transform_3(%arg0: i32) -> (i32, i32) {
    %c0_i32 = arith.constant 0 : i32
    %c0_i32_0 = arith.constant 0 : i32
    return %arg0, %c0_i32 : i32, i32
  }
  func.func @transform_4(%arg0: i32) -> (i32, i32) {
    %c0_i32 = arith.constant 0 : i32
    %c0_i32_0 = arith.constant 0 : i32
    return %arg0, %c0_i32 : i32, i32
  }
}

</mosaic_0001>

<llo_original>
// kernel: bottleneck_forward.4
$region0: #{bottleneck_forward.4}
  #allocation0 [shape = 'u32[]', space=smem, size = 0x4, offset = 0x4, fixed_abs, tag = 'smem constant byte address 0x4 - core index']
  #allocation1 [shape = 'u32[144,128]{1,0:T(1,128)}', space=vmem, size = 0x12000, scoped, tag = 'internal scratch']
  %s0 = inlined_call_operand.vmem [shape: f32[512,16], index: 0, kind: input, shape index: {}]
  %s1 = inlined_call_operand.vmem [shape: f32[16,8], index: 1, kind: input, shape index: {}]
  %s2 = inlined_call_operand.vmem [shape: f32[1,8], index: 2, kind: input, shape index: {}]
  %s3 = inlined_call_operand.vmem [shape: f32[512,8], index: 3, kind: output, shape index: {}]
  %s4 = sld [smem:[#allocation0]]
  $region22: #{bottleneck_forward.4} parent=0
    _
  %s6 = ssub.s32 1, %s4
  %s7 = scalar_select 0, %s6, %s4
  // Predicated region
  $region2: #{bottleneck_forward.4} parent=0 // pred_check
    _
  $region3: #{bottleneck_forward.4} parent=0 // pred_check_branch
    %9 = sbr.rel (0) target = $region5
  $region4: #{bottleneck_forward.4} parent=0 // pred_region
    _
  $region5: #{bottleneck_forward.4} parent=0 // pred_fallthru
    _
  // Predicated region
  $region6: #{bottleneck_forward.4} parent=0 // pred_check
    _
  $region7: #{bottleneck_forward.4} parent=0 // pred_check_branch
    %11 = sbr.rel (0) target = $region9
  $region8: #{bottleneck_forward.4} parent=0 // pred_region
    _
  $region9: #{bottleneck_forward.4} parent=0 // pred_fallthru
    _
  // Predicated region
  $region10: #{bottleneck_forward.4} parent=0 // pred_check
    _
  $region11: #{bottleneck_forward.4} parent=0 // pred_check_branch
    %13 = sbr.rel (0) target = $region13
  $region12: #{bottleneck_forward.4} parent=0 // pred_region
    _
  $region13: #{bottleneck_forward.4} parent=0 // pred_fallthru
    _
  %v14 = vld [vmem:[%s0] sm:$0xff]
  %v15 = vld [vmem:[%s0 + $0x8] sm:$0xff]
  %v16 = vld [vmem:[%s0 + $0x10] sm:$0xff]
  %v17 = vld [vmem:[%s0 + $0x18] sm:$0xff]
  %v18 = vld [vmem:[%s0 + $0x20] sm:$0xff]
  %v19 = vld [vmem:[%s0 + $0x28] sm:$0xff]
  %v20 = vld [vmem:[%s0 + $0x30] sm:$0xff]
  %v21 = vld [vmem:[%s0 + $0x38] sm:$0xff]
  %v22 = vld [vmem:[%s0 + $0x40] sm:$0xff]
  %v23 = vld [vmem:[%s0 + $0x48] sm:$0xff]
  %v24 = vld [vmem:[%s0 + $0x50] sm:$0xff]
  %v25 = vld [vmem:[%s0 + $0x58] sm:$0xff]
  %v26 = vld [vmem:[%s0 + $0x60] sm:$0xff]
  %v27 = vld [vmem:[%s0 + $0x68] sm:$0xff]
  %v28 = vld [vmem:[%s0 + $0x70] sm:$0xff]
  %v29 = vld [vmem:[%s0 + $0x78] sm:$0xff]
  %v30 = vld [vmem:[%s0 + $0x80] sm:$0xff]
  %v31 = vld [vmem:[%s0 + $0x88] sm:$0xff]
  %v32 = vld [vmem:[%s0 + $0x90] sm:$0xff]
  %v33 = vld [vmem:[%s0 + $0x98] sm:$0xff]
  %v34 = vld [vmem:[%s0 + $0xa0] sm:$0xff]
  %v35 = vld [vmem:[%s0 + $0xa8] sm:$0xff]
  %v36 = vld [vmem:[%s0 + $0xb0] sm:$0xff]
  %v37 = vld [vmem:[%s0 + $0xb8] sm:$0xff]
  %v38 = vld [vmem:[%s0 + $0xc0] sm:$0xff]
  %v39 = vld [vmem:[%s0 + $0xc8] sm:$0xff]
  %v40 = vld [vmem:[%s0 + $0xd0] sm:$0xff]
  %v41 = vld [vmem:[%s0 + $0xd8] sm:$0xff]
  %v42 = vld [vmem:[%s0 + $0xe0] sm:$0xff]
  %v43 = vld [vmem:[%s0 + $0xe8] sm:$0xff]
  %v44 = vld [vmem:[%s0 + $0xf0] sm:$0xff]
  %v45 = vld [vmem:[%s0 + $0xf8] sm:$0xff]
  %v46 = vld [vmem:[%s0 + $0x100] sm:$0xff]
  %v47 = vld [vmem:[%s0 + $0x108] sm:$0xff]
  %v48 = vld [vmem:[%s0 + $0x110] sm:$0xff]
  %v49 = vld [vmem:[%s0 + $0x118] sm:$0xff]
  %v50 = vld [vmem:[%s0 + $0x120] sm:$0xff]
  %v51 = vld [vmem:[%s0 + $0x128] sm:$0xff]
  %v52 = vld [vmem:[%s0 + $0x130] sm:$0xff]
  %v53 = vld [vmem:[%s0 + $0x138] sm:$0xff]
  %v54 = vld [vmem:[%s0 + $0x140] sm:$0xff]
  %v55 = vld [vmem:[%s0 + $0x148] sm:$0xff]
  %v56 = vld [vmem:[%s0 + $0x150] sm:$0xff]
  %v57 = vld [vmem:[%s0 + $0x158] sm:$0xff]
  %v58 = vld [vmem:[%s0 + $0x160] sm:$0xff]
  %v59 = vld [vmem:[%s0 + $0x168] sm:$0xff]
  %v60 = vld [vmem:[%s0 + $0x170] sm:$0xff]
  %v61 = vld [vmem:[%s0 + $0x178] sm:$0xff]
  %v62 = vld [vmem:[%s0 + $0x180] sm:$0xff]
  %v63 = vld [vmem:[%s0 + $0x188] sm:$0xff]
  %v64 = vld [vmem:[%s0 + $0x190] sm:$0xff]
  %v65 = vld [vmem:[%s0 + $0x198] sm:$0xff]
  %v66 = vld [vmem:[%s0 + $0x1a0] sm:$0xff]
  %v67 = vld [vmem:[%s0 + $0x1a8] sm:$0xff]
  %v68 = vld [vmem:[%s0 + $0x1b0] sm:$0xff]
  %v69 = vld [vmem:[%s0 + $0x1b8] sm:$0xff]
  %v70 = vld [vmem:[%s0 + $0x1c0] sm:$0xff]
  %v71 = vld [vmem:[%s0 + $0x1c8] sm:$0xff]
  %v72 = vld [vmem:[%s0 + $0x1d0] sm:$0xff]
  %v73 = vld [vmem:[%s0 + $0x1d8] sm:$0xff]
  %v74 = vld [vmem:[%s0 + $0x1e0] sm:$0xff]
  %v75 = vld [vmem:[%s0 + $0x1e8] sm:$0xff]
  %v76 = vld [vmem:[%s0 + $0x1f0] sm:$0xff]
  %v77 = vld [vmem:[%s0 + $0x1f8] sm:$0xff]
  %v78 = vld [vmem:[%s1] sm:$0xff]
  %v79 = vld [vmem:[%s1 + $0x8] sm:$0xff]
  %v80 = vld [vmem:[%s2] sm:$0x1]
  %v82 = vlaneseq
  %v83 = vshrl.u32 %v82, 7
  %v84 = vsub.s32 0, %v83
  %v85 = vrot.slane %v80, %v84
  %vm87 = vcmask 130048
  %v89 = vsel %vm87, %v14, 0
  %v92 = vsel %vm87, %v15, 0
  %v95 = vsel %vm87, %v16, 0
  %v98 = vsel %vm87, %v17, 0
  %v101 = vsel %vm87, %v18, 0
  %v104 = vsel %vm87, %v19, 0
  %v107 = vsel %vm87, %v20, 0
  %v110 = vsel %vm87, %v21, 0
  %v113 = vsel %vm87, %v22, 0
  %v116 = vsel %vm87, %v23, 0
  %v119 = vsel %vm87, %v24, 0
  %v122 = vsel %vm87, %v25, 0
  %v125 = vsel %vm87, %v26, 0
  %v128 = vsel %vm87, %v27, 0
  %v131 = vsel %vm87, %v28, 0
  %v134 = vsel %vm87, %v29, 0
  %v137 = vsel %vm87, %v30, 0
  %v140 = vsel %vm87, %v31, 0
  %v143 = vsel %vm87, %v32, 0
  %v146 = vsel %vm87, %v33, 0
  %v149 = vsel %vm87, %v34, 0
  %v152 = vsel %vm87, %v35, 0
  %v155 = vsel %vm87, %v36, 0
  %v158 = vsel %vm87, %v37, 0
  %v161 = vsel %vm87, %v38, 0
  %v164 = vsel %vm87, %v39, 0
  %v167 = vsel %vm87, %v40, 0
  %v170 = vsel %vm87, %v41, 0
  %v173 = vsel %vm87, %v42, 0
  %v176 = vsel %vm87, %v43, 0
  %v179 = vsel %vm87, %v44, 0
  %v182 = vsel %vm87, %v45, 0
  %v185 = vsel %vm87, %v46, 0
  %v188 = vsel %vm87, %v47, 0
  %v191 = vsel %vm87, %v48, 0
  %v194 = vsel %vm87, %v49, 0
  %v197 = vsel %vm87, %v50, 0
  %v200 = vsel %vm87, %v51, 0
  %v203 = vsel %vm87, %v52, 0
  %v206 = vsel %vm87, %v53, 0
  %v209 = vsel %vm87, %v54, 0
  %v212 = vsel %vm87, %v55, 0
  %v215 = vsel %vm87, %v56, 0
  %v218 = vsel %vm87, %v57, 0
  %v221 = vsel %vm87, %v58, 0
  %v224 = vsel %vm87, %v59, 0
  %v227 = vsel %vm87, %v60, 0
  %v230 = vsel %vm87, %v61, 0
  %v233 = vsel %vm87, %v62, 0
  %v236 = vsel %vm87, %v63, 0
  %v239 = vsel %vm87, %v64, 0
  %v242 = vsel %vm87, %v65, 0
  %v245 = vsel %vm87, %v66, 0
  %v248 = vsel %vm87, %v67, 0
  %v251 = vsel %vm87, %v68, 0
  %v254 = vsel %vm87, %v69, 0
  %v257 = vsel %vm87, %v70, 0
  %v260 = vsel %vm87, %v71, 0
  %v263 = vsel %vm87, %v72, 0
  %v266 = vsel %vm87, %v73, 0
  %v269 = vsel %vm87, %v74, 0
  %v272 = vsel %vm87, %v75, 0
  %v275 = vsel %vm87, %v76, 0
  %v278 = vsel %vm87, %v77, 0
  %280 = vmatprep.subr.mxu0 0.0
  %281 = vmatpush1.msra.mxu0 %v78
  %282 = vmatprep.subr.mxu0 0.0
  %283 = vmatpush1.msra.mxu0 %v79
  %284 = vmatprep.subr.mxu0 0.0
  %285 = vmatpush1.msra.mxu0 0.0
  %286 = vmatprep.subr.mxu0 0.0
  %287 = vmatpush1.msra.mxu0 0.0
  %288 = vmatprep.subr.mxu0 0.0
  %289 = vmatpush1.msra.mxu0 0.0
  %290 = vmatprep.subr.mxu0 0.0
  %291 = vmatpush1.msra.mxu0 0.0
  %292 = vmatprep.subr.mxu0 0.0
  %293 = vmatpush1.msra.mxu0 0.0
  %294 = vmatprep.subr.mxu0 0.0
  %295 = vmatpush1.msra.mxu0 0.0
  %296 = vmatprep.subr.mxu0 0.0
  %297 = vmatpush1.msra.mxu0 0.0
  %298 = vmatprep.subr.mxu0 0.0
  %299 = vmatpush1.msra.mxu0 0.0
  %300 = vmatprep.subr.mxu0 0.0
  %301 = vmatpush1.msra.mxu0 0.0
  %302 = vmatprep.subr.mxu0 0.0
  %303 = vmatpush1.msra.mxu0 0.0
  %304 = vmatprep.subr.mxu0 0.0
  %305 = vmatpush1.msra.mxu0 0.0
  %306 = vmatprep.subr.mxu0 0.0
  %307 = vmatpush1.msra.mxu0 0.0
  %308 = vmatprep.subr.mxu0 0.0
  %309 = vmatpush1.msra.mxu0 0.0
  %310 = vmatprep.subr.mxu0 0.0
  %311 = vmatpush1.msra.mxu0 0.0
  %312 = vmatprep.subr.mxu0 0.0
  %313 = vmatpush1.msra.mxu0 0.0
  %314 = vmatprep.subr.mxu0 0.0
  %315 = vmatpush1.msra.mxu0 0.0
  %316 = vmatprep.subr.mxu0 0.0
  %317 = vmatpush1.msra.mxu0 0.0
  %318 = vmatprep.subr.mxu0 0.0
  %319 = vmatpush1.msra.mxu0 0.0
  %320 = vmatprep.subr.mxu0 0.0
  %321 = vmatpush1.msra.mxu0 0.0
  %322 = vmatprep.subr.mxu0 0.0
  %323 = vmatpush1.msra.mxu0 0.0
  %324 = vmatprep.subr.mxu0 0.0
  %325 = vmatpush1.msra.mxu0 0.0
  %326 = vmatprep.subr.mxu0 0.0
  %327 = vmatpush1.msra.mxu0 0.0
  %328 = vmatprep.subr.mxu0 0.0
  %329 = vmatpush1.msra.mxu0 0.0
  %330 = vmatprep.subr.mxu0 0.0
  %331 = vmatpush1.msra.mxu0 0.0
  %332 = vmatprep.subr.mxu0 0.0
  %333 = vmatpush1.msra.mxu0 0.0
  %334 = vmatprep.subr.mxu0 0.0
  %335 = vmatpush1.msra.mxu0 0.0
  %336 = vmatprep.subr.mxu0 0.0
  %337 = vmatpush1.msra.mxu0 0.0
  %338 = vmatprep.subr.mxu0 0.0
  %339 = vmatpush1.msra.mxu0 0.0
  %340 = vmatprep.subr.mxu0 0.0
  %341 = vmatpush1.msra.mxu0 0.0
  %342 = vmatprep.subr.mxu0 0.0
  %343 = vmatpush1.msra.mxu0 0.0
  %344 = vmatprep.mubr.f32.mxu0 0.0
  %345 = vmatmul.mubr.f32.gmra.mrb[0].mxu0 %v89
  %v346 = vpop.f32.mrb[0].mxu0
  %v347 = vadd.f32 %v85, %v346
  %v348 = vpop.f32.mrb[0].mxu0
  %349 = vmatprep.mubr.f32.mxu0 0.0
  %350 = vmatmul.mubr.f32.gmra.mrb[0].mxu0 %v92
  %v351 = vpop.f32.mrb[0].mxu0
  %v352 = vadd.f32 %v85, %v351
  %v353 = vpop.f32.mrb[0].mxu0
  %354 = vmatprep.mubr.f32.mxu0 0.0
  %355 = vmatmul.mubr.f32.gmra.mrb[0].mxu0 %v95
  %v356 = vpop.f32.mrb[0].mxu0
  %v357 = vadd.f32 %v85, %v356
  %v358 = vpop.f32.mrb[0].mxu0
  %359 = vmatprep.mubr.f32.mxu0 0.0
  %360 = vmatmul.mubr.f32.gmra.mrb[0].mxu0 %v98
  %v361 = vpop.f32.mrb[0].mxu0
  %v362 = vadd.f32 %v85, %v361
  %v363 = vpop.f32.mrb[0].mxu0
  %364 = vmatprep.mubr.f32.mxu0 0.0
  %365 = vmatmul.mubr.f32.gmra.mrb[0].mxu0 %v101
  %v366 = vpop.f32.mrb[0].mxu0
  %v367 = vadd.f32 %v85, %v366
  %v368 = vpop.f32.mrb[0].mxu0
  %369 = vmatprep.mubr.f32.mxu0 0.0
  %370 = vmatmul.mubr.f32.gmra.mrb[0].mxu0 %v104
  %v371 = vpop.f32.mrb[0].mxu0
  %v372 = vadd.f32 %v85, %v371
  %v373 = vpop.f32.mrb[0].mxu0
  %374 = vmatprep.mubr.f32.mxu0 0.0
  %375 = vmatmul.mubr.f32.gmra.mrb[0].mxu0 %v107
  %v376 = vpop.f32.mrb[0].mxu0
  %v377 = vadd.f32 %v85, %v376
  %v378 = vpop.f32.mrb[0].mxu0
  %379 = vmatprep.mubr.f32.mxu0 0.0
  %380 = vmatmul.mubr.f32.gmra.mrb[0].mxu0 %v110
  %v381 = vpop.f32.mrb[0].mxu0
  %v382 = vadd.f32 %v85, %v381
  %v383 = vpop.f32.mrb[0].mxu0
  %384 = vmatprep.mubr.f32.mxu0 0.0
  %385 = vmatmul.mubr.f32.gmra.mrb[0].mxu0 %v113
  %v386 = vpop.f32.mrb[0].mxu0
  %v387 = vadd.f32 %v85, %v386
  %v388 = vpop.f32.mrb[0].mxu0
  %389 = vmatprep.mubr.f32.mxu0 0.0
  %390 = vmatmul.mubr.f32.gmra.mrb[0].mxu0 %v116
  %v391 = vpop.f32.mrb[0].mxu0
  %v392 = vadd.f32 %v85, %v391
  %v393 = vpop.f32.mrb[0].mxu0
  %394 = vmatprep.mubr.f32.mxu0 0.0
  %395 = vmatmul.mubr.f32.gmra.mrb[0].mxu0 %v119
  %v396 = vpop.f32.mrb[0].mxu0
  %v397 = vadd.f32 %v85, %v396
  %v398 = vpop.f32.mrb[0].mxu0
  %399 = vmatprep.mubr.f32.mxu0 0.0
  %400 = vmatmul.mubr.f32.gmra.mrb[0].mxu0 %v122
  %v401 = vpop.f32.mrb[0].mxu0
  %v402 = vadd.f32 %v85, %v401
  %v403 = vpop.f32.mrb[0].mxu0
  %404 = vmatprep.mubr.f32.mxu0 0.0
  %405 = vmatmul.mubr.f32.gmra.mrb[0].mxu0 %v125
  %v406 = vpop.f32.mrb[0].mxu0
  %v407 = vadd.f32 %v85, %v406
  %v408 = vpop.f32.mrb[0].mxu0
  %409 = vmatprep.mubr.f32.mxu0 0.0
  %410 = vmatmul.mubr.f32.gmra.mrb[0].mxu0 %v128
  %v411 = vpop.f32.mrb[0].mxu0
  %v412 = vadd.f32 %v85, %v411
  %v413 = vpop.f32.mrb[0].mxu0
  %414 = vmatprep.mubr.f32.mxu0 0.0
  %415 = vmatmul.mubr.f32.gmra.mrb[0].mxu0 %v131
  %v416 = vpop.f32.mrb[0].mxu0
  %v417 = vadd.f32 %v85, %v416
  %v418 = vpop.f32.mrb[0].mxu0
  %419 = vmatprep.mubr.f32.mxu0 0.0
  %420 = vmatmul.mubr.f32.gmra.mrb[0].mxu0 %v134
  %v421 = vpop.f32.mrb[0].mxu0
  %v422 = vadd.f32 %v85, %v421
  %v423 = vpop.f32.mrb[0].mxu0
  %424 = vmatprep.mubr.f32.mxu0 0.0
  %425 = vmatmul.mubr.f32.gmra.mrb[0].mxu0 %v137
  %v426 = vpop.f32.mrb[0].mxu0
  %v427 = vadd.f32 %v85, %v426
  %v428 = vpop.f32.mrb[0].mxu0
  %429 = vmatprep.mubr.f32.mxu0 0.0
  %430 = vmatmul.mubr.f32.gmra.mrb[0].mxu0 %v140
  %v431 = vpop.f32.mrb[0].mxu0
  %v432 = vadd.f32 %v85, %v431
  %v433 = vpop.f32.mrb[0].mxu0
  %434 = vmatprep.mubr.f32.mxu0 0.0
  %435 = vmatmul.mubr.f32.gmra.mrb[0].mxu0 %v143
  %v436 = vpop.f32.mrb[0].mxu0
  %v437 = vadd.f32 %v85, %v436
  %v438 = vpop.f32.mrb[0].mxu0
  %439 = vmatprep.mubr.f32.mxu0 0.0
  %440 = vmatmul.mubr.f32.gmra.mrb[0].mxu0 %v146
  %v441 = vpop.f32.mrb[0].mxu0
  %v442 = vadd.f32 %v85, %v441
  %v443 = vpop.f32.mrb[0].mxu0
  %444 = vmatprep.mubr.f32.mxu0 0.0
  %445 = vmatmul.mubr.f32.gmra.mrb[0].mxu0 %v149
  %v446 = vpop.f32.mrb[0].mxu0
  %v447 = vadd.f32 %v85, %v446
  %v448 = vpop.f32.mrb[0].mxu0
  %449 = vmatprep.mubr.f32.mxu0 0.0
  %450 = vmatmul.mubr.f32.gmra.mrb[0].mxu0 %v152
  %v451 = vpop.f32.mrb[0].mxu0
  %v452 = vadd.f32 %v85, %v451
  %v453 = vpop.f32.mrb[0].mxu0
  %454 = vmatprep.mubr.f32.mxu0 0.0
  %455 = vmatmul.mubr.f32.gmra.mrb[0].mxu0 %v155
  %v456 = vpop.f32.mrb[0].mxu0
  %v457 = vadd.f32 %v85, %v456
  %v458 = vpop.f32.mrb[0].mxu0
  %459 = vmatprep.mubr.f32.mxu0 0.0
  %460 = vmatmul.mubr.f32.gmra.mrb[0].mxu0 %v158
  %v461 = vpop.f32.mrb[0].mxu0
  %v462 = vadd.f32 %v85, %v461
  %v463 = vpop.f32.mrb[0].mxu0
  %464 = vmatprep.mubr.f32.mxu0 0.0
  %465 = vmatmul.mubr.f32.gmra.mrb[0].mxu0 %v161
  %v466 = vpop.f32.mrb[0].mxu0
  %v467 = vadd.f32 %v85, %v466
  %v468 = vpop.f32.mrb[0].mxu0
  %469 = vmatprep.mubr.f32.mxu0 0.0
  %470 = vmatmul.mubr.f32.gmra.mrb[0].mxu0 %v164
  %v471 = vpop.f32.mrb[0].mxu0
  %v472 = vadd.f32 %v85, %v471
  %v473 = vpop.f32.mrb[0].mxu0
  %474 = vmatprep.mubr.f32.mxu0 0.0
  %475 = vmatmul.mubr.f32.gmra.mrb[0].mxu0 %v167
  %v476 = vpop.f32.mrb[0].mxu0
  %v477 = vadd.f32 %v85, %v476
  %v478 = vpop.f32.mrb[0].mxu0
  %479 = vmatprep.mubr.f32.mxu0 0.0
  %480 = vmatmul.mubr.f32.gmra.mrb[0].mxu0 %v170
  %v481 = vpop.f32.mrb[0].mxu0
  %v482 = vadd.f32 %v85, %v481
  %v483 = vpop.f32.mrb[0].mxu0
  %484 = vmatprep.mubr.f32.mxu0 0.0
  %485 = vmatmul.mubr.f32.gmra.mrb[0].mxu0 %v173
  %v486 = vpop.f32.mrb[0].mxu0
  %v487 = vadd.f32 %v85, %v486
  %v488 = vpop.f32.mrb[0].mxu0
  %489 = vmatprep.mubr.f32.mxu0 0.0
  %490 = vmatmul.mubr.f32.gmra.mrb[0].mxu0 %v176
  %v491 = vpop.f32.mrb[0].mxu0
  %v492 = vadd.f32 %v85, %v491
  %v493 = vpop.f32.mrb[0].mxu0
  %494 = vmatprep.mubr.f32.mxu0 0.0
  %495 = vmatmul.mubr.f32.gmra.mrb[0].mxu0 %v179
  %v496 = vpop.f32.mrb[0].mxu0
  %v497 = vadd.f32 %v85, %v496
  %v498 = vpop.f32.mrb[0].mxu0
  %499 = vmatprep.mubr.f32.mxu0 0.0
  %500 = vmatmul.mubr.f32.gmra.mrb[0].mxu0 %v182
  %v501 = vpop.f32.mrb[0].mxu0
  %v502 = vadd.f32 %v85, %v501
  %v503 = vpop.f32.mrb[0].mxu0
  %504 = vmatprep.mubr.f32.mxu0 0.0
  %505 = vmatmul.mubr.f32.gmra.mrb[0].mxu0 %v185
  %v506 = vpop.f32.mrb[0].mxu0
  %v507 = vadd.f32 %v85, %v506
  %v508 = vpop.f32.mrb[0].mxu0
  %509 = vmatprep.mubr.f32.mxu0 0.0
  %510 = vmatmul.mubr.f32.gmra.mrb[0].mxu0 %v188
  %v511 = vpop.f32.mrb[0].mxu0
  %v512 = vadd.f32 %v85, %v511
  %v513 = vpop.f32.mrb[0].mxu0
  %514 = vmatprep.mubr.f32.mxu0 0.0
  %515 = vmatmul.mubr.f32.gmra.mrb[0].mxu0 %v191
  %v516 = vpop.f32.mrb[0].mxu0
  %v517 = vadd.f32 %v85, %v516
  %v518 = vpop.f32.mrb[0].mxu0
  %519 = vmatprep.mubr.f32.mxu0 0.0
  %520 = vmatmul.mubr.f32.gmra.mrb[0].mxu0 %v194
  %v521 = vpop.f32.mrb[0].mxu0
  %v522 = vadd.f32 %v85, %v521
  %v523 = vpop.f32.mrb[0].mxu0
  %524 = vmatprep.mubr.f32.mxu0 0.0
  %525 = vmatmul.mubr.f32.gmra.mrb[0].mxu0 %v197
  %v526 = vpop.f32.mrb[0].mxu0
  %v527 = vadd.f32 %v85, %v526
  %v528 = vpop.f32.mrb[0].mxu0
  %529 = vmatprep.mubr.f32.mxu0 0.0
  %530 = vmatmul.mubr.f32.gmra.mrb[0].mxu0 %v200
  %v531 = vpop.f32.mrb[0].mxu0
  %v532 = vadd.f32 %v85, %v531
  %v533 = vpop.f32.mrb[0].mxu0
  %534 = vmatprep.mubr.f32.mxu0 0.0
  %535 = vmatmul.mubr.f32.gmra.mrb[0].mxu0 %v203
  %v536 = vpop.f32.mrb[0].mxu0
  %v537 = vadd.f32 %v85, %v536
  %v538 = vpop.f32.mrb[0].mxu0
  %539 = vmatprep.mubr.f32.mxu0 0.0
  %540 = vmatmul.mubr.f32.gmra.mrb[0].mxu0 %v206
  %v541 = vpop.f32.mrb[0].mxu0
  %v542 = vadd.f32 %v85, %v541
  %v543 = vpop.f32.mrb[0].mxu0
  %544 = vmatprep.mubr.f32.mxu0 0.0
  %545 = vmatmul.mubr.f32.gmra.mrb[0].mxu0 %v209
  %v546 = vpop.f32.mrb[0].mxu0
  %v547 = vadd.f32 %v85, %v546
  %v548 = vpop.f32.mrb[0].mxu0
  %549 = vmatprep.mubr.f32.mxu0 0.0
  %550 = vmatmul.mubr.f32.gmra.mrb[0].mxu0 %v212
  %v551 = vpop.f32.mrb[0].mxu0
  %v552 = vadd.f32 %v85, %v551
  %v553 = vpop.f32.mrb[0].mxu0
  %554 = vmatprep.mubr.f32.mxu0 0.0
  %555 = vmatmul.mubr.f32.gmra.mrb[0].mxu0 %v215
  %v556 = vpop.f32.mrb[0].mxu0
  %v557 = vadd.f32 %v85, %v556
  %v558 = vpop.f32.mrb[0].mxu0
  %559 = vmatprep.mubr.f32.mxu0 0.0
  %560 = vmatmul.mubr.f32.gmra.mrb[0].mxu0 %v218
  %v561 = vpop.f32.mrb[0].mxu0
  %v562 = vadd.f32 %v85, %v561
  %v563 = vpop.f32.mrb[0].mxu0
  %564 = vmatprep.mubr.f32.mxu0 0.0
  %565 = vmatmul.mubr.f32.gmra.mrb[0].mxu0 %v221
  %v566 = vpop.f32.mrb[0].mxu0
  %v567 = vadd.f32 %v85, %v566
  %v568 = vpop.f32.mrb[0].mxu0
  %569 = vmatprep.mubr.f32.mxu0 0.0
  %570 = vmatmul.mubr.f32.gmra.mrb[0].mxu0 %v224
  %v571 = vpop.f32.mrb[0].mxu0
  %v572 = vadd.f32 %v85, %v571
  %v573 = vpop.f32.mrb[0].mxu0
  %574 = vmatprep.mubr.f32.mxu0 0.0
  %575 = vmatmul.mubr.f32.gmra.mrb[0].mxu0 %v227
  %v576 = vpop.f32.mrb[0].mxu0
  %v577 = vadd.f32 %v85, %v576
  %v578 = vpop.f32.mrb[0].mxu0
  %579 = vmatprep.mubr.f32.mxu0 0.0
  %580 = vmatmul.mubr.f32.gmra.mrb[0].mxu0 %v230
  %v581 = vpop.f32.mrb[0].mxu0
  %v582 = vadd.f32 %v85, %v581
  %v583 = vpop.f32.mrb[0].mxu0
  %584 = vmatprep.mubr.f32.mxu0 0.0
  %585 = vmatmul.mubr.f32.gmra.mrb[0].mxu0 %v233
  %v586 = vpop.f32.mrb[0].mxu0
  %v587 = vadd.f32 %v85, %v586
  %v588 = vpop.f32.mrb[0].mxu0
  %589 = vmatprep.mubr.f32.mxu0 0.0
  %590 = vmatmul.mubr.f32.gmra.mrb[0].mxu0 %v236
  %v591 = vpop.f32.mrb[0].mxu0
  %v592 = vadd.f32 %v85, %v591
  %v593 = vpop.f32.mrb[0].mxu0
  %594 = vmatprep.mubr.f32.mxu0 0.0
  %595 = vmatmul.mubr.f32.gmra.mrb[0].mxu0 %v239
  %v596 = vpop.f32.mrb[0].mxu0
  %v597 = vadd.f32 %v85, %v596
  %v598 = vpop.f32.mrb[0].mxu0
  %599 = vmatprep.mubr.f32.mxu0 0.0
  %600 = vmatmul.mubr.f32.gmra.mrb[0].mxu0 %v242
  %v601 = vpop.f32.mrb[0].mxu0
  %v602 = vadd.f32 %v85, %v601
  %v603 = vpop.f32.mrb[0].mxu0
  %604 = vmatprep.mubr.f32.mxu0 0.0
  %605 = vmatmul.mubr.f32.gmra.mrb[0].mxu0 %v245
  %v606 = vpop.f32.mrb[0].mxu0
  %v607 = vadd.f32 %v85, %v606
  %v608 = vpop.f32.mrb[0].mxu0
  %609 = vmatprep.mubr.f32.mxu0 0.0
  %610 = vmatmul.mubr.f32.gmra.mrb[0].mxu0 %v248
  %v611 = vpop.f32.mrb[0].mxu0
  %v612 = vadd.f32 %v85, %v611
  %v613 = vpop.f32.mrb[0].mxu0
  %614 = vmatprep.mubr.f32.mxu0 0.0
  %615 = vmatmul.mubr.f32.gmra.mrb[0].mxu0 %v251
  %v616 = vpop.f32.mrb[0].mxu0
  %v617 = vadd.f32 %v85, %v616
  %v618 = vpop.f32.mrb[0].mxu0
  %619 = vmatprep.mubr.f32.mxu0 0.0
  %620 = vmatmul.mubr.f32.gmra.mrb[0].mxu0 %v254
  %v621 = vpop.f32.mrb[0].mxu0
  %v622 = vadd.f32 %v85, %v621
  %v623 = vpop.f32.mrb[0].mxu0
  %624 = vmatprep.mubr.f32.mxu0 0.0
  %625 = vmatmul.mubr.f32.gmra.mrb[0].mxu0 %v257
  %v626 = vpop.f32.mrb[0].mxu0
  %v627 = vadd.f32 %v85, %v626
  %v628 = vpop.f32.mrb[0].mxu0
  %629 = vmatprep.mubr.f32.mxu0 0.0
  %630 = vmatmul.mubr.f32.gmra.mrb[0].mxu0 %v260
  %v631 = vpop.f32.mrb[0].mxu0
  %v632 = vadd.f32 %v85, %v631
  %v633 = vpop.f32.mrb[0].mxu0
  %634 = vmatprep.mubr.f32.mxu0 0.0
  %635 = vmatmul.mubr.f32.gmra.mrb[0].mxu0 %v263
  %v636 = vpop.f32.mrb[0].mxu0
  %v637 = vadd.f32 %v85, %v636
  %v638 = vpop.f32.mrb[0].mxu0
  %639 = vmatprep.mubr.f32.mxu0 0.0
  %640 = vmatmul.mubr.f32.gmra.mrb[0].mxu0 %v266
  %v641 = vpop.f32.mrb[0].mxu0
  %v642 = vadd.f32 %v85, %v641
  %v643 = vpop.f32.mrb[0].mxu0
  %644 = vmatprep.mubr.f32.mxu0 0.0
  %645 = vmatmul.mubr.f32.gmra.mrb[0].mxu0 %v269
  %v646 = vpop.f32.mrb[0].mxu0
  %v647 = vadd.f32 %v85, %v646
  %v648 = vpop.f32.mrb[0].mxu0
  %649 = vmatprep.mubr.f32.mxu0 0.0
  %650 = vmatmul.mubr.f32.gmra.mrb[0].mxu0 %v272
  %v651 = vpop.f32.mrb[0].mxu0
  %v652 = vadd.f32 %v85, %v651
  %v653 = vpop.f32.mrb[0].mxu0
  %654 = vmatprep.mubr.f32.mxu0 0.0
  %655 = vmatmul.mubr.f32.gmra.mrb[0].mxu0 %v275
  %v656 = vpop.f32.mrb[0].mxu0
  %v657 = vadd.f32 %v85, %v656
  %v658 = vpop.f32.mrb[0].mxu0
  %659 = vmatprep.mubr.f32.mxu0 0.0
  %660 = vmatmul.mubr.f32.gmra.mrb[0].mxu0 %v278
  %v661 = vpop.f32.mrb[0].mxu0
  %v662 = vadd.f32 %v85, %v661
  %v663 = vpop.f32.mrb[0].mxu0
  %664 = vdwg.mxu0
  %v665 = vmax.f32 %v347, 0.0
  %v666 = vmax.f32 %v352, 0.0
  %v667 = vmax.f32 %v357, 0.0
  %v668 = vmax.f32 %v362, 0.0
  %v669 = vmax.f32 %v367, 0.0
  %v670 = vmax.f32 %v372, 0.0
  %v671 = vmax.f32 %v377, 0.0
  %v672 = vmax.f32 %v382, 0.0
  %v673 = vmax.f32 %v387, 0.0
  %v674 = vmax.f32 %v392, 0.0
  %v675 = vmax.f32 %v397, 0.0
  %v676 = vmax.f32 %v402, 0.0
  %v677 = vmax.f32 %v407, 0.0
  %v678 = vmax.f32 %v412, 0.0
  %v679 = vmax.f32 %v417, 0.0
  %v680 = vmax.f32 %v422, 0.0
  %v681 = vmax.f32 %v427, 0.0
  %v682 = vmax.f32 %v432, 0.0
  %v683 = vmax.f32 %v437, 0.0
  %v684 = vmax.f32 %v442, 0.0
  %v685 = vmax.f32 %v447, 0.0
  %v686 = vmax.f32 %v452, 0.0
  %v687 = vmax.f32 %v457, 0.0
  %v688 = vmax.f32 %v462, 0.0
  %v689 = vmax.f32 %v467, 0.0
  %v690 = vmax.f32 %v472, 0.0
  %v691 = vmax.f32 %v477, 0.0
  %v692 = vmax.f32 %v482, 0.0
  %v693 = vmax.f32 %v487, 0.0
  %v694 = vmax.f32 %v492, 0.0
  %v695 = vmax.f32 %v497, 0.0
  %v696 = vmax.f32 %v502, 0.0
  %v697 = vmax.f32 %v507, 0.0
  %v698 = vmax.f32 %v512, 0.0
  %v699 = vmax.f32 %v517, 0.0
  %v700 = vmax.f32 %v522, 0.0
  %v701 = vmax.f32 %v527, 0.0
  %v702 = vmax.f32 %v532, 0.0
  %v703 = vmax.f32 %v537, 0.0
  %v704 = vmax.f32 %v542, 0.0
  %v705 = vmax.f32 %v547, 0.0
  %v706 = vmax.f32 %v552, 0.0
  %v707 = vmax.f32 %v557, 0.0
  %v708 = vmax.f32 %v562, 0.0
  %v709 = vmax.f32 %v567, 0.0
  %v710 = vmax.f32 %v572, 0.0
  %v711 = vmax.f32 %v577, 0.0
  %v712 = vmax.f32 %v582, 0.0
  %v713 = vmax.f32 %v587, 0.0
  %v714 = vmax.f32 %v592, 0.0
  %v715 = vmax.f32 %v597, 0.0
  %v716 = vmax.f32 %v602, 0.0
  %v717 = vmax.f32 %v607, 0.0
  %v718 = vmax.f32 %v612, 0.0
  %v719 = vmax.f32 %v617, 0.0
  %v720 = vmax.f32 %v622, 0.0
  %v721 = vmax.f32 %v627, 0.0
  %v722 = vmax.f32 %v632, 0.0
  %v723 = vmax.f32 %v637, 0.0
  %v724 = vmax.f32 %v642, 0.0
  %v725 = vmax.f32 %v647, 0.0
  %v726 = vmax.f32 %v652, 0.0
  %v727 = vmax.f32 %v657, 0.0
  %v728 = vmax.f32 %v662, 0.0
  %vm729 = vcmask 64512
  %730 = vst.msk [vmem:[%s3] sm:$0xff] %vm729, %v665
  %731 = vst.msk [vmem:[%s3 + $0x8] sm:$0xff] %vm729, %v666
  %732 = vst.msk [vmem:[%s3 + $0x10] sm:$0xff] %vm729, %v667
  %733 = vst.msk [vmem:[%s3 + $0x18] sm:$0xff] %vm729, %v668
  %734 = vst.msk [vmem:[%s3 + $0x20] sm:$0xff] %vm729, %v669
  %735 = vst.msk [vmem:[%s3 + $0x28] sm:$0xff] %vm729, %v670
  %736 = vst.msk [vmem:[%s3 + $0x30] sm:$0xff] %vm729, %v671
  %737 = vst.msk [vmem:[%s3 + $0x38] sm:$0xff] %vm729, %v672
  %738 = vst.msk [vmem:[%s3 + $0x40] sm:$0xff] %vm729, %v673
  %739 = vst.msk [vmem:[%s3 + $0x48] sm:$0xff] %vm729, %v674
  %740 = vst.msk [vmem:[%s3 + $0x50] sm:$0xff] %vm729, %v675
  %741 = vst.msk [vmem:[%s3 + $0x58] sm:$0xff] %vm729, %v676
  %742 = vst.msk [vmem:[%s3 + $0x60] sm:$0xff] %vm729, %v677
  %743 = vst.msk [vmem:[%s3 + $0x68] sm:$0xff] %vm729, %v678
  %744 = vst.msk [vmem:[%s3 + $0x70] sm:$0xff] %vm729, %v679
  %745 = vst.msk [vmem:[%s3 + $0x78] sm:$0xff] %vm729, %v680
  %746 = vst.msk [vmem:[%s3 + $0x80] sm:$0xff] %vm729, %v681
  %747 = vst.msk [vmem:[%s3 + $0x88] sm:$0xff] %vm729, %v682
  %748 = vst.msk [vmem:[%s3 + $0x90] sm:$0xff] %vm729, %v683
  %749 = vst.msk [vmem:[%s3 + $0x98] sm:$0xff] %vm729, %v684
  %750 = vst.msk [vmem:[%s3 + $0xa0] sm:$0xff] %vm729, %v685
  %751 = vst.msk [vmem:[%s3 + $0xa8] sm:$0xff] %vm729, %v686
  %752 = vst.msk [vmem:[%s3 + $0xb0] sm:$0xff] %vm729, %v687
  %753 = vst.msk [vmem:[%s3 + $0xb8] sm:$0xff] %vm729, %v688
  %754 = vst.msk [vmem:[%s3 + $0xc0] sm:$0xff] %vm729, %v689
  %755 = vst.msk [vmem:[%s3 + $0xc8] sm:$0xff] %vm729, %v690
  %756 = vst.msk [vmem:[%s3 + $0xd0] sm:$0xff] %vm729, %v691
  %757 = vst.msk [vmem:[%s3 + $0xd8] sm:$0xff] %vm729, %v692
  %758 = vst.msk [vmem:[%s3 + $0xe0] sm:$0xff] %vm729, %v693
  %759 = vst.msk [vmem:[%s3 + $0xe8] sm:$0xff] %vm729, %v694
  %760 = vst.msk [vmem:[%s3 + $0xf0] sm:$0xff] %vm729, %v695
  %761 = vst.msk [vmem:[%s3 + $0xf8] sm:$0xff] %vm729, %v696
  %762 = vst.msk [vmem:[%s3 + $0x100] sm:$0xff] %vm729, %v697
  %763 = vst.msk [vmem:[%s3 + $0x108] sm:$0xff] %vm729, %v698
  %764 = vst.msk [vmem:[%s3 + $0x110] sm:$0xff] %vm729, %v699
  %765 = vst.msk [vmem:[%s3 + $0x118] sm:$0xff] %vm729, %v700
  %766 = vst.msk [vmem:[%s3 + $0x120] sm:$0xff] %vm729, %v701
  %767 = vst.msk [vmem:[%s3 + $0x128] sm:$0xff] %vm729, %v702
  %768 = vst.msk [vmem:[%s3 + $0x130] sm:$0xff] %vm729, %v703
  %769 = vst.msk [vmem:[%s3 + $0x138] sm:$0xff] %vm729, %v704
  %770 = vst.msk [vmem:[%s3 + $0x140] sm:$0xff] %vm729, %v705
  %771 = vst.msk [vmem:[%s3 + $0x148] sm:$0xff] %vm729, %v706
  %772 = vst.msk [vmem:[%s3 + $0x150] sm:$0xff] %vm729, %v707
  %773 = vst.msk [vmem:[%s3 + $0x158] sm:$0xff] %vm729, %v708
  %774 = vst.msk [vmem:[%s3 + $0x160] sm:$0xff] %vm729, %v709
  %775 = vst.msk [vmem:[%s3 + $0x168] sm:$0xff] %vm729, %v710
  %776 = vst.msk [vmem:[%s3 + $0x170] sm:$0xff] %vm729, %v711
  %777 = vst.msk [vmem:[%s3 + $0x178] sm:$0xff] %vm729, %v712
  %778 = vst.msk [vmem:[%s3 + $0x180] sm:$0xff] %vm729, %v713
  %779 = vst.msk [vmem:[%s3 + $0x188] sm:$0xff] %vm729, %v714
  %780 = vst.msk [vmem:[%s3 + $0x190] sm:$0xff] %vm729, %v715
  %781 = vst.msk [vmem:[%s3 + $0x198] sm:$0xff] %vm729, %v716
  %782 = vst.msk [vmem:[%s3 + $0x1a0] sm:$0xff] %vm729, %v717
  %783 = vst.msk [vmem:[%s3 + $0x1a8] sm:$0xff] %vm729, %v718
  %784 = vst.msk [vmem:[%s3 + $0x1b0] sm:$0xff] %vm729, %v719
  %785 = vst.msk [vmem:[%s3 + $0x1b8] sm:$0xff] %vm729, %v720
  %786 = vst.msk [vmem:[%s3 + $0x1c0] sm:$0xff] %vm729, %v721
  %787 = vst.msk [vmem:[%s3 + $0x1c8] sm:$0xff] %vm729, %v722
  %788 = vst.msk [vmem:[%s3 + $0x1d0] sm:$0xff] %vm729, %v723
  %789 = vst.msk [vmem:[%s3 + $0x1d8] sm:$0xff] %vm729, %v724
  %790 = vst.msk [vmem:[%s3 + $0x1e0] sm:$0xff] %vm729, %v725
  %791 = vst.msk [vmem:[%s3 + $0x1e8] sm:$0xff] %vm729, %v726
  %792 = vst.msk [vmem:[%s3 + $0x1f0] sm:$0xff] %vm729, %v727
  %793 = vst.msk [vmem:[%s3 + $0x1f8] sm:$0xff] %vm729, %v728
  // Predicated region
  $region14: #{bottleneck_forward.4} parent=0 // pred_check
    _
  $region15: #{bottleneck_forward.4} parent=0 // pred_check_branch
    %795 = sbr.rel (0) target = $region17
  $region16: #{bottleneck_forward.4} parent=0 // pred_region
    _
  $region17: #{bottleneck_forward.4} parent=0 // pred_fallthru
    _
  // Predicated region
  $region18: #{bottleneck_forward.4} parent=0 // pred_check
    _
  $region19: #{bottleneck_forward.4} parent=0 // pred_check_branch
    %797 = sbr.rel (0) target = $region21
  $region20: #{bottleneck_forward.4} parent=0 // pred_region
    _
  $region21: #{bottleneck_forward.4} parent=0 // pred_fallthru
    _

// kernel: bottleneck_forward.6
$region0: #{bottleneck_forward.6}
  #allocation0 [shape = 'u32[]', space=smem, size = 0x4, offset = 0x4, fixed_abs, tag = 'smem constant byte address 0x4 - core index']
  #allocation1 [shape = 'u32[144,128]{1,0:T(1,128)}', space=vmem, size = 0x12000, scoped, tag = 'internal scratch']
  %s0 = inlined_call_operand.vmem [shape: f32[2,16,16,16], index: 0, kind: input, shape index: {}]
  %s1 = inlined_call_operand.vmem [shape: f32[16,32], index: 1, kind: input, shape index: {}]
  %s2 = inlined_call_operand.vmem [shape: f32[1,32], index: 2, kind: input, shape index: {}]
  %s3 = inlined_call_operand.vmem [shape: f32[2,8,8,32], index: 3, kind: output, shape index: {}]
  %s4 = sld [smem:[#allocation0]]
  $region45: #{bottleneck_forward.6} parent=0
    _
  %s6 = ssub.s32 1, %s4
  %s7 = scalar_select 0, %s6, %s4
  loop: start=0, step=1, limit=6
  $region2: #{bottleneck_forward.6} parent=0 // loop_pre_header
    _
  $region3: #{bottleneck_forward.6} parent=0 // loop_header
    %s9 = sphi 0, %s13
    %p10 = scmp.ge.s32.totalorder %s9, 6
    %s16 = sphi 0, %s28
    %s17 = sphi 0, %s24
    %s18 = sphi 0, %s16
    %s19 = sphi 0, %s17
    %s20 = sphi 0, %s18
    %s21 = sphi 0, %s19
    %s33 = sphi 0, %s35
    %s36 = sphi 0, %s33
    %s37 = sphi 0, %s36
    %s53 = sphi 0, %s37
    %s57 = sphi 0, %s57
    %s59 = sphi 0, %s57
    %s60 = sphi 0, %s59
    %s74 = sphi 0, %s60
    %s78 = sphi 0, %s78
    %s80 = sphi 0, %s78
    %s81 = sphi 0, %s80
    %s95 = sphi 0, %s81
    %s103 = sphi 0, %s105
    %s106 = sphi 0, %s103
    %s107 = sphi 0, %s106
    %s123 = sphi 0, %s107
  $region4: #{bottleneck_forward.6} parent=0 // loop_header_branch
    %12 = sbr.rel (%p10) target = $region8
  $region5: #{bottleneck_forward.6} parent=0 // loop_body
    %s14 = ssub.s32 %s9, 1
    %s15 = ssub.s32 %s9, 2
    %s22 = sadd.s32 1, %s17
    %p23 = scmp.ge.s32.totalorder %s22, 2
    %s24 = scalar_select %p23, 0, %s22
    %s25 = sadd.s32 1, %s16
    %s26 = scalar_select %p23, %s25, %s16
    %p27 = scmp.ge.s32.totalorder %s26, 2
    %s28 = scalar_select %p27, 0, %s26
    %s29 = ssub.s32 %s16, %s28
    %s30 = ssub.s32 %s17, %s24
    %s31 = sor.u32 %s29, %s30
    %p32 = scmp.eq.s32.totalorder %s31, 0
    %s34 = sadd.s32 %s33, 1
    %s35 = scalar_select %p32, %s33, %s34
    %p38 = pneg %p32
    %p39 = scmp.eq.s32.totalorder %s9, 3
    %p40 = por %p38, %p39
    %p41 = scmp.ne.s32.totalorder %s33, %s36
    %p42 = scmp.eq.s32.totalorder %s9, 0
    %p43 = por %p41, %p42
    %p44 = scmp.ne.s32.totalorder %s33, %s36
    %p45 = scmp.eq.s32.totalorder %s14, 3
    %p46 = por %p44, %p45
    %p47 = scmp.ne.s32.totalorder %s36, %s37
    %p48 = scmp.eq.s32.totalorder %s14, 0
    %p49 = por %p47, %p48
    %p50 = scmp.ne.s32.totalorder %s36, %s37
    %p51 = scmp.eq.s32.totalorder %s15, 3
    %p52 = por %p50, %p51
    %p54 = scmp.ne.s32.totalorder %s37, %s53
    %p55 = scmp.eq.s32.totalorder %s15, 0
    %p56 = por %p54, %p55
    %s58 = sadd.s32 %s57, 1
    %p61 = scmp.eq.s32.totalorder %s9, 3
    %p62 = scmp.ne.s32.totalorder %s57, %s59
    %p63 = scmp.eq.s32.totalorder %s9, 0
    %p64 = por %p62, %p63
    %p65 = scmp.ne.s32.totalorder %s57, %s59
    %p66 = scmp.eq.s32.totalorder %s14, 3
    %p67 = por %p65, %p66
    %p68 = scmp.ne.s32.totalorder %s59, %s60
    %p69 = scmp.eq.s32.totalorder %s14, 0
    %p70 = por %p68, %p69
    %p71 = scmp.ne.s32.totalorder %s59, %s60
    %p72 = scmp.eq.s32.totalorder %s15, 3
    %p73 = por %p71, %p72
    %p75 = scmp.ne.s32.totalorder %s60, %s74
    %p76 = scmp.eq.s32.totalorder %s15, 0
    %p77 = por %p75, %p76
    %s79 = sadd.s32 %s78, 1
    %p82 = scmp.eq.s32.totalorder %s9, 3
    %p83 = scmp.ne.s32.totalorder %s78, %s80
    %p84 = scmp.eq.s32.totalorder %s9, 0
    %p85 = por %p83, %p84
    %p86 = scmp.ne.s32.totalorder %s78, %s80
    %p87 = scmp.eq.s32.totalorder %s14, 3
    %p88 = por %p86, %p87
    %p89 = scmp.ne.s32.totalorder %s80, %s81
    %p90 = scmp.eq.s32.totalorder %s14, 0
    %p91 = por %p89, %p90
    %p92 = scmp.ne.s32.totalorder %s80, %s81
    %p93 = scmp.eq.s32.totalorder %s15, 3
    %p94 = por %p92, %p93
    %p96 = scmp.ne.s32.totalorder %s81, %s95
    %p97 = scmp.eq.s32.totalorder %s15, 0
    %p98 = por %p96, %p97
    %s99 = ssub.s32 %s16, %s28
    %s100 = ssub.s32 %s17, %s24
    %s101 = sor.u32 %s99, %s100
    %p102 = scmp.eq.s32.totalorder %s101, 0
    %s104 = sadd.s32 %s103, 1
    %s105 = scalar_select %p102, %s103, %s104
    %p108 = pneg %p102
    %p109 = scmp.eq.s32.totalorder %s9, 3
    %p110 = por %p108, %p109
    %p111 = scmp.ne.s32.totalorder %s103, %s106
    %p112 = scmp.eq.s32.totalorder %s9, 0
    %p113 = por %p111, %p112
    %p114 = scmp.ne.s32.totalorder %s103, %s106
    %p115 = scmp.eq.s32.totalorder %s14, 3
    %p116 = por %p114, %p115
    %p117 = scmp.ne.s32.totalorder %s106, %s107
    %p118 = scmp.eq.s32.totalorder %s14, 0
    %p119 = por %p117, %p118
    %p120 = scmp.ne.s32.totalorder %s106, %s107
    %p121 = scmp.eq.s32.totalorder %s15, 3
    %p122 = por %p120, %p121
    %p124 = scmp.ne.s32.totalorder %s107, %s123
    %p125 = scmp.eq.s32.totalorder %s15, 0
    %p126 = por %p124, %p125
    %p127 = scmp.le.s32.totalorder 1, %s9
    %p128 = scmp.lt.s32.totalorder %s9, 5
    %p129 = pnand %p127, %p128
    %p130 = pneg %p129
    // Predicated region
    $region9: #{bottleneck_forward.6} parent=5 // pred_check
      _
    $region10: #{bottleneck_forward.6} parent=5 // pred_check_branch
      %132 = sbr.rel (%p129) target = $region12
    $region11: #{bottleneck_forward.6} parent=5 // pred_region
      %s133 = ssub.s32 %s9, 1
      // Predicated region
      $region13: #{bottleneck_forward.6} parent=11 // pred_check
        %p134 = pneg %p70
      $region14: #{bottleneck_forward.6} parent=11 // pred_check_branch
        %136 = sbr.rel (%p134) target = $region16
      $region15: #{bottleneck_forward.6} parent=11 // pred_region
        _
      $region16: #{bottleneck_forward.6} parent=11 // pred_fallthru
        _
      // Predicated region
      $region17: #{bottleneck_forward.6} parent=11 // pred_check
        %p137 = pneg %p91
      $region18: #{bottleneck_forward.6} parent=11 // pred_check_branch
        %139 = sbr.rel (%p137) target = $region20
      $region19: #{bottleneck_forward.6} parent=11 // pred_region
        _
      $region20: #{bottleneck_forward.6} parent=11 // pred_fallthru
        _
    $region12: #{bottleneck_forward.6} parent=5 // pred_fallthru
      _
    %p140 = scmp.lt.s32.totalorder %s9, 4
    // Predicated region
    $region21: #{bottleneck_forward.6} parent=5 // pred_check
      %p141 = pneg %p140
    $region22: #{bottleneck_forward.6} parent=5 // pred_check_branch
      %143 = sbr.rel (%p141) target = $region24
    $region23: #{bottleneck_forward.6} parent=5 // pred_region
      // Predicated region
      $region25: #{bottleneck_forward.6} parent=23 // pred_check
        %p144 = pneg %p43
      $region26: #{bottleneck_forward.6} parent=23 // pred_check_branch
        %146 = sbr.rel (%p144) target = $region28
      $region27: #{bottleneck_forward.6} parent=23 // pred_region
        %s147 = smul.u32 8, %s17
        %p148 = scmp.lt.s32.totalorder %s16, 1
        %s149 = scalar_select %p148, %s16, 1
        %p150 = scmp.lt.s32.totalorder %s147, 15
        %s151 = scalar_select %p150, %s147, 15
        %s152 = smul.addr %s151, 2
        %s153 = smul.addr %s149, 32
        %s154 = sadd.s32 %s152, %s153
        %s155 = smul.addr %s154, 8
        %s156 = scalar_lea.vmem %s0, %s155
        %s157 = smul.u32 8, %s17
      $region28: #{bottleneck_forward.6} parent=23 // pred_fallthru
        _
    $region24: #{bottleneck_forward.6} parent=5 // pred_fallthru
      _
    %p158 = scmp.le.s32.totalorder 1, %s9
    %p159 = scmp.lt.s32.totalorder %s9, 5
    %p160 = pnand %p158, %p159
    %p161 = pneg %p160
    // Predicated region
    $region29: #{bottleneck_forward.6} parent=5 // pred_check
      _
    $region30: #{bottleneck_forward.6} parent=5 // pred_check_branch
      %163 = sbr.rel (%p160) target = $region32
    $region31: #{bottleneck_forward.6} parent=5 // pred_region
      %s164 = ssub.s32 %s9, 1
      %s165 = smul.u32 8, %s19
      %p166 = scmp.lt.s32.totalorder %s18, 1
      %s167 = scalar_select %p166, %s18, 1
      %p168 = scmp.lt.s32.totalorder %s165, 15
      %s169 = scalar_select %p168, %s165, 15
      %s170 = smul.addr %s169, 2
      %s171 = smul.addr %s167, 32
      %s172 = sadd.s32 %s170, %s171
      %s173 = smul.addr %s172, 8
      %s174 = scalar_lea.vmem %s0, %s173
      %p175 = pneg %p49
      %p176 = pneg %p46
      %p177 = pneg %p70
      %p178 = pneg %p67
      %p179 = pneg %p91
      %p180 = pneg %p88
      %p181 = pneg %p119
      %p182 = pneg %p116
      %s183 = smul.u32 4, %s19
      %p184 = scmp.lt.s32.totalorder %s18, 1
      %s185 = scalar_select %p184, %s18, 1
      %p186 = scmp.lt.s32.totalorder %s183, 7
      %s187 = scalar_select %p186, %s183, 7
      %s188 = smul.addr %s185, 8
      %s189 = sadd.s32 %s187, %s188
      %s190 = smul.addr %s189, 8
      %s191 = scalar_lea.vmem %s3, %s190
      %s192 = smul.u32 8, %s19
      %p193 = scmp.lt.s32.totalorder %s18, 1
      %s194 = scalar_select %p193, %s18, 1
      %p195 = scmp.lt.s32.totalorder %s192, 15
      %s196 = scalar_select %p195, %s192, 15
      %s197 = smul.addr %s196, 2
      %s198 = smul.addr %s194, 32
      %s199 = sadd.s32 %s197, %s198
      %s200 = smul.addr %s199, 8
      %s201 = scalar_lea.vmem %s0, %s200
      %s202 = smul.u32 8, %s19
      %s203 = smul.u32 4, %s19
      %p204 = scmp.lt.s32.totalorder %s18, 1
      %s205 = scalar_select %p204, %s18, 1
      %p206 = scmp.lt.s32.totalorder %s203, 7
      %s207 = scalar_select %p206, %s203, 7
      %s208 = smul.addr %s205, 8
      %s209 = sadd.s32 %s207, %s208
      %s210 = smul.addr %s209, 8
      %s211 = scalar_lea.vmem %s3, %s210
      %s212 = smul.u32 4, %s19
      %v213 = vld [vmem:[%s201] sm:$0xff]
      %v214 = vld [vmem:[%s201 + $0x8] sm:$0xff]
      %v215 = vld [vmem:[%s201 + $0x10] sm:$0xff]
      %v216 = vld [vmem:[%s201 + $0x18] sm:$0xff]
      %v217 = vld [vmem:[%s201 + $0x20] sm:$0xff]
      %v218 = vld [vmem:[%s201 + $0x28] sm:$0xff]
      %v219 = vld [vmem:[%s201 + $0x30] sm:$0xff]
      %v220 = vld [vmem:[%s201 + $0x38] sm:$0xff]
      %v221 = vld [vmem:[%s201 + $0x40] sm:$0xff]
      %v222 = vld [vmem:[%s201 + $0x48] sm:$0xff]
      %v223 = vld [vmem:[%s201 + $0x50] sm:$0xff]
      %v224 = vld [vmem:[%s201 + $0x58] sm:$0xff]
      %v225 = vld [vmem:[%s201 + $0x60] sm:$0xff]
      %v226 = vld [vmem:[%s201 + $0x68] sm:$0xff]
      %v227 = vld [vmem:[%s201 + $0x70] sm:$0xff]
      %v228 = vld [vmem:[%s201 + $0x78] sm:$0xff]
      %vm229 = vcmask 130048
      %v230 = vsel %vm229, %v213, 0.0
      %v231 = vsel %vm229, %v215, 0.0
      %v232 = vadd.f32 %v230, %v231
      %v233 = vsel %vm229, %v214, 0.0
      %v234 = vsel %vm229, %v216, 0.0
      %v235 = vadd.f32 %v233, %v234
      %v236 = vsel %vm229, %v217, 0.0
      %v237 = vsel %vm229, %v219, 0.0
      %v238 = vadd.f32 %v236, %v237
      %v239 = vsel %vm229, %v218, 0.0
      %v240 = vsel %vm229, %v220, 0.0
      %v241 = vadd.f32 %v239, %v240
      %v242 = vsel %vm229, %v221, 0.0
      %v243 = vsel %vm229, %v223, 0.0
      %v244 = vadd.f32 %v242, %v243
      %v245 = vsel %vm229, %v222, 0.0
      %v246 = vsel %vm229, %v224, 0.0
      %v247 = vadd.f32 %v245, %v246
      %v248 = vsel %vm229, %v225, 0.0
      %v249 = vsel %vm229, %v227, 0.0
      %v250 = vadd.f32 %v248, %v249
      %v251 = vsel %vm229, %v226, 0.0
      %v252 = vsel %vm229, %v228, 0.0
      %v253 = vadd.f32 %v251, %v252
      %v262 = vcombine.high %v232, %v232
      %v264 = vunpack.c.l.s4 1983009808
      %v265 = vunpack.c.0.s8 %v264
      %v266 = vlaneseq
      %v267 = vshrl.u32 %v266, 7
      %v268 = vsub.s32 %v265, %v267
      %v269 = vrot.slane %v232, %v268
      %v271 = vunpack.c.l.s4 1983009808
      %v272 = vunpack.c.0.s8 %v271
      %v273 = vlaneseq
      %v274 = vshrl.u32 %v273, 7
      %v275 = vsub.s32 %v272, %v274
      %v276 = vrot.slane %v262, %v275
      %v277 = vcombine.high %v269, %v269
      %v278 = vcombine.high %v276, %v276
      %v279 = vcombine.high %v235, %v235
      %v281 = vunpack.c.l.s4 1983009808
      %v282 = vunpack.c.0.s8 %v281
      %v283 = vlaneseq
      %v284 = vshrl.u32 %v283, 7
      %v285 = vsub.s32 %v282, %v284
      %v286 = vrot.slane %v235, %v285
      %v288 = vunpack.c.l.s4 1983009808
      %v289 = vunpack.c.0.s8 %v288
      %v290 = vlaneseq
      %v291 = vshrl.u32 %v290, 7
      %v292 = vsub.s32 %v289, %v291
      %v293 = vrot.slane %v279, %v292
      %v294 = vcombine.high %v286, %v286
      %v295 = vcombine.high %v293, %v293
      %v296 = vcombine.high %v238, %v238
      %v298 = vunpack.c.l.s4 1983009808
      %v299 = vunpack.c.0.s8 %v298
      %v300 = vlaneseq
      %v301 = vshrl.u32 %v300, 7
      %v302 = vsub.s32 %v299, %v301
      %v303 = vrot.slane %v238, %v302
      %v305 = vunpack.c.l.s4 1983009808
      %v306 = vunpack.c.0.s8 %v305
      %v307 = vlaneseq
      %v308 = vshrl.u32 %v307, 7
      %v309 = vsub.s32 %v306, %v308
      %v310 = vrot.slane %v296, %v309
      %v311 = vcombine.high %v303, %v303
      %v312 = vcombine.high %v310, %v310
      %v313 = vcombine.high %v241, %v241
      %v315 = vunpack.c.l.s4 1983009808
      %v316 = vunpack.c.0.s8 %v315
      %v317 = vlaneseq
      %v318 = vshrl.u32 %v317, 7
      %v319 = vsub.s32 %v316, %v318
      %v320 = vrot.slane %v241, %v319
      %v322 = vunpack.c.l.s4 1983009808
      %v323 = vunpack.c.0.s8 %v322
      %v324 = vlaneseq
      %v325 = vshrl.u32 %v324, 7
      %v326 = vsub.s32 %v323, %v325
      %v327 = vrot.slane %v313, %v326
      %v328 = vcombine.high %v320, %v320
      %v329 = vcombine.high %v327, %v327
      %v330 = vcombine.high %v244, %v244
      %v332 = vunpack.c.l.s4 1983009808
      %v333 = vunpack.c.0.s8 %v332
      %v334 = vlaneseq
      %v335 = vshrl.u32 %v334, 7
      %v336 = vsub.s32 %v333, %v335
      %v337 = vrot.slane %v244, %v336
      %v339 = vunpack.c.l.s4 1983009808
      %v340 = vunpack.c.0.s8 %v339
      %v341 = vlaneseq
      %v342 = vshrl.u32 %v341, 7
      %v343 = vsub.s32 %v340, %v342
      %v344 = vrot.slane %v330, %v343
      %v345 = vcombine.high %v337, %v337
      %v346 = vcombine.high %v344, %v344
      %v347 = vcombine.high %v247, %v247
      %v349 = vunpack.c.l.s4 1983009808
      %v350 = vunpack.c.0.s8 %v349
      %v351 = vlaneseq
      %v352 = vshrl.u32 %v351, 7
      %v353 = vsub.s32 %v350, %v352
      %v354 = vrot.slane %v247, %v353
      %v356 = vunpack.c.l.s4 1983009808
      %v357 = vunpack.c.0.s8 %v356
      %v358 = vlaneseq
      %v359 = vshrl.u32 %v358, 7
      %v360 = vsub.s32 %v357, %v359
      %v361 = vrot.slane %v347, %v360
      %v362 = vcombine.high %v354, %v354
      %v363 = vcombine.high %v361, %v361
      %v364 = vcombine.high %v250, %v250
      %v366 = vunpack.c.l.s4 1983009808
      %v367 = vunpack.c.0.s8 %v366
      %v368 = vlaneseq
      %v369 = vshrl.u32 %v368, 7
      %v370 = vsub.s32 %v367, %v369
      %v371 = vrot.slane %v250, %v370
      %v373 = vunpack.c.l.s4 1983009808
      %v374 = vunpack.c.0.s8 %v373
      %v375 = vlaneseq
      %v376 = vshrl.u32 %v375, 7
      %v377 = vsub.s32 %v374, %v376
      %v378 = vrot.slane %v364, %v377
      %v379 = vcombine.high %v371, %v371
      %v380 = vcombine.high %v378, %v378
      %v381 = vcombine.high %v253, %v253
      %v383 = vunpack.c.l.s4 1983009808
      %v384 = vunpack.c.0.s8 %v383
      %v385 = vlaneseq
      %v386 = vshrl.u32 %v385, 7
      %v387 = vsub.s32 %v384, %v386
      %v388 = vrot.slane %v253, %v387
      %v390 = vunpack.c.l.s4 1983009808
      %v391 = vunpack.c.0.s8 %v390
      %v392 = vlaneseq
      %v393 = vshrl.u32 %v392, 7
      %v394 = vsub.s32 %v391, %v393
      %v395 = vrot.slane %v381, %v394
      %v396 = vcombine.high %v388, %v388
      %v397 = vcombine.high %v395, %v395
      %vm430 = vcmask 123904
      %v431 = vsel %vm430, %v269, 0.0
      %v432 = vrot.slane %v431, 4
      %v433 = vadd.f32 %v431, %v432
      %v434 = vrot.slane %v433, 2
      %v435 = vadd.f32 %v433, %v434
      %v436 = vrot.slane %v435, 1
      %v437 = vadd.f32 %v435, %v436
      %v438 = vsel %vm430, %v277, 0.0
      %v439 = vrot.slane %v438, 4
      %v440 = vadd.f32 %v438, %v439
      %v441 = vrot.slane %v440, 2
      %v442 = vadd.f32 %v440, %v441
      %v443 = vrot.slane %v442, 1
      %v444 = vadd.f32 %v442, %v443
      %v445 = vsel %vm430, %v276, 0.0
      %v446 = vrot.slane %v445, 4
      %v447 = vadd.f32 %v445, %v446
      %v448 = vrot.slane %v447, 2
      %v449 = vadd.f32 %v447, %v448
      %v450 = vrot.slane %v449, 1
      %v451 = vadd.f32 %v449, %v450
      %v452 = vsel %vm430, %v278, 0.0
      %v453 = vrot.slane %v452, 4
      %v454 = vadd.f32 %v452, %v453
      %v455 = vrot.slane %v454, 2
      %v456 = vadd.f32 %v454, %v455
      %v457 = vrot.slane %v456, 1
      %v458 = vadd.f32 %v456, %v457
      %v459 = vsel %vm430, %v286, 0.0
      %v460 = vrot.slane %v459, 4
      %v461 = vadd.f32 %v459, %v460
      %v462 = vrot.slane %v461, 2
      %v463 = vadd.f32 %v461, %v462
      %v464 = vrot.slane %v463, 1
      %v465 = vadd.f32 %v463, %v464
      %v466 = vsel %vm430, %v294, 0.0
      %v467 = vrot.slane %v466, 4
      %v468 = vadd.f32 %v466, %v467
      %v469 = vrot.slane %v468, 2
      %v470 = vadd.f32 %v468, %v469
      %v471 = vrot.slane %v470, 1
      %v472 = vadd.f32 %v470, %v471
      %v473 = vsel %vm430, %v293, 0.0
      %v474 = vrot.slane %v473, 4
      %v475 = vadd.f32 %v473, %v474
      %v476 = vrot.slane %v475, 2
      %v477 = vadd.f32 %v475, %v476
      %v478 = vrot.slane %v477, 1
      %v479 = vadd.f32 %v477, %v478
      %v480 = vsel %vm430, %v295, 0.0
      %v481 = vrot.slane %v480, 4
      %v482 = vadd.f32 %v480, %v481
      %v483 = vrot.slane %v482, 2
      %v484 = vadd.f32 %v482, %v483
      %v485 = vrot.slane %v484, 1
      %v486 = vadd.f32 %v484, %v485
      %v487 = vsel %vm430, %v303, 0.0
      %v488 = vrot.slane %v487, 4
      %v489 = vadd.f32 %v487, %v488
      %v490 = vrot.slane %v489, 2
      %v491 = vadd.f32 %v489, %v490
      %v492 = vrot.slane %v491, 1
      %v493 = vadd.f32 %v491, %v492
      %v494 = vsel %vm430, %v311, 0.0
      %v495 = vrot.slane %v494, 4
      %v496 = vadd.f32 %v494, %v495
      %v497 = vrot.slane %v496, 2
      %v498 = vadd.f32 %v496, %v497
      %v499 = vrot.slane %v498, 1
      %v500 = vadd.f32 %v498, %v499
      %v501 = vsel %vm430, %v310, 0.0
      %v502 = vrot.slane %v501, 4
      %v503 = vadd.f32 %v501, %v502
      %v504 = vrot.slane %v503, 2
      %v505 = vadd.f32 %v503, %v504
      %v506 = vrot.slane %v505, 1
      %v507 = vadd.f32 %v505, %v506
      %v508 = vsel %vm430, %v312, 0.0
      %v509 = vrot.slane %v508, 4
      %v510 = vadd.f32 %v508, %v509
      %v511 = vrot.slane %v510, 2
      %v512 = vadd.f32 %v510, %v511
      %v513 = vrot.slane %v512, 1
      %v514 = vadd.f32 %v512, %v513
      %v515 = vsel %vm430, %v320, 0.0
      %v516 = vrot.slane %v515, 4
      %v517 = vadd.f32 %v515, %v516
      %v518 = vrot.slane %v517, 2
      %v519 = vadd.f32 %v517, %v518
      %v520 = vrot.slane %v519, 1
      %v521 = vadd.f32 %v519, %v520
      %v522 = vsel %vm430, %v328, 0.0
      %v523 = vrot.slane %v522, 4
      %v524 = vadd.f32 %v522, %v523
      %v525 = vrot.slane %v524, 2
      %v526 = vadd.f32 %v524, %v525
      %v527 = vrot.slane %v526, 1
      %v528 = vadd.f32 %v526, %v527
      %v529 = vsel %vm430, %v327, 0.0
      %v530 = vrot.slane %v529, 4
      %v531 = vadd.f32 %v529, %v530
      %v532 = vrot.slane %v531, 2
      %v533 = vadd.f32 %v531, %v532
      %v534 = vrot.slane %v533, 1
      %v535 = vadd.f32 %v533, %v534
      %v536 = vsel %vm430, %v329, 0.0
      %v537 = vrot.slane %v536, 4
      %v538 = vadd.f32 %v536, %v537
      %v539 = vrot.slane %v538, 2
      %v540 = vadd.f32 %v538, %v539
      %v541 = vrot.slane %v540, 1
      %v542 = vadd.f32 %v540, %v541
      %v543 = vsel %vm430, %v337, 0.0
      %v544 = vrot.slane %v543, 4
      %v545 = vadd.f32 %v543, %v544
      %v546 = vrot.slane %v545, 2
      %v547 = vadd.f32 %v545, %v546
      %v548 = vrot.slane %v547, 1
      %v549 = vadd.f32 %v547, %v548
      %v550 = vsel %vm430, %v345, 0.0
      %v551 = vrot.slane %v550, 4
      %v552 = vadd.f32 %v550, %v551
      %v553 = vrot.slane %v552, 2
      %v554 = vadd.f32 %v552, %v553
      %v555 = vrot.slane %v554, 1
      %v556 = vadd.f32 %v554, %v555
      %v557 = vsel %vm430, %v344, 0.0
      %v558 = vrot.slane %v557, 4
      %v559 = vadd.f32 %v557, %v558
      %v560 = vrot.slane %v559, 2
      %v561 = vadd.f32 %v559, %v560
      %v562 = vrot.slane %v561, 1
      %v563 = vadd.f32 %v561, %v562
      %v564 = vsel %vm430, %v346, 0.0
      %v565 = vrot.slane %v564, 4
      %v566 = vadd.f32 %v564, %v565
      %v567 = vrot.slane %v566, 2
      %v568 = vadd.f32 %v566, %v567
      %v569 = vrot.slane %v568, 1
      %v570 = vadd.f32 %v568, %v569
      %v571 = vsel %vm430, %v354, 0.0
      %v572 = vrot.slane %v571, 4
      %v573 = vadd.f32 %v571, %v572
      %v574 = vrot.slane %v573, 2
      %v575 = vadd.f32 %v573, %v574
      %v576 = vrot.slane %v575, 1
      %v577 = vadd.f32 %v575, %v576
      %v578 = vsel %vm430, %v362, 0.0
      %v579 = vrot.slane %v578, 4
      %v580 = vadd.f32 %v578, %v579
      %v581 = vrot.slane %v580, 2
      %v582 = vadd.f32 %v580, %v581
      %v583 = vrot.slane %v582, 1
      %v584 = vadd.f32 %v582, %v583
      %v585 = vsel %vm430, %v361, 0.0
      %v586 = vrot.slane %v585, 4
      %v587 = vadd.f32 %v585, %v586
      %v588 = vrot.slane %v587, 2
      %v589 = vadd.f32 %v587, %v588
      %v590 = vrot.slane %v589, 1
      %v591 = vadd.f32 %v589, %v590
      %v592 = vsel %vm430, %v363, 0.0
      %v593 = vrot.slane %v592, 4
      %v594 = vadd.f32 %v592, %v593
      %v595 = vrot.slane %v594, 2
      %v596 = vadd.f32 %v594, %v595
      %v597 = vrot.slane %v596, 1
      %v598 = vadd.f32 %v596, %v597
      %v599 = vsel %vm430, %v371, 0.0
      %v600 = vrot.slane %v599, 4
      %v601 = vadd.f32 %v599, %v600
      %v602 = vrot.slane %v601, 2
      %v603 = vadd.f32 %v601, %v602
      %v604 = vrot.slane %v603, 1
      %v605 = vadd.f32 %v603, %v604
      %v606 = vsel %vm430, %v379, 0.0
      %v607 = vrot.slane %v606, 4
      %v608 = vadd.f32 %v606, %v607
      %v609 = vrot.slane %v608, 2
      %v610 = vadd.f32 %v608, %v609
      %v611 = vrot.slane %v610, 1
      %v612 = vadd.f32 %v610, %v611
      %v613 = vsel %vm430, %v378, 0.0
      %v614 = vrot.slane %v613, 4
      %v615 = vadd.f32 %v613, %v614
      %v616 = vrot.slane %v615, 2
      %v617 = vadd.f32 %v615, %v616
      %v618 = vrot.slane %v617, 1
      %v619 = vadd.f32 %v617, %v618
      %v620 = vsel %vm430, %v380, 0.0
      %v621 = vrot.slane %v620, 4
      %v622 = vadd.f32 %v620, %v621
      %v623 = vrot.slane %v622, 2
      %v624 = vadd.f32 %v622, %v623
      %v625 = vrot.slane %v624, 1
      %v626 = vadd.f32 %v624, %v625
      %v627 = vsel %vm430, %v388, 0.0
      %v628 = vrot.slane %v627, 4
      %v629 = vadd.f32 %v627, %v628
      %v630 = vrot.slane %v629, 2
      %v631 = vadd.f32 %v629, %v630
      %v632 = vrot.slane %v631, 1
      %v633 = vadd.f32 %v631, %v632
      %v634 = vsel %vm430, %v396, 0.0
      %v635 = vrot.slane %v634, 4
      %v636 = vadd.f32 %v634, %v635
      %v637 = vrot.slane %v636, 2
      %v638 = vadd.f32 %v636, %v637
      %v639 = vrot.slane %v638, 1
      %v640 = vadd.f32 %v638, %v639
      %v641 = vsel %vm430, %v395, 0.0
      %v642 = vrot.slane %v641, 4
      %v643 = vadd.f32 %v641, %v642
      %v644 = vrot.slane %v643, 2
      %v645 = vadd.f32 %v643, %v644
      %v646 = vrot.slane %v645, 1
      %v647 = vadd.f32 %v645, %v646
      %v648 = vsel %vm430, %v397, 0.0
      %v649 = vrot.slane %v648, 4
      %v650 = vadd.f32 %v648, %v649
      %v651 = vrot.slane %v650, 2
      %v652 = vadd.f32 %v650, %v651
      %v653 = vrot.slane %v652, 1
      %v654 = vadd.f32 %v652, %v653
      %v655 = vmul.f32 %v437, 0.25
      %v656 = vmul.f32 %v444, 0.25
      %v657 = vmul.f32 %v451, 0.25
      %v658 = vmul.f32 %v458, 0.25
      %v659 = vmul.f32 %v465, 0.25
      %v660 = vmul.f32 %v472, 0.25
      %v661 = vmul.f32 %v479, 0.25
      %v662 = vmul.f32 %v486, 0.25
      %v663 = vmul.f32 %v493, 0.25
      %v664 = vmul.f32 %v500, 0.25
      %v665 = vmul.f32 %v507, 0.25
      %v666 = vmul.f32 %v514, 0.25
      %v667 = vmul.f32 %v521, 0.25
      %v668 = vmul.f32 %v528, 0.25
      %v669 = vmul.f32 %v535, 0.25
      %v670 = vmul.f32 %v542, 0.25
      %v671 = vmul.f32 %v549, 0.25
      %v672 = vmul.f32 %v556, 0.25
      %v673 = vmul.f32 %v563, 0.25
      %v674 = vmul.f32 %v570, 0.25
      %v675 = vmul.f32 %v577, 0.25
      %v676 = vmul.f32 %v584, 0.25
      %v677 = vmul.f32 %v591, 0.25
      %v678 = vmul.f32 %v598, 0.25
      %v679 = vmul.f32 %v605, 0.25
      %v680 = vmul.f32 %v612, 0.25
      %v681 = vmul.f32 %v619, 0.25
      %v682 = vmul.f32 %v626, 0.25
      %v683 = vmul.f32 %v633, 0.25
      %v684 = vmul.f32 %v640, 0.25
      %v685 = vmul.f32 %v647, 0.25
      %v686 = vmul.f32 %v654, 0.25
      %v687 = vld [vmem:[%s1] sm:$0xff]
      %v688 = vld [vmem:[%s1 + $0x8] sm:$0xff]
      %v689 = vld [vmem:[%s2] sm:$0x1]
      %v691 = vlaneseq
      %v692 = vshrl.u32 %v691, 7
      %v693 = vsub.s32 0, %v692
      %v694 = vrot.slane %v689, %v693
      %vm728 = vcmask 1041409
      %v729 = vsel %vm728, %v656, %v655
      %vm730 = vcmask 1042434
      %v731 = vsel %vm730, %v657, %v729
      %vm732 = vcmask 1043459
      %v733 = vsel %vm732, %v658, %v731
      %vm734 = vcmask 1044484
      %v735 = vsel %vm734, %v659, %v733
      %vm736 = vcmask 1045509
      %v737 = vsel %vm736, %v660, %v735
      %vm738 = vcmask 1046534
      %v739 = vsel %vm738, %v661, %v737
      %vm740 = vcmask 1047559
      %v741 = vsel %vm740, %v662, %v739
      %v742 = vsel %vm728, %v664, %v663
      %v743 = vsel %vm730, %v665, %v742
      %v744 = vsel %vm732, %v666, %v743
      %v745 = vsel %vm734, %v667, %v744
      %v746 = vsel %vm736, %v668, %v745
      %v747 = vsel %vm738, %v669, %v746
      %v748 = vsel %vm740, %v670, %v747
      %v749 = vsel %vm728, %v672, %v671
      %v750 = vsel %vm730, %v673, %v749
      %v751 = vsel %vm732, %v674, %v750
      %v752 = vsel %vm734, %v675, %v751
      %v753 = vsel %vm736, %v676, %v752
      %v754 = vsel %vm738, %v677, %v753
      %v755 = vsel %vm740, %v678, %v754
      %v756 = vsel %vm728, %v680, %v679
      %v757 = vsel %vm730, %v681, %v756
      %v758 = vsel %vm732, %v682, %v757
      %v759 = vsel %vm734, %v683, %v758
      %v760 = vsel %vm736, %v684, %v759
      %v761 = vsel %vm738, %v685, %v760
      %v762 = vsel %vm740, %v686, %v761
      %v763 = vsel %vm229, %v741, 0
      %v765 = vsel %vm229, %v748, 0
      %v767 = vsel %vm229, %v755, 0
      %v769 = vsel %vm229, %v762, 0
      %771 = vmatprep.subr.mxu0 0.0
      %772 = vmatpush1.msra.mxu0 %v687
      %773 = vmatprep.subr.mxu0 0.0
      %774 = vmatpush1.msra.mxu0 %v688
      %775 = vmatprep.subr.mxu0 0.0
      %776 = vmatpush1.msra.mxu0 0.0
      %777 = vmatprep.subr.mxu0 0.0
      %778 = vmatpush1.msra.mxu0 0.0
      %779 = vmatprep.subr.mxu0 0.0
      %780 = vmatpush1.msra.mxu0 0.0
      %781 = vmatprep.subr.mxu0 0.0
      %782 = vmatpush1.msra.mxu0 0.0
      %783 = vmatprep.subr.mxu0 0.0
      %784 = vmatpush1.msra.mxu0 0.0
      %785 = vmatprep.subr.mxu0 0.0
      %786 = vmatpush1.msra.mxu0 0.0
      %787 = vmatprep.subr.mxu0 0.0
      %788 = vmatpush1.msra.mxu0 0.0
      %789 = vmatprep.subr.mxu0 0.0
      %790 = vmatpush1.msra.mxu0 0.0
      %791 = vmatprep.subr.mxu0 0.0
      %792 = vmatpush1.msra.mxu0 0.0
      %793 = vmatprep.subr.mxu0 0.0
      %794 = vmatpush1.msra.mxu0 0.0
      %795 = vmatprep.subr.mxu0 0.0
      %796 = vmatpush1.msra.mxu0 0.0
      %797 = vmatprep.subr.mxu0 0.0
      %798 = vmatpush1.msra.mxu0 0.0
      %799 = vmatprep.subr.mxu0 0.0
      %800 = vmatpush1.msra.mxu0 0.0
      %801 = vmatprep.subr.mxu0 0.0
      %802 = vmatpush1.msra.mxu0 0.0
      %803 = vmatprep.subr.mxu0 0.0
      %804 = vmatpush1.msra.mxu0 0.0
      %805 = vmatprep.subr.mxu0 0.0
      %806 = vmatpush1.msra.mxu0 0.0
      %807 = vmatprep.subr.mxu0 0.0
      %808 = vmatpush1.msra.mxu0 0.0
      %809 = vmatprep.subr.mxu0 0.0
      %810 = vmatpush1.msra.mxu0 0.0
      %811 = vmatprep.subr.mxu0 0.0
      %812 = vmatpush1.msra.mxu0 0.0
      %813 = vmatprep.subr.mxu0 0.0
      %814 = vmatpush1.msra.mxu0 0.0
      %815 = vmatprep.subr.mxu0 0.0
      %816 = vmatpush1.msra.mxu0 0.0
      %817 = vmatprep.subr.mxu0 0.0
      %818 = vmatpush1.msra.mxu0 0.0
      %819 = vmatprep.subr.mxu0 0.0
      %820 = vmatpush1.msra.mxu0 0.0
      %821 = vmatprep.subr.mxu0 0.0
      %822 = vmatpush1.msra.mxu0 0.0
      %823 = vmatprep.subr.mxu0 0.0
      %824 = vmatpush1.msra.mxu0 0.0
      %825 = vmatprep.subr.mxu0 0.0
      %826 = vmatpush1.msra.mxu0 0.0
      %827 = vmatprep.subr.mxu0 0.0
      %828 = vmatpush1.msra.mxu0 0.0
      %829 = vmatprep.subr.mxu0 0.0
      %830 = vmatpush1.msra.mxu0 0.0
      %831 = vmatprep.subr.mxu0 0.0
      %832 = vmatpush1.msra.mxu0 0.0
      %833 = vmatprep.subr.mxu0 0.0
      %834 = vmatpush1.msra.mxu0 0.0
      %835 = vmatprep.mubr.f32.mxu0 0.0
      %836 = vmatmul.mubr.f32.gmra.mrb[0].mxu0 %v763
      %v837 = vpop.f32.mrb[0].mxu0
      %v838 = vadd.f32 %v694, %v837
      %v839 = vpop.f32.mrb[0].mxu0
      %840 = vmatprep.mubr.f32.mxu0 0.0
      %841 = vmatmul.mubr.f32.gmra.mrb[0].mxu0 %v765
      %v842 = vpop.f32.mrb[0].mxu0
      %v843 = vadd.f32 %v694, %v842
      %v844 = vpop.f32.mrb[0].mxu0
      %845 = vmatprep.mubr.f32.mxu0 0.0
      %846 = vmatmul.mubr.f32.gmra.mrb[0].mxu0 %v767
      %v847 = vpop.f32.mrb[0].mxu0
      %v848 = vadd.f32 %v694, %v847
      %v849 = vpop.f32.mrb[0].mxu0
      %850 = vmatprep.mubr.f32.mxu0 0.0
      %851 = vmatmul.mubr.f32.gmra.mrb[0].mxu0 %v769
      %v852 = vpop.f32.mrb[0].mxu0
      %v853 = vadd.f32 %v694, %v852
      %v854 = vpop.f32.mrb[0].mxu0
      %855 = vdwg.mxu0
      %vm856 = vcmask 261120
      %857 = vst.msk [vmem:[%s211] sm:$0xff] %vm856, %v838
      %858 = vst.msk [vmem:[%s211 + $0x8] sm:$0xff] %vm856, %v843
      %859 = vst.msk [vmem:[%s211 + $0x10] sm:$0xff] %vm856, %v848
      %860 = vst.msk [vmem:[%s211 + $0x18] sm:$0xff] %vm856, %v853
      %s861 = smul.u32 4, %s19
      %p862 = scmp.lt.s32.totalorder %s18, 1
      %s863 = scalar_select %p862, %s18, 1
      %p864 = scmp.lt.s32.totalorder %s861, 7
      %s865 = scalar_select %p864, %s861, 7
      %s866 = smul.addr %s863, 8
      %s867 = sadd.s32 %s865, %s866
      %s868 = smul.addr %s867, 8
      %s869 = scalar_lea.vmem %s3, %s868
      // Predicated region
      $region33: #{bottleneck_forward.6} parent=31 // pred_check
        %p870 = pneg %p116
      $region34: #{bottleneck_forward.6} parent=31 // pred_check_branch
        %872 = sbr.rel (%p870) target = $region36
      $region35: #{bottleneck_forward.6} parent=31 // pred_region
        %s873 = smul.u32 4, %s19
      $region36: #{bottleneck_forward.6} parent=31 // pred_fallthru
        _
    $region32: #{bottleneck_forward.6} parent=5 // pred_fallthru
      _
    %p874 = scmp.le.s32.totalorder 2, %s9
    // Predicated region
    $region37: #{bottleneck_forward.6} parent=5 // pred_check
      %p875 = pneg %p874
    $region38: #{bottleneck_forward.6} parent=5 // pred_check_branch
      %877 = sbr.rel (%p875) target = $region40
    $region39: #{bottleneck_forward.6} parent=5 // pred_region
      %s878 = ssub.s32 %s9, 2
      // Predicated region
      $region41: #{bottleneck_forward.6} parent=39 // pred_check
        %p879 = pneg %p122
      $region42: #{bottleneck_forward.6} parent=39 // pred_check_branch
        %881 = sbr.rel (%p879) target = $region44
      $region43: #{bottleneck_forward.6} parent=39 // pred_region
        %s882 = smul.u32 4, %s21
        %p883 = scmp.lt.s32.totalorder %s20, 1
        %s884 = scalar_select %p883, %s20, 1
        %p885 = scmp.lt.s32.totalorder %s882, 7
        %s886 = scalar_select %p885, %s882, 7
        %s887 = smul.addr %s884, 8
        %s888 = sadd.s32 %s886, %s887
        %s889 = smul.addr %s888, 8
        %s890 = scalar_lea.vmem %s3, %s889
      $region44: #{bottleneck_forward.6} parent=39 // pred_fallthru
        _
    $region40: #{bottleneck_forward.6} parent=5 // pred_fallthru
      _
  $region6: #{bottleneck_forward.6} parent=0 // loop_footer
    %s13 = sadd.s32 1, %s9
  $region7: #{bottleneck_forward.6} parent=0 // loop_footer_branch
    %8 = sbr.rel target = $region3
  $region8: #{bottleneck_forward.6} parent=0 // loop_exit
    _

// kernel: bottleneck_forward.7
$region0: #{bottleneck_forward.7}
  #allocation0 [shape = 'u32[]', space=smem, size = 0x4, offset = 0x4, fixed_abs, tag = 'smem constant byte address 0x4 - core index']
  #allocation1 [shape = 'u32[144,128]{1,0:T(1,128)}', space=vmem, size = 0x12000, scoped, tag = 'internal scratch']
  %s0 = inlined_call_operand.vmem [shape: f32[128,8], index: 0, kind: input, shape index: {}]
  %s1 = inlined_call_operand.vmem [shape: f32[8,32], index: 1, kind: input, shape index: {}]
  %s2 = inlined_call_operand.vmem [shape: f32[1,32], index: 2, kind: input, shape index: {}]
  %s3 = inlined_call_operand.vmem [shape: f32[128,32], index: 3, kind: input, shape index: {}]
  %s4 = inlined_call_operand.hbm [shape: f32[128,32], index: 4, kind: output, shape index: {}]
  %s5 = sld [smem:[#allocation0]]
  $region26: #{bottleneck_forward.7} parent=0
    _
  %s7 = ssub.s32 1, %s5
  %s8 = scalar_select 0, %s7, %s5
  $region1: #{bottleneck_forward.7} parent=0
    #allocation2 [shape = 'u8[65536]{0}', space=vmem, size = 0x10000, scoped, tag = 'output window, operand 0, single buffered']
    #allocation3 [shape = 's32[1]{0}', space=sflag, size = 0x4, scoped, tag = 'scoped memory for bottleneck_forward.7']
    %9 = vsyncpa [#allocation3], 0
    // Predicated region
    $region2: #{bottleneck_forward.7} parent=1 // pred_check
      _
    $region3: #{bottleneck_forward.7} parent=1 // pred_check_branch
      %11 = sbr.rel (0) target = $region5
    $region4: #{bottleneck_forward.7} parent=1 // pred_region
      _
    $region5: #{bottleneck_forward.7} parent=1 // pred_fallthru
      _
    // Predicated region
    $region6: #{bottleneck_forward.7} parent=1 // pred_check
      _
    $region7: #{bottleneck_forward.7} parent=1 // pred_check_branch
      %13 = sbr.rel (0) target = $region9
    $region8: #{bottleneck_forward.7} parent=1 // pred_region
      _
    $region9: #{bottleneck_forward.7} parent=1 // pred_fallthru
      _
    // Predicated region
    $region10: #{bottleneck_forward.7} parent=1 // pred_check
      _
    $region11: #{bottleneck_forward.7} parent=1 // pred_check_branch
      %15 = sbr.rel (0) target = $region13
    $region12: #{bottleneck_forward.7} parent=1 // pred_region
      _
    $region13: #{bottleneck_forward.7} parent=1 // pred_fallthru
      _
    // Predicated region
    $region14: #{bottleneck_forward.7} parent=1 // pred_check
      _
    $region15: #{bottleneck_forward.7} parent=1 // pred_check_branch
      %17 = sbr.rel (0) target = $region17
    $region16: #{bottleneck_forward.7} parent=1 // pred_region
      _
    $region17: #{bottleneck_forward.7} parent=1 // pred_fallthru
      _
    %v18 = vld [vmem:[%s0] sm:$0xff]
    %v19 = vld [vmem:[%s0 + $0x8] sm:$0xff]
    %v20 = vld [vmem:[%s0 + $0x10] sm:$0xff]
    %v21 = vld [vmem:[%s0 + $0x18] sm:$0xff]
    %v22 = vld [vmem:[%s0 + $0x20] sm:$0xff]
    %v23 = vld [vmem:[%s0 + $0x28] sm:$0xff]
    %v24 = vld [vmem:[%s0 + $0x30] sm:$0xff]
    %v25 = vld [vmem:[%s0 + $0x38] sm:$0xff]
    %v26 = vld [vmem:[%s0 + $0x40] sm:$0xff]
    %v27 = vld [vmem:[%s0 + $0x48] sm:$0xff]
    %v28 = vld [vmem:[%s0 + $0x50] sm:$0xff]
    %v29 = vld [vmem:[%s0 + $0x58] sm:$0xff]
    %v30 = vld [vmem:[%s0 + $0x60] sm:$0xff]
    %v31 = vld [vmem:[%s0 + $0x68] sm:$0xff]
    %v32 = vld [vmem:[%s0 + $0x70] sm:$0xff]
    %v33 = vld [vmem:[%s0 + $0x78] sm:$0xff]
    %v34 = vld [vmem:[%s1] sm:$0xff]
    %v35 = vld [vmem:[%s2] sm:$0x1]
    %v37 = vlaneseq
    %v38 = vshrl.u32 %v37, 7
    %v39 = vsub.s32 0, %v38
    %v40 = vrot.slane %v35, %v39
    %vm42 = vcmask 64512
    %v44 = vsel %vm42, %v18, 0
    %v47 = vsel %vm42, %v19, 0
    %v50 = vsel %vm42, %v20, 0
    %v53 = vsel %vm42, %v21, 0
    %v56 = vsel %vm42, %v22, 0
    %v59 = vsel %vm42, %v23, 0
    %v62 = vsel %vm42, %v24, 0
    %v65 = vsel %vm42, %v25, 0
    %v68 = vsel %vm42, %v26, 0
    %v71 = vsel %vm42, %v27, 0
    %v74 = vsel %vm42, %v28, 0
    %v77 = vsel %vm42, %v29, 0
    %v80 = vsel %vm42, %v30, 0
    %v83 = vsel %vm42, %v31, 0
    %v86 = vsel %vm42, %v32, 0
    %v89 = vsel %vm42, %v33, 0
    %91 = vmatprep.subr.mxu0 0.0
    %92 = vmatpush1.msra.mxu0 %v34
    %93 = vmatprep.subr.mxu0 0.0
    %94 = vmatpush1.msra.mxu0 0.0
    %95 = vmatprep.subr.mxu0 0.0
    %96 = vmatpush1.msra.mxu0 0.0
    %97 = vmatprep.subr.mxu0 0.0
    %98 = vmatpush1.msra.mxu0 0.0
    %99 = vmatprep.subr.mxu0 0.0
    %100 = vmatpush1.msra.mxu0 0.0
    %101 = vmatprep.subr.mxu0 0.0
    %102 = vmatpush1.msra.mxu0 0.0
    %103 = vmatprep.subr.mxu0 0.0
    %104 = vmatpush1.msra.mxu0 0.0
    %105 = vmatprep.subr.mxu0 0.0
    %106 = vmatpush1.msra.mxu0 0.0
    %107 = vmatprep.subr.mxu0 0.0
    %108 = vmatpush1.msra.mxu0 0.0
    %109 = vmatprep.subr.mxu0 0.0
    %110 = vmatpush1.msra.mxu0 0.0
    %111 = vmatprep.subr.mxu0 0.0
    %112 = vmatpush1.msra.mxu0 0.0
    %113 = vmatprep.subr.mxu0 0.0
    %114 = vmatpush1.msra.mxu0 0.0
    %115 = vmatprep.subr.mxu0 0.0
    %116 = vmatpush1.msra.mxu0 0.0
    %117 = vmatprep.subr.mxu0 0.0
    %118 = vmatpush1.msra.mxu0 0.0
    %119 = vmatprep.subr.mxu0 0.0
    %120 = vmatpush1.msra.mxu0 0.0
    %121 = vmatprep.subr.mxu0 0.0
    %122 = vmatpush1.msra.mxu0 0.0
    %123 = vmatprep.subr.mxu0 0.0
    %124 = vmatpush1.msra.mxu0 0.0
    %125 = vmatprep.subr.mxu0 0.0
    %126 = vmatpush1.msra.mxu0 0.0
    %127 = vmatprep.subr.mxu0 0.0
    %128 = vmatpush1.msra.mxu0 0.0
    %129 = vmatprep.subr.mxu0 0.0
    %130 = vmatpush1.msra.mxu0 0.0
    %131 = vmatprep.subr.mxu0 0.0
    %132 = vmatpush1.msra.mxu0 0.0
    %133 = vmatprep.subr.mxu0 0.0
    %134 = vmatpush1.msra.mxu0 0.0
    %135 = vmatprep.subr.mxu0 0.0
    %136 = vmatpush1.msra.mxu0 0.0
    %137 = vmatprep.subr.mxu0 0.0
    %138 = vmatpush1.msra.mxu0 0.0
    %139 = vmatprep.subr.mxu0 0.0
    %140 = vmatpush1.msra.mxu0 0.0
    %141 = vmatprep.subr.mxu0 0.0
    %142 = vmatpush1.msra.mxu0 0.0
    %143 = vmatprep.subr.mxu0 0.0
    %144 = vmatpush1.msra.mxu0 0.0
    %145 = vmatprep.subr.mxu0 0.0
    %146 = vmatpush1.msra.mxu0 0.0
    %147 = vmatprep.subr.mxu0 0.0
    %148 = vmatpush1.msra.mxu0 0.0
    %149 = vmatprep.subr.mxu0 0.0
    %150 = vmatpush1.msra.mxu0 0.0
    %151 = vmatprep.subr.mxu0 0.0
    %152 = vmatpush1.msra.mxu0 0.0
    %153 = vmatprep.subr.mxu0 0.0
    %154 = vmatpush1.msra.mxu0 0.0
    %155 = vmatprep.mubr.f32.mxu0 0.0
    %156 = vmatmul.mubr.f32.gmra.mrb[0].mxu0 %v44
    %v157 = vpop.f32.mrb[0].mxu0
    %v158 = vadd.f32 %v40, %v157
    %v159 = vpop.f32.mrb[0].mxu0
    %160 = vmatprep.mubr.f32.mxu0 0.0
    %161 = vmatmul.mubr.f32.gmra.mrb[0].mxu0 %v47
    %v162 = vpop.f32.mrb[0].mxu0
    %v163 = vadd.f32 %v40, %v162
    %v164 = vpop.f32.mrb[0].mxu0
    %165 = vmatprep.mubr.f32.mxu0 0.0
    %166 = vmatmul.mubr.f32.gmra.mrb[0].mxu0 %v50
    %v167 = vpop.f32.mrb[0].mxu0
    %v168 = vadd.f32 %v40, %v167
    %v169 = vpop.f32.mrb[0].mxu0
    %170 = vmatprep.mubr.f32.mxu0 0.0
    %171 = vmatmul.mubr.f32.gmra.mrb[0].mxu0 %v53
    %v172 = vpop.f32.mrb[0].mxu0
    %v173 = vadd.f32 %v40, %v172
    %v174 = vpop.f32.mrb[0].mxu0
    %175 = vmatprep.mubr.f32.mxu0 0.0
    %176 = vmatmul.mubr.f32.gmra.mrb[0].mxu0 %v56
    %v177 = vpop.f32.mrb[0].mxu0
    %v178 = vadd.f32 %v40, %v177
    %v179 = vpop.f32.mrb[0].mxu0
    %180 = vmatprep.mubr.f32.mxu0 0.0
    %181 = vmatmul.mubr.f32.gmra.mrb[0].mxu0 %v59
    %v182 = vpop.f32.mrb[0].mxu0
    %v183 = vadd.f32 %v40, %v182
    %v184 = vpop.f32.mrb[0].mxu0
    %185 = vmatprep.mubr.f32.mxu0 0.0
    %186 = vmatmul.mubr.f32.gmra.mrb[0].mxu0 %v62
    %v187 = vpop.f32.mrb[0].mxu0
    %v188 = vadd.f32 %v40, %v187
    %v189 = vpop.f32.mrb[0].mxu0
    %190 = vmatprep.mubr.f32.mxu0 0.0
    %191 = vmatmul.mubr.f32.gmra.mrb[0].mxu0 %v65
    %v192 = vpop.f32.mrb[0].mxu0
    %v193 = vadd.f32 %v40, %v192
    %v194 = vpop.f32.mrb[0].mxu0
    %195 = vmatprep.mubr.f32.mxu0 0.0
    %196 = vmatmul.mubr.f32.gmra.mrb[0].mxu0 %v68
    %v197 = vpop.f32.mrb[0].mxu0
    %v198 = vadd.f32 %v40, %v197
    %v199 = vpop.f32.mrb[0].mxu0
    %200 = vmatprep.mubr.f32.mxu0 0.0
    %201 = vmatmul.mubr.f32.gmra.mrb[0].mxu0 %v71
    %v202 = vpop.f32.mrb[0].mxu0
    %v203 = vadd.f32 %v40, %v202
    %v204 = vpop.f32.mrb[0].mxu0
    %205 = vmatprep.mubr.f32.mxu0 0.0
    %206 = vmatmul.mubr.f32.gmra.mrb[0].mxu0 %v74
    %v207 = vpop.f32.mrb[0].mxu0
    %v208 = vadd.f32 %v40, %v207
    %v209 = vpop.f32.mrb[0].mxu0
    %210 = vmatprep.mubr.f32.mxu0 0.0
    %211 = vmatmul.mubr.f32.gmra.mrb[0].mxu0 %v77
    %v212 = vpop.f32.mrb[0].mxu0
    %v213 = vadd.f32 %v40, %v212
    %v214 = vpop.f32.mrb[0].mxu0
    %215 = vmatprep.mubr.f32.mxu0 0.0
    %216 = vmatmul.mubr.f32.gmra.mrb[0].mxu0 %v80
    %v217 = vpop.f32.mrb[0].mxu0
    %v218 = vadd.f32 %v40, %v217
    %v219 = vpop.f32.mrb[0].mxu0
    %220 = vmatprep.mubr.f32.mxu0 0.0
    %221 = vmatmul.mubr.f32.gmra.mrb[0].mxu0 %v83
    %v222 = vpop.f32.mrb[0].mxu0
    %v223 = vadd.f32 %v40, %v222
    %v224 = vpop.f32.mrb[0].mxu0
    %225 = vmatprep.mubr.f32.mxu0 0.0
    %226 = vmatmul.mubr.f32.gmra.mrb[0].mxu0 %v86
    %v227 = vpop.f32.mrb[0].mxu0
    %v228 = vadd.f32 %v40, %v227
    %v229 = vpop.f32.mrb[0].mxu0
    %230 = vmatprep.mubr.f32.mxu0 0.0
    %231 = vmatmul.mubr.f32.gmra.mrb[0].mxu0 %v89
    %v232 = vpop.f32.mrb[0].mxu0
    %v233 = vadd.f32 %v40, %v232
    %v234 = vpop.f32.mrb[0].mxu0
    %235 = vdwg.mxu0
    %v236 = vld [vmem:[%s3] sm:$0xff]
    %v237 = vld [vmem:[%s3 + $0x8] sm:$0xff]
    %v238 = vld [vmem:[%s3 + $0x10] sm:$0xff]
    %v239 = vld [vmem:[%s3 + $0x18] sm:$0xff]
    %v240 = vld [vmem:[%s3 + $0x20] sm:$0xff]
    %v241 = vld [vmem:[%s3 + $0x28] sm:$0xff]
    %v242 = vld [vmem:[%s3 + $0x30] sm:$0xff]
    %v243 = vld [vmem:[%s3 + $0x38] sm:$0xff]
    %v244 = vld [vmem:[%s3 + $0x40] sm:$0xff]
    %v245 = vld [vmem:[%s3 + $0x48] sm:$0xff]
    %v246 = vld [vmem:[%s3 + $0x50] sm:$0xff]
    %v247 = vld [vmem:[%s3 + $0x58] sm:$0xff]
    %v248 = vld [vmem:[%s3 + $0x60] sm:$0xff]
    %v249 = vld [vmem:[%s3 + $0x68] sm:$0xff]
    %v250 = vld [vmem:[%s3 + $0x70] sm:$0xff]
    %v251 = vld [vmem:[%s3 + $0x78] sm:$0xff]
    %v252 = vadd.f32 %v158, %v236
    %v253 = vadd.f32 %v163, %v237
    %v254 = vadd.f32 %v168, %v238
    %v255 = vadd.f32 %v173, %v239
    %v256 = vadd.f32 %v178, %v240
    %v257 = vadd.f32 %v183, %v241
    %v258 = vadd.f32 %v188, %v242
    %v259 = vadd.f32 %v193, %v243
    %v260 = vadd.f32 %v198, %v244
    %v261 = vadd.f32 %v203, %v245
    %v262 = vadd.f32 %v208, %v246
    %v263 = vadd.f32 %v213, %v247
    %v264 = vadd.f32 %v218, %v248
    %v265 = vadd.f32 %v223, %v249
    %v266 = vadd.f32 %v228, %v250
    %v267 = vadd.f32 %v233, %v251
    %v268 = vmax.f32 %v252, 0.0
    %v269 = vmax.f32 %v253, 0.0
    %v270 = vmax.f32 %v254, 0.0
    %v271 = vmax.f32 %v255, 0.0
    %v272 = vmax.f32 %v256, 0.0
    %v273 = vmax.f32 %v257, 0.0
    %v274 = vmax.f32 %v258, 0.0
    %v275 = vmax.f32 %v259, 0.0
    %v276 = vmax.f32 %v260, 0.0
    %v277 = vmax.f32 %v261, 0.0
    %v278 = vmax.f32 %v262, 0.0
    %v279 = vmax.f32 %v263, 0.0
    %v280 = vmax.f32 %v264, 0.0
    %v281 = vmax.f32 %v265, 0.0
    %v282 = vmax.f32 %v266, 0.0
    %v283 = vmax.f32 %v267, 0.0
    %vm284 = vcmask 261120
    %285 = vst.msk [vmem:[#allocation2] sm:$0xff] %vm284, %v268
    %286 = vst.msk [vmem:[#allocation2 + $0x8] sm:$0xff] %vm284, %v269
    %287 = vst.msk [vmem:[#allocation2 + $0x10] sm:$0xff] %vm284, %v270
    %288 = vst.msk [vmem:[#allocation2 + $0x18] sm:$0xff] %vm284, %v271
    %289 = vst.msk [vmem:[#allocation2 + $0x20] sm:$0xff] %vm284, %v272
    %290 = vst.msk [vmem:[#allocation2 + $0x28] sm:$0xff] %vm284, %v273
    %291 = vst.msk [vmem:[#allocation2 + $0x30] sm:$0xff] %vm284, %v274
    %292 = vst.msk [vmem:[#allocation2 + $0x38] sm:$0xff] %vm284, %v275
    %293 = vst.msk [vmem:[#allocation2 + $0x40] sm:$0xff] %vm284, %v276
    %294 = vst.msk [vmem:[#allocation2 + $0x48] sm:$0xff] %vm284, %v277
    %295 = vst.msk [vmem:[#allocation2 + $0x50] sm:$0xff] %vm284, %v278
    %296 = vst.msk [vmem:[#allocation2 + $0x58] sm:$0xff] %vm284, %v279
    %297 = vst.msk [vmem:[#allocation2 + $0x60] sm:$0xff] %vm284, %v280
    %298 = vst.msk [vmem:[#allocation2 + $0x68] sm:$0xff] %vm284, %v281
    %299 = vst.msk [vmem:[#allocation2 + $0x70] sm:$0xff] %vm284, %v282
    %300 = vst.msk [vmem:[#allocation2 + $0x78] sm:$0xff] %vm284, %v283
    // Predicated region
    $region18: #{bottleneck_forward.7} parent=1 // pred_check
      _
    $region19: #{bottleneck_forward.7} parent=1 // pred_check_branch
      %302 = sbr.rel (0) target = $region21
    $region20: #{bottleneck_forward.7} parent=1 // pred_region
      %s304 = ssub.s32 2048, 2048
      %305 = vsyncadd [#allocation3], %s304
      %s306 = sshll.u32 [#allocation2], 4
      %s307 = int_to_ptr.vmem [resolvable:$true] %s306
      %312 = dma.vmem_to_hbm [thread:$0]  %s307, 2048, %s4, [#allocation3], 128, 128, 8
    $region21: #{bottleneck_forward.7} parent=1 // pred_fallthru
      _
    // Predicated region
    $region22: #{bottleneck_forward.7} parent=1 // pred_check
      _
    $region23: #{bottleneck_forward.7} parent=1 // pred_check_branch
      %314 = sbr.rel (0) target = $region25
    $region24: #{bottleneck_forward.7} parent=1 // pred_region
      %315 = dma.done [#allocation3], 2048
    $region25: #{bottleneck_forward.7} parent=1 // pred_fallthru
      _
    %316 = vsyncpa [#allocation3], 1

// kernel: bottleneck_forward.5
$region0: #{bottleneck_forward.5}
  #allocation0 [shape = 'u32[]', space=smem, size = 0x4, offset = 0x4, fixed_abs, tag = 'smem constant byte address 0x4 - core index']
  #allocation1 [shape = 'u32[144,128]{1,0:T(1,128)}', space=vmem, size = 0x12000, scoped, tag = 'internal scratch']
  %s0 = inlined_call_operand.vmem [shape: f32[2,16,16,8], index: 0, kind: input, shape index: {}, may-alias: {0,1,2}]
  %s1 = inlined_call_operand.vmem [shape: f32[2,16,16,8], index: 1, kind: input, shape index: {}, may-alias: {0,1,2}]
  %s2 = inlined_call_operand.vmem [shape: f32[2,16,16,8], index: 2, kind: input, shape index: {}, may-alias: {0,1,2}]
  %s3 = inlined_call_operand.vmem [shape: f32[72,8], index: 3, kind: input, shape index: {}]
  %s4 = inlined_call_operand.vmem [shape: f32[1,8], index: 4, kind: input, shape index: {}]
  %s5 = inlined_call_operand.vmem [shape: f32[2,8,8,8], index: 5, kind: output, shape index: {}]
  %s6 = sld [smem:[#allocation0]]
  $region53: #{bottleneck_forward.5} parent=0
    _
  %s8 = ssub.s32 1, %s6
  %s9 = scalar_select 0, %s8, %s6
  loop: start=0, step=1, limit=6
  $region2: #{bottleneck_forward.5} parent=0 // loop_pre_header
    _
  $region3: #{bottleneck_forward.5} parent=0 // loop_header
    %s11 = sphi 0, %s15
    %p12 = scmp.ge.s32.totalorder %s11, 6
    %s18 = sphi 0, %s30
    %s19 = sphi 0, %s26
    %s20 = sphi 0, %s18
    %s21 = sphi 0, %s19
    %s22 = sphi 0, %s20
    %s23 = sphi 0, %s21
    %s35 = sphi 0, %s37
    %s38 = sphi 0, %s35
    %s39 = sphi 0, %s38
    %s55 = sphi 0, %s39
    %s71 = sphi 0, %s73
    %s74 = sphi 0, %s71
    %s75 = sphi 0, %s74
    %s91 = sphi 0, %s75
    %s107 = sphi 0, %s109
    %s110 = sphi 0, %s107
    %s111 = sphi 0, %s110
    %s127 = sphi 0, %s111
    %s131 = sphi 0, %s131
    %s133 = sphi 0, %s131
    %s134 = sphi 0, %s133
    %s148 = sphi 0, %s134
    %s152 = sphi 0, %s152
    %s154 = sphi 0, %s152
    %s155 = sphi 0, %s154
    %s169 = sphi 0, %s155
    %s177 = sphi 0, %s179
    %s180 = sphi 0, %s177
    %s181 = sphi 0, %s180
    %s197 = sphi 0, %s181
  $region4: #{bottleneck_forward.5} parent=0 // loop_header_branch
    %14 = sbr.rel (%p12) target = $region8
  $region5: #{bottleneck_forward.5} parent=0 // loop_body
    %s16 = ssub.s32 %s11, 1
    %s17 = ssub.s32 %s11, 2
    %s24 = sadd.s32 1, %s19
    %p25 = scmp.ge.s32.totalorder %s24, 2
    %s26 = scalar_select %p25, 0, %s24
    %s27 = sadd.s32 1, %s18
    %s28 = scalar_select %p25, %s27, %s18
    %p29 = scmp.ge.s32.totalorder %s28, 2
    %s30 = scalar_select %p29, 0, %s28
    %s31 = ssub.s32 %s18, %s30
    %s32 = ssub.s32 %s19, %s26
    %s33 = sor.u32 %s31, %s32
    %p34 = scmp.eq.s32.totalorder %s33, 0
    %s36 = sadd.s32 %s35, 1
    %s37 = scalar_select %p34, %s35, %s36
    %p40 = pneg %p34
    %p41 = scmp.eq.s32.totalorder %s11, 3
    %p42 = por %p40, %p41
    %p43 = scmp.ne.s32.totalorder %s35, %s38
    %p44 = scmp.eq.s32.totalorder %s11, 0
    %p45 = por %p43, %p44
    %p46 = scmp.ne.s32.totalorder %s35, %s38
    %p47 = scmp.eq.s32.totalorder %s16, 3
    %p48 = por %p46, %p47
    %p49 = scmp.ne.s32.totalorder %s38, %s39
    %p50 = scmp.eq.s32.totalorder %s16, 0
    %p51 = por %p49, %p50
    %p52 = scmp.ne.s32.totalorder %s38, %s39
    %p53 = scmp.eq.s32.totalorder %s17, 3
    %p54 = por %p52, %p53
    %p56 = scmp.ne.s32.totalorder %s39, %s55
    %p57 = scmp.eq.s32.totalorder %s17, 0
    %p58 = por %p56, %p57
    %s59 = smul.u32 %s19, 8
    %s60 = ssub.s32 %s59, 1
    %p61 = scmp.gt.s32.totalorder %s60, 0
    %s62 = scalar_select %p61, %s60, 0
    %s63 = smul.u32 %s26, 8
    %s64 = ssub.s32 %s63, 1
    %p65 = scmp.gt.s32.totalorder %s64, 0
    %s66 = scalar_select %p65, %s64, 0
    %s67 = ssub.s32 %s18, %s30
    %s68 = ssub.s32 %s62, %s66
    %s69 = sor.u32 %s67, %s68
    %p70 = scmp.eq.s32.totalorder %s69, 0
    %s72 = sadd.s32 %s71, 1
    %s73 = scalar_select %p70, %s71, %s72
    %p76 = pneg %p70
    %p77 = scmp.eq.s32.totalorder %s11, 3
    %p78 = por %p76, %p77
    %p79 = scmp.ne.s32.totalorder %s71, %s74
    %p80 = scmp.eq.s32.totalorder %s11, 0
    %p81 = por %p79, %p80
    %p82 = scmp.ne.s32.totalorder %s71, %s74
    %p83 = scmp.eq.s32.totalorder %s16, 3
    %p84 = por %p82, %p83
    %p85 = scmp.ne.s32.totalorder %s74, %s75
    %p86 = scmp.eq.s32.totalorder %s16, 0
    %p87 = por %p85, %p86
    %p88 = scmp.ne.s32.totalorder %s74, %s75
    %p89 = scmp.eq.s32.totalorder %s17, 3
    %p90 = por %p88, %p89
    %p92 = scmp.ne.s32.totalorder %s75, %s91
    %p93 = scmp.eq.s32.totalorder %s17, 0
    %p94 = por %p92, %p93
    %s95 = smul.u32 %s19, 8
    %s96 = sadd.s32 %s95, 8
    %p97 = scmp.lt.s32.totalorder %s96, 15
    %s98 = scalar_select %p97, %s96, 15
    %s99 = smul.u32 %s26, 8
    %s100 = sadd.s32 %s99, 8
    %p101 = scmp.lt.s32.totalorder %s100, 15
    %s102 = scalar_select %p101, %s100, 15
    %s103 = ssub.s32 %s18, %s30
    %s104 = ssub.s32 %s98, %s102
    %s105 = sor.u32 %s103, %s104
    %p106 = scmp.eq.s32.totalorder %s105, 0
    %s108 = sadd.s32 %s107, 1
    %s109 = scalar_select %p106, %s107, %s108
    %p112 = pneg %p106
    %p113 = scmp.eq.s32.totalorder %s11, 3
    %p114 = por %p112, %p113
    %p115 = scmp.ne.s32.totalorder %s107, %s110
    %p116 = scmp.eq.s32.totalorder %s11, 0
    %p117 = por %p115, %p116
    %p118 = scmp.ne.s32.totalorder %s107, %s110
    %p119 = scmp.eq.s32.totalorder %s16, 3
    %p120 = por %p118, %p119
    %p121 = scmp.ne.s32.totalorder %s110, %s111
    %p122 = scmp.eq.s32.totalorder %s16, 0
    %p123 = por %p121, %p122
    %p124 = scmp.ne.s32.totalorder %s110, %s111
    %p125 = scmp.eq.s32.totalorder %s17, 3
    %p126 = por %p124, %p125
    %p128 = scmp.ne.s32.totalorder %s111, %s127
    %p129 = scmp.eq.s32.totalorder %s17, 0
    %p130 = por %p128, %p129
    %s132 = sadd.s32 %s131, 1
    %p135 = scmp.eq.s32.totalorder %s11, 3
    %p136 = scmp.ne.s32.totalorder %s131, %s133
    %p137 = scmp.eq.s32.totalorder %s11, 0
    %p138 = por %p136, %p137
    %p139 = scmp.ne.s32.totalorder %s131, %s133
    %p140 = scmp.eq.s32.totalorder %s16, 3
    %p141 = por %p139, %p140
    %p142 = scmp.ne.s32.totalorder %s133, %s134
    %p143 = scmp.eq.s32.totalorder %s16, 0
    %p144 = por %p142, %p143
    %p145 = scmp.ne.s32.totalorder %s133, %s134
    %p146 = scmp.eq.s32.totalorder %s17, 3
    %p147 = por %p145, %p146
    %p149 = scmp.ne.s32.totalorder %s134, %s148
    %p150 = scmp.eq.s32.totalorder %s17, 0
    %p151 = por %p149, %p150
    %s153 = sadd.s32 %s152, 1
    %p156 = scmp.eq.s32.totalorder %s11, 3
    %p157 = scmp.ne.s32.totalorder %s152, %s154
    %p158 = scmp.eq.s32.totalorder %s11, 0
    %p159 = por %p157, %p158
    %p160 = scmp.ne.s32.totalorder %s152, %s154
    %p161 = scmp.eq.s32.totalorder %s16, 3
    %p162 = por %p160, %p161
    %p163 = scmp.ne.s32.totalorder %s154, %s155
    %p164 = scmp.eq.s32.totalorder %s16, 0
    %p165 = por %p163, %p164
    %p166 = scmp.ne.s32.totalorder %s154, %s155
    %p167 = scmp.eq.s32.totalorder %s17, 3
    %p168 = por %p166, %p167
    %p170 = scmp.ne.s32.totalorder %s155, %s169
    %p171 = scmp.eq.s32.totalorder %s17, 0
    %p172 = por %p170, %p171
    %s173 = ssub.s32 %s18, %s30
    %s174 = ssub.s32 %s19, %s26
    %s175 = sor.u32 %s173, %s174
    %p176 = scmp.eq.s32.totalorder %s175, 0
    %s178 = sadd.s32 %s177, 1
    %s179 = scalar_select %p176, %s177, %s178
    %p182 = pneg %p176
    %p183 = scmp.eq.s32.totalorder %s11, 3
    %p184 = por %p182, %p183
    %p185 = scmp.ne.s32.totalorder %s177, %s180
    %p186 = scmp.eq.s32.totalorder %s11, 0
    %p187 = por %p185, %p186
    %p188 = scmp.ne.s32.totalorder %s177, %s180
    %p189 = scmp.eq.s32.totalorder %s16, 3
    %p190 = por %p188, %p189
    %p191 = scmp.ne.s32.totalorder %s180, %s181
    %p192 = scmp.eq.s32.totalorder %s16, 0
    %p193 = por %p191, %p192
    %p194 = scmp.ne.s32.totalorder %s180, %s181
    %p195 = scmp.eq.s32.totalorder %s17, 3
    %p196 = por %p194, %p195
    %p198 = scmp.ne.s32.totalorder %s181, %s197
    %p199 = scmp.eq.s32.totalorder %s17, 0
    %p200 = por %p198, %p199
    %p201 = scmp.le.s32.totalorder 1, %s11
    %p202 = scmp.lt.s32.totalorder %s11, 5
    %p203 = pnand %p201, %p202
    %p204 = pneg %p203
    // Predicated region
    $region9: #{bottleneck_forward.5} parent=5 // pred_check
      _
    $region10: #{bottleneck_forward.5} parent=5 // pred_check_branch
      %206 = sbr.rel (%p203) target = $region12
    $region11: #{bottleneck_forward.5} parent=5 // pred_region
      %s207 = ssub.s32 %s11, 1
      // Predicated region
      $region13: #{bottleneck_forward.5} parent=11 // pred_check
        %p208 = pneg %p144
      $region14: #{bottleneck_forward.5} parent=11 // pred_check_branch
        %210 = sbr.rel (%p208) target = $region16
      $region15: #{bottleneck_forward.5} parent=11 // pred_region
        _
      $region16: #{bottleneck_forward.5} parent=11 // pred_fallthru
        _
      // Predicated region
      $region17: #{bottleneck_forward.5} parent=11 // pred_check
        %p211 = pneg %p165
      $region18: #{bottleneck_forward.5} parent=11 // pred_check_branch
        %213 = sbr.rel (%p211) target = $region20
      $region19: #{bottleneck_forward.5} parent=11 // pred_region
        _
      $region20: #{bottleneck_forward.5} parent=11 // pred_fallthru
        _
    $region12: #{bottleneck_forward.5} parent=5 // pred_fallthru
      _
    %p214 = scmp.lt.s32.totalorder %s11, 4
    // Predicated region
    $region21: #{bottleneck_forward.5} parent=5 // pred_check
      %p215 = pneg %p214
    $region22: #{bottleneck_forward.5} parent=5 // pred_check_branch
      %217 = sbr.rel (%p215) target = $region24
    $region23: #{bottleneck_forward.5} parent=5 // pred_region
      // Predicated region
      $region25: #{bottleneck_forward.5} parent=23 // pred_check
        %p218 = pneg %p45
      $region26: #{bottleneck_forward.5} parent=23 // pred_check_branch
        %220 = sbr.rel (%p218) target = $region28
      $region27: #{bottleneck_forward.5} parent=23 // pred_region
        %s221 = smul.u32 8, %s19
        %p222 = scmp.lt.s32.totalorder %s18, 1
        %s223 = scalar_select %p222, %s18, 1
        %p224 = scmp.lt.s32.totalorder %s221, 15
        %s225 = scalar_select %p224, %s221, 15
        %s226 = smul.addr %s225, 2
        %s227 = smul.addr %s223, 32
        %s228 = sadd.s32 %s226, %s227
        %s229 = smul.addr %s228, 8
        %s230 = scalar_lea.vmem %s0, %s229
        %s231 = smul.u32 8, %s19
      $region28: #{bottleneck_forward.5} parent=23 // pred_fallthru
        _
      // Predicated region
      $region29: #{bottleneck_forward.5} parent=23 // pred_check
        %p232 = pneg %p81
      $region30: #{bottleneck_forward.5} parent=23 // pred_check_branch
        %234 = sbr.rel (%p232) target = $region32
      $region31: #{bottleneck_forward.5} parent=23 // pred_region
        %s235 = smul.u32 %s19, 8
        %s236 = ssub.s32 %s235, 1
        %p237 = scmp.gt.s32.totalorder %s236, 0
        %s238 = scalar_select %p237, %s236, 0
        %p239 = scmp.lt.s32.totalorder %s18, 1
        %s240 = scalar_select %p239, %s18, 1
        %p241 = scmp.lt.s32.totalorder %s238, 15
        %s242 = scalar_select %p241, %s238, 15
        %s243 = smul.addr %s242, 2
        %s244 = smul.addr %s240, 32
        %s245 = sadd.s32 %s243, %s244
        %s246 = smul.addr %s245, 8
        %s247 = scalar_lea.vmem %s1, %s246
        %s248 = smul.u32 %s19, 8
        %s249 = ssub.s32 %s248, 1
        %p250 = scmp.gt.s32.totalorder %s249, 0
        %s251 = scalar_select %p250, %s249, 0
      $region32: #{bottleneck_forward.5} parent=23 // pred_fallthru
        _
      // Predicated region
      $region33: #{bottleneck_forward.5} parent=23 // pred_check
        %p252 = pneg %p117
      $region34: #{bottleneck_forward.5} parent=23 // pred_check_branch
        %254 = sbr.rel (%p252) target = $region36
      $region35: #{bottleneck_forward.5} parent=23 // pred_region
        %s255 = smul.u32 %s19, 8
        %s256 = sadd.s32 %s255, 8
        %p257 = scmp.lt.s32.totalorder %s256, 15
        %s258 = scalar_select %p257, %s256, 15
        %p259 = scmp.lt.s32.totalorder %s18, 1
        %s260 = scalar_select %p259, %s18, 1
        %p261 = scmp.lt.s32.totalorder %s258, 15
        %s262 = scalar_select %p261, %s258, 15
        %s263 = smul.addr %s262, 2
        %s264 = smul.addr %s260, 32
        %s265 = sadd.s32 %s263, %s264
        %s266 = smul.addr %s265, 8
        %s267 = scalar_lea.vmem %s2, %s266
        %s268 = smul.u32 %s19, 8
        %s269 = sadd.s32 %s268, 8
        %p270 = scmp.lt.s32.totalorder %s269, 15
        %s271 = scalar_select %p270, %s269, 15
      $region36: #{bottleneck_forward.5} parent=23 // pred_fallthru
        _
    $region24: #{bottleneck_forward.5} parent=5 // pred_fallthru
      _
    %p272 = scmp.le.s32.totalorder 1, %s11
    %p273 = scmp.lt.s32.totalorder %s11, 5
    %p274 = pnand %p272, %p273
    %p275 = pneg %p274
    // Predicated region
    $region37: #{bottleneck_forward.5} parent=5 // pred_check
      _
    $region38: #{bottleneck_forward.5} parent=5 // pred_check_branch
      %277 = sbr.rel (%p274) target = $region40
    $region39: #{bottleneck_forward.5} parent=5 // pred_region
      %s278 = ssub.s32 %s11, 1
      %s279 = smul.u32 8, %s21
      %p280 = scmp.lt.s32.totalorder %s20, 1
      %s281 = scalar_select %p280, %s20, 1
      %p282 = scmp.lt.s32.totalorder %s279, 15
      %s283 = scalar_select %p282, %s279, 15
      %s284 = smul.addr %s283, 2
      %s285 = smul.addr %s281, 32
      %s286 = sadd.s32 %s284, %s285
      %s287 = smul.addr %s286, 8
      %s288 = scalar_lea.vmem %s0, %s287
      %p289 = pneg %p51
      %p290 = pneg %p48
      %s291 = smul.u32 %s21, 8
      %s292 = ssub.s32 %s291, 1
      %p293 = scmp.gt.s32.totalorder %s292, 0
      %s294 = scalar_select %p293, %s292, 0
      %p295 = scmp.lt.s32.totalorder %s20, 1
      %s296 = scalar_select %p295, %s20, 1
      %p297 = scmp.lt.s32.totalorder %s294, 15
      %s298 = scalar_select %p297, %s294, 15
      %s299 = smul.addr %s298, 2
      %s300 = smul.addr %s296, 32
      %s301 = sadd.s32 %s299, %s300
      %s302 = smul.addr %s301, 8
      %s303 = scalar_lea.vmem %s1, %s302
      %p304 = pneg %p87
      %p305 = pneg %p84
      %s306 = smul.u32 %s21, 8
      %s307 = sadd.s32 %s306, 8
      %p308 = scmp.lt.s32.totalorder %s307, 15
      %s309 = scalar_select %p308, %s307, 15
      %p310 = scmp.lt.s32.totalorder %s20, 1
      %s311 = scalar_select %p310, %s20, 1
      %p312 = scmp.lt.s32.totalorder %s309, 15
      %s313 = scalar_select %p312, %s309, 15
      %s314 = smul.addr %s313, 2
      %s315 = smul.addr %s311, 32
      %s316 = sadd.s32 %s314, %s315
      %s317 = smul.addr %s316, 8
      %s318 = scalar_lea.vmem %s2, %s317
      %p319 = pneg %p123
      %p320 = pneg %p120
      %p321 = pneg %p144
      %p322 = pneg %p141
      %p323 = pneg %p165
      %p324 = pneg %p162
      %p325 = pneg %p193
      %p326 = pneg %p190
      %s327 = smul.u32 4, %s21
      %p328 = scmp.lt.s32.totalorder %s20, 1
      %s329 = scalar_select %p328, %s20, 1
      %p330 = scmp.lt.s32.totalorder %s327, 7
      %s331 = scalar_select %p330, %s327, 7
      %s332 = smul.addr %s329, 8
      %s333 = sadd.s32 %s331, %s332
      %s334 = smul.addr %s333, 8
      %s335 = scalar_lea.vmem %s5, %s334
      %s336 = smul.u32 8, %s21
      %p337 = scmp.lt.s32.totalorder %s20, 1
      %s338 = scalar_select %p337, %s20, 1
      %p339 = scmp.lt.s32.totalorder %s336, 15
      %s340 = scalar_select %p339, %s336, 15
      %s341 = smul.addr %s340, 2
      %s342 = smul.addr %s338, 32
      %s343 = sadd.s32 %s341, %s342
      %s344 = smul.addr %s343, 8
      %s345 = scalar_lea.vmem %s0, %s344
      %s346 = smul.u32 8, %s21
      %s347 = smul.u32 %s21, 8
      %s348 = ssub.s32 %s347, 1
      %p349 = scmp.gt.s32.totalorder %s348, 0
      %s350 = scalar_select %p349, %s348, 0
      %p351 = scmp.lt.s32.totalorder %s20, 1
      %s352 = scalar_select %p351, %s20, 1
      %p353 = scmp.lt.s32.totalorder %s350, 15
      %s354 = scalar_select %p353, %s350, 15
      %s355 = smul.addr %s354, 2
      %s356 = smul.addr %s352, 32
      %s357 = sadd.s32 %s355, %s356
      %s358 = smul.addr %s357, 8
      %s359 = scalar_lea.vmem %s1, %s358
      %s360 = smul.u32 %s21, 8
      %s361 = ssub.s32 %s360, 1
      %p362 = scmp.gt.s32.totalorder %s361, 0
      %s363 = scalar_select %p362, %s361, 0
      %s364 = smul.u32 %s21, 8
      %s365 = sadd.s32 %s364, 8
      %p366 = scmp.lt.s32.totalorder %s365, 15
      %s367 = scalar_select %p366, %s365, 15
      %p368 = scmp.lt.s32.totalorder %s20, 1
      %s369 = scalar_select %p368, %s20, 1
      %p370 = scmp.lt.s32.totalorder %s367, 15
      %s371 = scalar_select %p370, %s367, 15
      %s372 = smul.addr %s371, 2
      %s373 = smul.addr %s369, 32
      %s374 = sadd.s32 %s372, %s373
      %s375 = smul.addr %s374, 8
      %s376 = scalar_lea.vmem %s2, %s375
      %s377 = smul.u32 %s21, 8
      %s378 = sadd.s32 %s377, 8
      %p379 = scmp.lt.s32.totalorder %s378, 15
      %s380 = scalar_select %p379, %s378, 15
      %s381 = smul.u32 4, %s21
      %p382 = scmp.lt.s32.totalorder %s20, 1
      %s383 = scalar_select %p382, %s20, 1
      %p384 = scmp.lt.s32.totalorder %s381, 7
      %s385 = scalar_select %p384, %s381, 7
      %s386 = smul.addr %s383, 8
      %s387 = sadd.s32 %s385, %s386
      %s388 = smul.addr %s387, 8
      %s389 = scalar_lea.vmem %s5, %s388
      %s390 = smul.u32 4, %s21
      %v391 = vld [vmem:[%s345] sm:$0xff]
      %v392 = vld [vmem:[%s345 + $0x8] sm:$0xff]
      %v393 = vld [vmem:[%s345 + $0x10] sm:$0xff]
      %v394 = vld [vmem:[%s345 + $0x18] sm:$0xff]
      %v395 = vld [vmem:[%s345 + $0x20] sm:$0xff]
      %v396 = vld [vmem:[%s345 + $0x28] sm:$0xff]
      %v397 = vld [vmem:[%s345 + $0x30] sm:$0xff]
      %v398 = vld [vmem:[%s345 + $0x38] sm:$0xff]
      %v399 = vld [vmem:[%s345 + $0x40] sm:$0xff]
      %v400 = vld [vmem:[%s345 + $0x48] sm:$0xff]
      %v401 = vld [vmem:[%s345 + $0x50] sm:$0xff]
      %v402 = vld [vmem:[%s345 + $0x58] sm:$0xff]
      %v403 = vld [vmem:[%s345 + $0x60] sm:$0xff]
      %v404 = vld [vmem:[%s345 + $0x68] sm:$0xff]
      %v405 = vld [vmem:[%s345 + $0x70] sm:$0xff]
      %v406 = vld [vmem:[%s345 + $0x78] sm:$0xff]
      %v407 = vld [vmem:[%s359] sm:$0xff]
      %v408 = vld [vmem:[%s359 + $0x8] sm:$0xff]
      %v409 = vld [vmem:[%s376] sm:$0xff]
      %v410 = vld [vmem:[%s376 + $0x8] sm:$0xff]
      %p411 = scmp.gt.s32.totalorder %s21, 0
      %s412 = scalar_select %p411, 1, 0
      %v413 = vstv %s412
      %vm414 = vcmp.eq.s32.totalorder %v413, 1
      %v415 = vsel %vm414, %v407, 0.0
      %v416 = vsel %vm414, %v408, 0.0
      %p417 = scmp.lt.s32.totalorder %s21, 1
      %s418 = scalar_select %p417, 1, 0
      %v419 = vstv %s418
      %vm420 = vcmp.eq.s32.totalorder %v419, 1
      %v421 = vsel %vm420, %v409, 0.0
      %v422 = vsel %vm420, %v410, 0.0
      %vm443 = vcmask 1040384
      %v444 = vrot.slane %v415, 7
      %v445 = vrot.slane %v416, 7
      %v446 = vsel %vm443, %v444, %v445
      %v447 = vrot.slane %v391, 7
      %v448 = vrot.slane %v392, 7
      %v449 = vsel %vm443, %v447, %v448
      %v450 = vrot.slane %v393, 7
      %v451 = vrot.slane %v394, 7
      %v452 = vsel %vm443, %v450, %v451
      %v453 = vrot.slane %v395, 7
      %v454 = vrot.slane %v396, 7
      %v455 = vsel %vm443, %v453, %v454
      %v456 = vrot.slane %v397, 7
      %v457 = vrot.slane %v398, 7
      %v458 = vsel %vm443, %v456, %v457
      %v459 = vrot.slane %v399, 7
      %v460 = vrot.slane %v400, 7
      %v461 = vsel %vm443, %v459, %v460
      %v462 = vrot.slane %v401, 7
      %v463 = vrot.slane %v402, 7
      %v464 = vsel %vm443, %v462, %v463
      %v465 = vrot.slane %v403, 7
      %v466 = vrot.slane %v404, 7
      %v467 = vsel %vm443, %v465, %v466
      %v468 = vrot.slane %v405, 7
      %v469 = vrot.slane %v406, 7
      %v470 = vsel %vm443, %v468, %v469
      %v471 = vrot.slane %v421, 7
      %v472 = vrot.slane %v422, 7
      %v473 = vsel %vm443, %v471, %v472
      %v502 = vsel %vm443, 0.0, %v444
      %v503 = vsel %vm443, 0.0, %v447
      %v504 = vsel %vm443, 0.0, %v450
      %v505 = vsel %vm443, 0.0, %v453
      %v506 = vsel %vm443, 0.0, %v456
      %v507 = vsel %vm443, 0.0, %v459
      %v508 = vsel %vm443, 0.0, %v462
      %v509 = vsel %vm443, 0.0, %v465
      %v510 = vsel %vm443, 0.0, %v468
      %v511 = vsel %vm443, 0.0, %v471
      %v512 = vsel %vm443, %v445, 0.0
      %v513 = vsel %vm443, %v448, 0.0
      %v514 = vsel %vm443, %v451, 0.0
      %v515 = vsel %vm443, %v454, 0.0
      %v516 = vsel %vm443, %v457, 0.0
      %v517 = vsel %vm443, %v460, 0.0
      %v518 = vsel %vm443, %v463, 0.0
      %v519 = vsel %vm443, %v466, 0.0
      %v520 = vsel %vm443, %v469, 0.0
      %v521 = vsel %vm443, %v472, 0.0
      %vm538 = vcmask 1046528
      %v539 = vrot.slane %v502, 1
      %v540 = vrot.slane %v446, 1
      %v541 = vsel %vm538, %v539, %v540
      %v542 = vrot.slane %v512, 1
      %v543 = vsel %vm538, %v540, %v542
      %v544 = vrot.slane %v503, 1
      %v545 = vrot.slane %v449, 1
      %v546 = vsel %vm538, %v544, %v545
      %v547 = vrot.slane %v513, 1
      %v548 = vsel %vm538, %v545, %v547
      %v549 = vrot.slane %v504, 1
      %v550 = vrot.slane %v452, 1
      %v551 = vsel %vm538, %v549, %v550
      %v552 = vrot.slane %v514, 1
      %v553 = vsel %vm538, %v550, %v552
      %v554 = vrot.slane %v505, 1
      %v555 = vrot.slane %v455, 1
      %v556 = vsel %vm538, %v554, %v555
      %v557 = vrot.slane %v515, 1
      %v558 = vsel %vm538, %v555, %v557
      %v559 = vrot.slane %v506, 1
      %v560 = vrot.slane %v458, 1
      %v561 = vsel %vm538, %v559, %v560
      %v562 = vrot.slane %v516, 1
      %v563 = vsel %vm538, %v560, %v562
      %v564 = vrot.slane %v507, 1
      %v565 = vrot.slane %v461, 1
      %v566 = vsel %vm538, %v564, %v565
      %v567 = vrot.slane %v517, 1
      %v568 = vsel %vm538, %v565, %v567
      %v569 = vrot.slane %v508, 1
      %v570 = vrot.slane %v464, 1
      %v571 = vsel %vm538, %v569, %v570
      %v572 = vrot.slane %v518, 1
      %v573 = vsel %vm538, %v570, %v572
      %v574 = vrot.slane %v509, 1
      %v575 = vrot.slane %v467, 1
      %v576 = vsel %vm538, %v574, %v575
      %v577 = vrot.slane %v519, 1
      %v578 = vsel %vm538, %v575, %v577
      %579 = vrot.lane.b32.xlu0 %v541, 8
      %v580 = vpop.permute.xlu0 %579
      %581 = vrot.lane.b32.xlu0 %v543, 8
      %v582 = vpop.permute.xlu0 %581
      %583 = vrot.lane.b32.xlu0 %v546, 8
      %v584 = vpop.permute.xlu0 %583
      %585 = vrot.lane.b32.xlu0 %v548, 8
      %v586 = vpop.permute.xlu0 %585
      %587 = vrot.lane.b32.xlu0 %v551, 8
      %v588 = vpop.permute.xlu0 %587
      %589 = vrot.lane.b32.xlu0 %v553, 8
      %v590 = vpop.permute.xlu0 %589
      %591 = vrot.lane.b32.xlu0 %v556, 8
      %v592 = vpop.permute.xlu0 %591
      %593 = vrot.lane.b32.xlu0 %v558, 8
      %v594 = vpop.permute.xlu0 %593
      %595 = vrot.lane.b32.xlu0 %v561, 8
      %v596 = vpop.permute.xlu0 %595
      %597 = vrot.lane.b32.xlu0 %v563, 8
      %v598 = vpop.permute.xlu0 %597
      %599 = vrot.lane.b32.xlu0 %v566, 8
      %v600 = vpop.permute.xlu0 %599
      %601 = vrot.lane.b32.xlu0 %v568, 8
      %v602 = vpop.permute.xlu0 %601
      %603 = vrot.lane.b32.xlu0 %v571, 8
      %v604 = vpop.permute.xlu0 %603
      %605 = vrot.lane.b32.xlu0 %v573, 8
      %v606 = vpop.permute.xlu0 %605
      %607 = vrot.lane.b32.xlu0 %v576, 8
      %v608 = vpop.permute.xlu0 %607
      %609 = vrot.lane.b32.xlu0 %v578, 8
      %v610 = vpop.permute.xlu0 %609
      %vm627 = vcmask 1045504
      %v628 = vrot.slane %v502, 2
      %v629 = vrot.slane %v446, 2
      %v630 = vsel %vm627, %v628, %v629
      %v631 = vrot.slane %v512, 2
      %v632 = vsel %vm627, %v629, %v631
      %v633 = vrot.slane %v503, 2
      %v634 = vrot.slane %v449, 2
      %v635 = vsel %vm627, %v633, %v634
      %v636 = vrot.slane %v513, 2
      %v637 = vsel %vm627, %v634, %v636
      %v638 = vrot.slane %v504, 2
      %v639 = vrot.slane %v452, 2
      %v640 = vsel %vm627, %v638, %v639
      %v641 = vrot.slane %v514, 2
      %v642 = vsel %vm627, %v639, %v641
      %v643 = vrot.slane %v505, 2
      %v644 = vrot.slane %v455, 2
      %v645 = vsel %vm627, %v643, %v644
      %v646 = vrot.slane %v515, 2
      %v647 = vsel %vm627, %v644, %v646
      %v648 = vrot.slane %v506, 2
      %v649 = vrot.slane %v458, 2
      %v650 = vsel %vm627, %v648, %v649
      %v651 = vrot.slane %v516, 2
      %v652 = vsel %vm627, %v649, %v651
      %v653 = vrot.slane %v507, 2
      %v654 = vrot.slane %v461, 2
      %v655 = vsel %vm627, %v653, %v654
      %v656 = vrot.slane %v517, 2
      %v657 = vsel %vm627, %v654, %v656
      %v658 = vrot.slane %v508, 2
      %v659 = vrot.slane %v464, 2
      %v660 = vsel %vm627, %v658, %v659
      %v661 = vrot.slane %v518, 2
      %v662 = vsel %vm627, %v659, %v661
      %v663 = vrot.slane %v509, 2
      %v664 = vrot.slane %v467, 2
      %v665 = vsel %vm627, %v663, %v664
      %v666 = vrot.slane %v519, 2
      %v667 = vsel %vm627, %v664, %v666
      %668 = vrot.lane.b32.xlu0 %v630, 16
      %v669 = vpop.permute.xlu0 %668
      %670 = vrot.lane.b32.xlu0 %v632, 16
      %v671 = vpop.permute.xlu0 %670
      %672 = vrot.lane.b32.xlu0 %v635, 16
      %v673 = vpop.permute.xlu0 %672
      %674 = vrot.lane.b32.xlu0 %v637, 16
      %v675 = vpop.permute.xlu0 %674
      %676 = vrot.lane.b32.xlu0 %v640, 16
      %v677 = vpop.permute.xlu0 %676
      %678 = vrot.lane.b32.xlu0 %v642, 16
      %v679 = vpop.permute.xlu0 %678
      %680 = vrot.lane.b32.xlu0 %v645, 16
      %v681 = vpop.permute.xlu0 %680
      %682 = vrot.lane.b32.xlu0 %v647, 16
      %v683 = vpop.permute.xlu0 %682
      %684 = vrot.lane.b32.xlu0 %v650, 16
      %v685 = vpop.permute.xlu0 %684
      %686 = vrot.lane.b32.xlu0 %v652, 16
      %v687 = vpop.permute.xlu0 %686
      %688 = vrot.lane.b32.xlu0 %v655, 16
      %v689 = vpop.permute.xlu0 %688
      %690 = vrot.lane.b32.xlu0 %v657, 16
      %v691 = vpop.permute.xlu0 %690
      %692 = vrot.lane.b32.xlu0 %v660, 16
      %v693 = vpop.permute.xlu0 %692
      %694 = vrot.lane.b32.xlu0 %v662, 16
      %v695 = vpop.permute.xlu0 %694
      %696 = vrot.lane.b32.xlu0 %v665, 16
      %v697 = vpop.permute.xlu0 %696
      %698 = vrot.lane.b32.xlu0 %v667, 16
      %v699 = vpop.permute.xlu0 %698
      %717 = vrot.lane.b32.xlu0 %v503, 24
      %v718 = vpop.permute.xlu0 %717
      %719 = vrot.lane.b32.xlu0 %v449, 24
      %v720 = vpop.permute.xlu0 %719
      %721 = vrot.lane.b32.xlu0 %v504, 24
      %v722 = vpop.permute.xlu0 %721
      %723 = vrot.lane.b32.xlu0 %v452, 24
      %v724 = vpop.permute.xlu0 %723
      %725 = vrot.lane.b32.xlu0 %v505, 24
      %v726 = vpop.permute.xlu0 %725
      %727 = vrot.lane.b32.xlu0 %v455, 24
      %v728 = vpop.permute.xlu0 %727
      %729 = vrot.lane.b32.xlu0 %v506, 24
      %v730 = vpop.permute.xlu0 %729
      %731 = vrot.lane.b32.xlu0 %v458, 24
      %v732 = vpop.permute.xlu0 %731
      %733 = vrot.lane.b32.xlu0 %v507, 24
      %v734 = vpop.permute.xlu0 %733
      %735 = vrot.lane.b32.xlu0 %v461, 24
      %v736 = vpop.permute.xlu0 %735
      %737 = vrot.lane.b32.xlu0 %v508, 24
      %v738 = vpop.permute.xlu0 %737
      %739 = vrot.lane.b32.xlu0 %v464, 24
      %v740 = vpop.permute.xlu0 %739
      %741 = vrot.lane.b32.xlu0 %v509, 24
      %v742 = vpop.permute.xlu0 %741
      %743 = vrot.lane.b32.xlu0 %v467, 24
      %v744 = vpop.permute.xlu0 %743
      %745 = vrot.lane.b32.xlu0 %v510, 24
      %v746 = vpop.permute.xlu0 %745
      %747 = vrot.lane.b32.xlu0 %v470, 24
      %v748 = vpop.permute.xlu0 %747
      %v766 = vrot.slane %v510, 1
      %v767 = vrot.slane %v470, 1
      %v768 = vsel %vm538, %v766, %v767
      %v769 = vrot.slane %v520, 1
      %v770 = vsel %vm538, %v767, %v769
      %771 = vrot.lane.b32.xlu0 %v546, 32
      %v772 = vpop.permute.xlu0 %771
      %773 = vrot.lane.b32.xlu0 %v548, 32
      %v774 = vpop.permute.xlu0 %773
      %775 = vrot.lane.b32.xlu0 %v551, 32
      %v776 = vpop.permute.xlu0 %775
      %777 = vrot.lane.b32.xlu0 %v553, 32
      %v778 = vpop.permute.xlu0 %777
      %779 = vrot.lane.b32.xlu0 %v556, 32
      %v780 = vpop.permute.xlu0 %779
      %781 = vrot.lane.b32.xlu0 %v558, 32
      %v782 = vpop.permute.xlu0 %781
      %783 = vrot.lane.b32.xlu0 %v561, 32
      %v784 = vpop.permute.xlu0 %783
      %785 = vrot.lane.b32.xlu0 %v563, 32
      %v786 = vpop.permute.xlu0 %785
      %787 = vrot.lane.b32.xlu0 %v566, 32
      %v788 = vpop.permute.xlu0 %787
      %789 = vrot.lane.b32.xlu0 %v568, 32
      %v790 = vpop.permute.xlu0 %789
      %791 = vrot.lane.b32.xlu0 %v571, 32
      %v792 = vpop.permute.xlu0 %791
      %793 = vrot.lane.b32.xlu0 %v573, 32
      %v794 = vpop.permute.xlu0 %793
      %795 = vrot.lane.b32.xlu0 %v576, 32
      %v796 = vpop.permute.xlu0 %795
      %797 = vrot.lane.b32.xlu0 %v578, 32
      %v798 = vpop.permute.xlu0 %797
      %799 = vrot.lane.b32.xlu0 %v768, 32
      %v800 = vpop.permute.xlu0 %799
      %801 = vrot.lane.b32.xlu0 %v770, 32
      %v802 = vpop.permute.xlu0 %801
      %v819 = vrot.slane %v510, 2
      %v820 = vrot.slane %v470, 2
      %v821 = vsel %vm627, %v819, %v820
      %v822 = vrot.slane %v520, 2
      %v823 = vsel %vm627, %v820, %v822
      %824 = vrot.lane.b32.xlu0 %v635, 40
      %v825 = vpop.permute.xlu0 %824
      %826 = vrot.lane.b32.xlu0 %v637, 40
      %v827 = vpop.permute.xlu0 %826
      %828 = vrot.lane.b32.xlu0 %v640, 40
      %v829 = vpop.permute.xlu0 %828
      %830 = vrot.lane.b32.xlu0 %v642, 40
      %v831 = vpop.permute.xlu0 %830
      %832 = vrot.lane.b32.xlu0 %v645, 40
      %v833 = vpop.permute.xlu0 %832
      %834 = vrot.lane.b32.xlu0 %v647, 40
      %v835 = vpop.permute.xlu0 %834
      %836 = vrot.lane.b32.xlu0 %v650, 40
      %v837 = vpop.permute.xlu0 %836
      %838 = vrot.lane.b32.xlu0 %v652, 40
      %v839 = vpop.permute.xlu0 %838
      %840 = vrot.lane.b32.xlu0 %v655, 40
      %v841 = vpop.permute.xlu0 %840
      %842 = vrot.lane.b32.xlu0 %v657, 40
      %v843 = vpop.permute.xlu0 %842
      %844 = vrot.lane.b32.xlu0 %v660, 40
      %v845 = vpop.permute.xlu0 %844
      %846 = vrot.lane.b32.xlu0 %v662, 40
      %v847 = vpop.permute.xlu0 %846
      %848 = vrot.lane.b32.xlu0 %v665, 40
      %v849 = vpop.permute.xlu0 %848
      %850 = vrot.lane.b32.xlu0 %v667, 40
      %v851 = vpop.permute.xlu0 %850
      %852 = vrot.lane.b32.xlu0 %v821, 40
      %v853 = vpop.permute.xlu0 %852
      %854 = vrot.lane.b32.xlu0 %v823, 40
      %v855 = vpop.permute.xlu0 %854
      %873 = vrot.lane.b32.xlu0 %v504, 48
      %v874 = vpop.permute.xlu0 %873
      %875 = vrot.lane.b32.xlu0 %v452, 48
      %v876 = vpop.permute.xlu0 %875
      %877 = vrot.lane.b32.xlu0 %v505, 48
      %v878 = vpop.permute.xlu0 %877
      %879 = vrot.lane.b32.xlu0 %v455, 48
      %v880 = vpop.permute.xlu0 %879
      %881 = vrot.lane.b32.xlu0 %v506, 48
      %v882 = vpop.permute.xlu0 %881
      %883 = vrot.lane.b32.xlu0 %v458, 48
      %v884 = vpop.permute.xlu0 %883
      %885 = vrot.lane.b32.xlu0 %v507, 48
      %v886 = vpop.permute.xlu0 %885
      %887 = vrot.lane.b32.xlu0 %v461, 48
      %v888 = vpop.permute.xlu0 %887
      %889 = vrot.lane.b32.xlu0 %v508, 48
      %v890 = vpop.permute.xlu0 %889
      %891 = vrot.lane.b32.xlu0 %v464, 48
      %v892 = vpop.permute.xlu0 %891
      %893 = vrot.lane.b32.xlu0 %v509, 48
      %v894 = vpop.permute.xlu0 %893
      %895 = vrot.lane.b32.xlu0 %v467, 48
      %v896 = vpop.permute.xlu0 %895
      %897 = vrot.lane.b32.xlu0 %v510, 48
      %v898 = vpop.permute.xlu0 %897
      %899 = vrot.lane.b32.xlu0 %v470, 48
      %v900 = vpop.permute.xlu0 %899
      %901 = vrot.lane.b32.xlu0 %v511, 48
      %v902 = vpop.permute.xlu0 %901
      %903 = vrot.lane.b32.xlu0 %v473, 48
      %v904 = vpop.permute.xlu0 %903
      %v922 = vrot.slane %v511, 1
      %v923 = vrot.slane %v473, 1
      %v924 = vsel %vm538, %v922, %v923
      %v925 = vrot.slane %v521, 1
      %v926 = vsel %vm538, %v923, %v925
      %927 = vrot.lane.b32.xlu0 %v551, 56
      %v928 = vpop.permute.xlu0 %927
      %929 = vrot.lane.b32.xlu0 %v553, 56
      %v930 = vpop.permute.xlu0 %929
      %931 = vrot.lane.b32.xlu0 %v556, 56
      %v932 = vpop.permute.xlu0 %931
      %933 = vrot.lane.b32.xlu0 %v558, 56
      %v934 = vpop.permute.xlu0 %933
      %935 = vrot.lane.b32.xlu0 %v561, 56
      %v936 = vpop.permute.xlu0 %935
      %937 = vrot.lane.b32.xlu0 %v563, 56
      %v938 = vpop.permute.xlu0 %937
      %939 = vrot.lane.b32.xlu0 %v566, 56
      %v940 = vpop.permute.xlu0 %939
      %941 = vrot.lane.b32.xlu0 %v568, 56
      %v942 = vpop.permute.xlu0 %941
      %943 = vrot.lane.b32.xlu0 %v571, 56
      %v944 = vpop.permute.xlu0 %943
      %945 = vrot.lane.b32.xlu0 %v573, 56
      %v946 = vpop.permute.xlu0 %945
      %947 = vrot.lane.b32.xlu0 %v576, 56
      %v948 = vpop.permute.xlu0 %947
      %949 = vrot.lane.b32.xlu0 %v578, 56
      %v950 = vpop.permute.xlu0 %949
      %951 = vrot.lane.b32.xlu0 %v768, 56
      %v952 = vpop.permute.xlu0 %951
      %953 = vrot.lane.b32.xlu0 %v770, 56
      %v954 = vpop.permute.xlu0 %953
      %955 = vrot.lane.b32.xlu0 %v924, 56
      %v956 = vpop.permute.xlu0 %955
      %957 = vrot.lane.b32.xlu0 %v926, 56
      %v958 = vpop.permute.xlu0 %957
      %v975 = vrot.slane %v511, 2
      %v976 = vrot.slane %v473, 2
      %v977 = vsel %vm627, %v975, %v976
      %v978 = vrot.slane %v521, 2
      %v979 = vsel %vm627, %v976, %v978
      %980 = vrot.lane.b32.xlu0 %v640, 64
      %v981 = vpop.permute.xlu0 %980
      %982 = vrot.lane.b32.xlu0 %v642, 64
      %v983 = vpop.permute.xlu0 %982
      %984 = vrot.lane.b32.xlu0 %v645, 64
      %v985 = vpop.permute.xlu0 %984
      %986 = vrot.lane.b32.xlu0 %v647, 64
      %v987 = vpop.permute.xlu0 %986
      %988 = vrot.lane.b32.xlu0 %v650, 64
      %v989 = vpop.permute.xlu0 %988
      %990 = vrot.lane.b32.xlu0 %v652, 64
      %v991 = vpop.permute.xlu0 %990
      %992 = vrot.lane.b32.xlu0 %v655, 64
      %v993 = vpop.permute.xlu0 %992
      %994 = vrot.lane.b32.xlu0 %v657, 64
      %v995 = vpop.permute.xlu0 %994
      %996 = vrot.lane.b32.xlu0 %v660, 64
      %v997 = vpop.permute.xlu0 %996
      %998 = vrot.lane.b32.xlu0 %v662, 64
      %v999 = vpop.permute.xlu0 %998
      %1000 = vrot.lane.b32.xlu0 %v665, 64
      %v1001 = vpop.permute.xlu0 %1000
      %1002 = vrot.lane.b32.xlu0 %v667, 64
      %v1003 = vpop.permute.xlu0 %1002
      %1004 = vrot.lane.b32.xlu0 %v821, 64
      %v1005 = vpop.permute.xlu0 %1004
      %1006 = vrot.lane.b32.xlu0 %v823, 64
      %v1007 = vpop.permute.xlu0 %1006
      %1008 = vrot.lane.b32.xlu0 %v977, 64
      %v1009 = vpop.permute.xlu0 %1008
      %1010 = vrot.lane.b32.xlu0 %v979, 64
      %v1011 = vpop.permute.xlu0 %1010
      %vm1028 = vcmask 64512
      %v1029 = vsel %vm1028, %v502, %v580
      %v1030 = vsel %vm1028, %v446, %v582
      %v1031 = vsel %vm1028, %v503, %v584
      %v1032 = vsel %vm1028, %v449, %v586
      %v1033 = vsel %vm1028, %v504, %v588
      %v1034 = vsel %vm1028, %v452, %v590
      %v1035 = vsel %vm1028, %v505, %v592
      %v1036 = vsel %vm1028, %v455, %v594
      %v1037 = vsel %vm1028, %v506, %v596
      %v1038 = vsel %vm1028, %v458, %v598
      %v1039 = vsel %vm1028, %v507, %v600
      %v1040 = vsel %vm1028, %v461, %v602
      %v1041 = vsel %vm1028, %v508, %v604
      %v1042 = vsel %vm1028, %v464, %v606
      %v1043 = vsel %vm1028, %v509, %v608
      %v1044 = vsel %vm1028, %v467, %v610
      %vm1045 = vcmask 130048
      %v1046 = vsel %vm1045, %v1029, %v669
      %v1047 = vsel %vm1045, %v1030, %v671
      %v1048 = vsel %vm1045, %v1031, %v673
      %v1049 = vsel %vm1045, %v1032, %v675
      %v1050 = vsel %vm1045, %v1033, %v677
      %v1051 = vsel %vm1045, %v1034, %v679
      %v1052 = vsel %vm1045, %v1035, %v681
      %v1053 = vsel %vm1045, %v1036, %v683
      %v1054 = vsel %vm1045, %v1037, %v685
      %v1055 = vsel %vm1045, %v1038, %v687
      %v1056 = vsel %vm1045, %v1039, %v689
      %v1057 = vsel %vm1045, %v1040, %v691
      %v1058 = vsel %vm1045, %v1041, %v693
      %v1059 = vsel %vm1045, %v1042, %v695
      %v1060 = vsel %vm1045, %v1043, %v697
      %v1061 = vsel %vm1045, %v1044, %v699
      %vm1062 = vcmask 195584
      %v1063 = vsel %vm1062, %v1046, %v718
      %v1064 = vsel %vm1062, %v1047, %v720
      %v1065 = vsel %vm1062, %v1048, %v722
      %v1066 = vsel %vm1062, %v1049, %v724
      %v1067 = vsel %vm1062, %v1050, %v726
      %v1068 = vsel %vm1062, %v1051, %v728
      %v1069 = vsel %vm1062, %v1052, %v730
      %v1070 = vsel %vm1062, %v1053, %v732
      %v1071 = vsel %vm1062, %v1054, %v734
      %v1072 = vsel %vm1062, %v1055, %v736
      %v1073 = vsel %vm1062, %v1056, %v738
      %v1074 = vsel %vm1062, %v1057, %v740
      %v1075 = vsel %vm1062, %v1058, %v742
      %v1076 = vsel %vm1062, %v1059, %v744
      %v1077 = vsel %vm1062, %v1060, %v746
      %v1078 = vsel %vm1062, %v1061, %v748
      %vm1079 = vcmask 261120
      %v1080 = vsel %vm1079, %v1063, %v772
      %v1081 = vsel %vm1079, %v1064, %v774
      %v1082 = vsel %vm1079, %v1065, %v776
      %v1083 = vsel %vm1079, %v1066, %v778
      %v1084 = vsel %vm1079, %v1067, %v780
      %v1085 = vsel %vm1079, %v1068, %v782
      %v1086 = vsel %vm1079, %v1069, %v784
      %v1087 = vsel %vm1079, %v1070, %v786
      %v1088 = vsel %vm1079, %v1071, %v788
      %v1089 = vsel %vm1079, %v1072, %v790
      %v1090 = vsel %vm1079, %v1073, %v792
      %v1091 = vsel %vm1079, %v1074, %v794
      %v1092 = vsel %vm1079, %v1075, %v796
      %v1093 = vsel %vm1079, %v1076, %v798
      %v1094 = vsel %vm1079, %v1077, %v800
      %v1095 = vsel %vm1079, %v1078, %v802
      %vm1096 = vcmask 326656
      %v1097 = vsel %vm1096, %v1080, %v825
      %v1098 = vsel %vm1096, %v1081, %v827
      %v1099 = vsel %vm1096, %v1082, %v829
      %v1100 = vsel %vm1096, %v1083, %v831
      %v1101 = vsel %vm1096, %v1084, %v833
      %v1102 = vsel %vm1096, %v1085, %v835
      %v1103 = vsel %vm1096, %v1086, %v837
      %v1104 = vsel %vm1096, %v1087, %v839
      %v1105 = vsel %vm1096, %v1088, %v841
      %v1106 = vsel %vm1096, %v1089, %v843
      %v1107 = vsel %vm1096, %v1090, %v845
      %v1108 = vsel %vm1096, %v1091, %v847
      %v1109 = vsel %vm1096, %v1092, %v849
      %v1110 = vsel %vm1096, %v1093, %v851
      %v1111 = vsel %vm1096, %v1094, %v853
      %v1112 = vsel %vm1096, %v1095, %v855
      %vm1113 = vcmask 392192
      %v1114 = vsel %vm1113, %v1097, %v874
      %v1115 = vsel %vm1113, %v1098, %v876
      %v1116 = vsel %vm1113, %v1099, %v878
      %v1117 = vsel %vm1113, %v1100, %v880
      %v1118 = vsel %vm1113, %v1101, %v882
      %v1119 = vsel %vm1113, %v1102, %v884
      %v1120 = vsel %vm1113, %v1103, %v886
      %v1121 = vsel %vm1113, %v1104, %v888
      %v1122 = vsel %vm1113, %v1105, %v890
      %v1123 = vsel %vm1113, %v1106, %v892
      %v1124 = vsel %vm1113, %v1107, %v894
      %v1125 = vsel %vm1113, %v1108, %v896
      %v1126 = vsel %vm1113, %v1109, %v898
      %v1127 = vsel %vm1113, %v1110, %v900
      %v1128 = vsel %vm1113, %v1111, %v902
      %v1129 = vsel %vm1113, %v1112, %v904
      %vm1130 = vcmask 457728
      %v1131 = vsel %vm1130, %v1114, %v928
      %v1132 = vsel %vm1130, %v1115, %v930
      %v1133 = vsel %vm1130, %v1116, %v932
      %v1134 = vsel %vm1130, %v1117, %v934
      %v1135 = vsel %vm1130, %v1118, %v936
      %v1136 = vsel %vm1130, %v1119, %v938
      %v1137 = vsel %vm1130, %v1120, %v940
      %v1138 = vsel %vm1130, %v1121, %v942
      %v1139 = vsel %vm1130, %v1122, %v944
      %v1140 = vsel %vm1130, %v1123, %v946
      %v1141 = vsel %vm1130, %v1124, %v948
      %v1142 = vsel %vm1130, %v1125, %v950
      %v1143 = vsel %vm1130, %v1126, %v952
      %v1144 = vsel %vm1130, %v1127, %v954
      %v1145 = vsel %vm1130, %v1128, %v956
      %v1146 = vsel %vm1130, %v1129, %v958
      %vm1147 = vcmask 523264
      %v1148 = vsel %vm1147, %v1131, %v981
      %v1149 = vsel %vm1147, %v1132, %v983
      %v1150 = vsel %vm1147, %v1133, %v985
      %v1151 = vsel %vm1147, %v1134, %v987
      %v1152 = vsel %vm1147, %v1135, %v989
      %v1153 = vsel %vm1147, %v1136, %v991
      %v1154 = vsel %vm1147, %v1137, %v993
      %v1155 = vsel %vm1147, %v1138, %v995
      %v1156 = vsel %vm1147, %v1139, %v997
      %v1157 = vsel %vm1147, %v1140, %v999
      %v1158 = vsel %vm1147, %v1141, %v1001
      %v1159 = vsel %vm1147, %v1142, %v1003
      %v1160 = vsel %vm1147, %v1143, %v1005
      %v1161 = vsel %vm1147, %v1144, %v1007
      %v1162 = vsel %vm1147, %v1145, %v1009
      %v1163 = vsel %vm1147, %v1146, %v1011
      %v1164 = vld [vmem:[%s3] sm:$0xff]
      %v1165 = vld [vmem:[%s3 + $0x8] sm:$0xff]
      %v1166 = vld [vmem:[%s3 + $0x10] sm:$0xff]
      %v1167 = vld [vmem:[%s3 + $0x18] sm:$0xff]
      %v1168 = vld [vmem:[%s3 + $0x20] sm:$0xff]
      %v1169 = vld [vmem:[%s3 + $0x28] sm:$0xff]
      %v1170 = vld [vmem:[%s3 + $0x30] sm:$0xff]
      %v1171 = vld [vmem:[%s3 + $0x38] sm:$0xff]
      %v1172 = vld [vmem:[%s3 + $0x40] sm:$0xff]
      %v1173 = vld [vmem:[%s4] sm:$0x1]
      %v1175 = vlaneseq
      %v1176 = vshrl.u32 %v1175, 7
      %v1177 = vsub.s32 0, %v1176
      %v1178 = vrot.slane %v1173, %v1177
      %vm1180 = vcmask 588800
      %v1182 = vsel %vm1180, %v1148, 0
      %v1185 = vsel %vm1180, %v1149, 0
      %v1188 = vsel %vm1180, %v1150, 0
      %v1191 = vsel %vm1180, %v1151, 0
      %v1194 = vsel %vm1180, %v1152, 0
      %v1197 = vsel %vm1180, %v1153, 0
      %v1200 = vsel %vm1180, %v1154, 0
      %v1203 = vsel %vm1180, %v1155, 0
      %v1206 = vsel %vm1180, %v1156, 0
      %v1209 = vsel %vm1180, %v1157, 0
      %v1212 = vsel %vm1180, %v1158, 0
      %v1215 = vsel %vm1180, %v1159, 0
      %v1218 = vsel %vm1180, %v1160, 0
      %v1221 = vsel %vm1180, %v1161, 0
      %v1224 = vsel %vm1180, %v1162, 0
      %v1227 = vsel %vm1180, %v1163, 0
      %1229 = vmatprep.subr.mxu0 0.0
      %1230 = vmatpush1.msra.mxu0 %v1164
      %1231 = vmatprep.subr.mxu0 0.0
      %1232 = vmatpush1.msra.mxu0 %v1165
      %1233 = vmatprep.subr.mxu0 0.0
      %1234 = vmatpush1.msra.mxu0 %v1166
      %1235 = vmatprep.subr.mxu0 0.0
      %1236 = vmatpush1.msra.mxu0 %v1167
      %1237 = vmatprep.subr.mxu0 0.0
      %1238 = vmatpush1.msra.mxu0 %v1168
      %1239 = vmatprep.subr.mxu0 0.0
      %1240 = vmatpush1.msra.mxu0 %v1169
      %1241 = vmatprep.subr.mxu0 0.0
      %1242 = vmatpush1.msra.mxu0 %v1170
      %1243 = vmatprep.subr.mxu0 0.0
      %1244 = vmatpush1.msra.mxu0 %v1171
      %1245 = vmatprep.subr.mxu0 0.0
      %1246 = vmatpush1.msra.mxu0 %v1172
      %1247 = vmatprep.subr.mxu0 0.0
      %1248 = vmatpush1.msra.mxu0 0.0
      %1249 = vmatprep.subr.mxu0 0.0
      %1250 = vmatpush1.msra.mxu0 0.0
      %1251 = vmatprep.subr.mxu0 0.0
      %1252 = vmatpush1.msra.mxu0 0.0
      %1253 = vmatprep.subr.mxu0 0.0
      %1254 = vmatpush1.msra.mxu0 0.0
      %1255 = vmatprep.subr.mxu0 0.0
      %1256 = vmatpush1.msra.mxu0 0.0
      %1257 = vmatprep.subr.mxu0 0.0
      %1258 = vmatpush1.msra.mxu0 0.0
      %1259 = vmatprep.subr.mxu0 0.0
      %1260 = vmatpush1.msra.mxu0 0.0
      %1261 = vmatprep.subr.mxu0 0.0
      %1262 = vmatpush1.msra.mxu0 0.0
      %1263 = vmatprep.subr.mxu0 0.0
      %1264 = vmatpush1.msra.mxu0 0.0
      %1265 = vmatprep.subr.mxu0 0.0
      %1266 = vmatpush1.msra.mxu0 0.0
      %1267 = vmatprep.subr.mxu0 0.0
      %1268 = vmatpush1.msra.mxu0 0.0
      %1269 = vmatprep.subr.mxu0 0.0
      %1270 = vmatpush1.msra.mxu0 0.0
      %1271 = vmatprep.subr.mxu0 0.0
      %1272 = vmatpush1.msra.mxu0 0.0
      %1273 = vmatprep.subr.mxu0 0.0
      %1274 = vmatpush1.msra.mxu0 0.0
      %1275 = vmatprep.subr.mxu0 0.0
      %1276 = vmatpush1.msra.mxu0 0.0
      %1277 = vmatprep.subr.mxu0 0.0
      %1278 = vmatpush1.msra.mxu0 0.0
      %1279 = vmatprep.subr.mxu0 0.0
      %1280 = vmatpush1.msra.mxu0 0.0
      %1281 = vmatprep.subr.mxu0 0.0
      %1282 = vmatpush1.msra.mxu0 0.0
      %1283 = vmatprep.subr.mxu0 0.0
      %1284 = vmatpush1.msra.mxu0 0.0
      %1285 = vmatprep.subr.mxu0 0.0
      %1286 = vmatpush1.msra.mxu0 0.0
      %1287 = vmatprep.subr.mxu0 0.0
      %1288 = vmatpush1.msra.mxu0 0.0
      %1289 = vmatprep.subr.mxu0 0.0
      %1290 = vmatpush1.msra.mxu0 0.0
      %1291 = vmatprep.subr.mxu0 0.0
      %1292 = vmatpush1.msra.mxu0 0.0
      %1293 = vmatprep.mubr.f32.mxu0 0.0
      %1294 = vmatmul.mubr.f32.gmra.mrb[0].mxu0 %v1182
      %v1295 = vpop.f32.mrb[0].mxu0
      %v1296 = vadd.f32 %v1178, %v1295
      %v1297 = vpop.f32.mrb[0].mxu0
      %1298 = vmatprep.mubr.f32.mxu0 0.0
      %1299 = vmatmul.mubr.f32.gmra.mrb[0].mxu0 %v1185
      %v1300 = vpop.f32.mrb[0].mxu0
      %v1301 = vadd.f32 %v1178, %v1300
      %v1302 = vpop.f32.mrb[0].mxu0
      %1303 = vmatprep.mubr.f32.mxu0 0.0
      %1304 = vmatmul.mubr.f32.gmra.mrb[0].mxu0 %v1188
      %v1305 = vpop.f32.mrb[0].mxu0
      %v1306 = vadd.f32 %v1178, %v1305
      %v1307 = vpop.f32.mrb[0].mxu0
      %1308 = vmatprep.mubr.f32.mxu0 0.0
      %1309 = vmatmul.mubr.f32.gmra.mrb[0].mxu0 %v1191
      %v1310 = vpop.f32.mrb[0].mxu0
      %v1311 = vadd.f32 %v1178, %v1310
      %v1312 = vpop.f32.mrb[0].mxu0
      %1313 = vmatprep.mubr.f32.mxu0 0.0
      %1314 = vmatmul.mubr.f32.gmra.mrb[0].mxu0 %v1194
      %v1315 = vpop.f32.mrb[0].mxu0
      %v1316 = vadd.f32 %v1178, %v1315
      %v1317 = vpop.f32.mrb[0].mxu0
      %1318 = vmatprep.mubr.f32.mxu0 0.0
      %1319 = vmatmul.mubr.f32.gmra.mrb[0].mxu0 %v1197
      %v1320 = vpop.f32.mrb[0].mxu0
      %v1321 = vadd.f32 %v1178, %v1320
      %v1322 = vpop.f32.mrb[0].mxu0
      %1323 = vmatprep.mubr.f32.mxu0 0.0
      %1324 = vmatmul.mubr.f32.gmra.mrb[0].mxu0 %v1200
      %v1325 = vpop.f32.mrb[0].mxu0
      %v1326 = vadd.f32 %v1178, %v1325
      %v1327 = vpop.f32.mrb[0].mxu0
      %1328 = vmatprep.mubr.f32.mxu0 0.0
      %1329 = vmatmul.mubr.f32.gmra.mrb[0].mxu0 %v1203
      %v1330 = vpop.f32.mrb[0].mxu0
      %v1331 = vadd.f32 %v1178, %v1330
      %v1332 = vpop.f32.mrb[0].mxu0
      %1333 = vmatprep.mubr.f32.mxu0 0.0
      %1334 = vmatmul.mubr.f32.gmra.mrb[0].mxu0 %v1206
      %v1335 = vpop.f32.mrb[0].mxu0
      %v1336 = vadd.f32 %v1178, %v1335
      %v1337 = vpop.f32.mrb[0].mxu0
      %1338 = vmatprep.mubr.f32.mxu0 0.0
      %1339 = vmatmul.mubr.f32.gmra.mrb[0].mxu0 %v1209
      %v1340 = vpop.f32.mrb[0].mxu0
      %v1341 = vadd.f32 %v1178, %v1340
      %v1342 = vpop.f32.mrb[0].mxu0
      %1343 = vmatprep.mubr.f32.mxu0 0.0
      %1344 = vmatmul.mubr.f32.gmra.mrb[0].mxu0 %v1212
      %v1345 = vpop.f32.mrb[0].mxu0
      %v1346 = vadd.f32 %v1178, %v1345
      %v1347 = vpop.f32.mrb[0].mxu0
      %1348 = vmatprep.mubr.f32.mxu0 0.0
      %1349 = vmatmul.mubr.f32.gmra.mrb[0].mxu0 %v1215
      %v1350 = vpop.f32.mrb[0].mxu0
      %v1351 = vadd.f32 %v1178, %v1350
      %v1352 = vpop.f32.mrb[0].mxu0
      %1353 = vmatprep.mubr.f32.mxu0 0.0
      %1354 = vmatmul.mubr.f32.gmra.mrb[0].mxu0 %v1218
      %v1355 = vpop.f32.mrb[0].mxu0
      %v1356 = vadd.f32 %v1178, %v1355
      %v1357 = vpop.f32.mrb[0].mxu0
      %1358 = vmatprep.mubr.f32.mxu0 0.0
      %1359 = vmatmul.mubr.f32.gmra.mrb[0].mxu0 %v1221
      %v1360 = vpop.f32.mrb[0].mxu0
      %v1361 = vadd.f32 %v1178, %v1360
      %v1362 = vpop.f32.mrb[0].mxu0
      %1363 = vmatprep.mubr.f32.mxu0 0.0
      %1364 = vmatmul.mubr.f32.gmra.mrb[0].mxu0 %v1224
      %v1365 = vpop.f32.mrb[0].mxu0
      %v1366 = vadd.f32 %v1178, %v1365
      %v1367 = vpop.f32.mrb[0].mxu0
      %1368 = vmatprep.mubr.f32.mxu0 0.0
      %1369 = vmatmul.mubr.f32.gmra.mrb[0].mxu0 %v1227
      %v1370 = vpop.f32.mrb[0].mxu0
      %v1371 = vadd.f32 %v1178, %v1370
      %v1372 = vpop.f32.mrb[0].mxu0
      %1373 = vdwg.mxu0
      %v1374 = vmax.f32 %v1296, 0.0
      %v1375 = vmax.f32 %v1301, 0.0
      %v1376 = vmax.f32 %v1306, 0.0
      %v1377 = vmax.f32 %v1311, 0.0
      %v1378 = vmax.f32 %v1316, 0.0
      %v1379 = vmax.f32 %v1321, 0.0
      %v1380 = vmax.f32 %v1326, 0.0
      %v1381 = vmax.f32 %v1331, 0.0
      %v1382 = vmax.f32 %v1336, 0.0
      %v1383 = vmax.f32 %v1341, 0.0
      %v1384 = vmax.f32 %v1346, 0.0
      %v1385 = vmax.f32 %v1351, 0.0
      %v1386 = vmax.f32 %v1356, 0.0
      %v1387 = vmax.f32 %v1361, 0.0
      %v1388 = vmax.f32 %v1366, 0.0
      %v1389 = vmax.f32 %v1371, 0.0
      %v1390 = vsel %vm1028, %v1374, 0.0
      %v1391 = vsel %vm1028, %v1376, 0.0
      %v1392 = vadd.f32 %v1390, %v1391
      %v1393 = vsel %vm1028, %v1375, 0.0
      %v1394 = vsel %vm1028, %v1377, 0.0
      %v1395 = vadd.f32 %v1393, %v1394
      %v1396 = vsel %vm1028, %v1378, 0.0
      %v1397 = vsel %vm1028, %v1380, 0.0
      %v1398 = vadd.f32 %v1396, %v1397
      %v1399 = vsel %vm1028, %v1379, 0.0
      %v1400 = vsel %vm1028, %v1381, 0.0
      %v1401 = vadd.f32 %v1399, %v1400
      %v1402 = vsel %vm1028, %v1382, 0.0
      %v1403 = vsel %vm1028, %v1384, 0.0
      %v1404 = vadd.f32 %v1402, %v1403
      %v1405 = vsel %vm1028, %v1383, 0.0
      %v1406 = vsel %vm1028, %v1385, 0.0
      %v1407 = vadd.f32 %v1405, %v1406
      %v1408 = vsel %vm1028, %v1386, 0.0
      %v1409 = vsel %vm1028, %v1388, 0.0
      %v1410 = vadd.f32 %v1408, %v1409
      %v1411 = vsel %vm1028, %v1387, 0.0
      %v1412 = vsel %vm1028, %v1389, 0.0
      %v1413 = vadd.f32 %v1411, %v1412
      %v1422 = vcombine.high %v1392, %v1392
      %v1424 = vunpack.c.l.s4 1983009808
      %v1425 = vunpack.c.0.s8 %v1424
      %v1426 = vlaneseq
      %v1427 = vshrl.u32 %v1426, 7
      %v1428 = vsub.s32 %v1425, %v1427
      %v1429 = vrot.slane %v1392, %v1428
      %v1431 = vunpack.c.l.s4 1983009808
      %v1432 = vunpack.c.0.s8 %v1431
      %v1433 = vlaneseq
      %v1434 = vshrl.u32 %v1433, 7
      %v1435 = vsub.s32 %v1432, %v1434
      %v1436 = vrot.slane %v1422, %v1435
      %v1437 = vcombine.high %v1429, %v1429
      %v1438 = vcombine.high %v1436, %v1436
      %v1439 = vcombine.high %v1395, %v1395
      %v1441 = vunpack.c.l.s4 1983009808
      %v1442 = vunpack.c.0.s8 %v1441
      %v1443 = vlaneseq
      %v1444 = vshrl.u32 %v1443, 7
      %v1445 = vsub.s32 %v1442, %v1444
      %v1446 = vrot.slane %v1395, %v1445
      %v1448 = vunpack.c.l.s4 1983009808
      %v1449 = vunpack.c.0.s8 %v1448
      %v1450 = vlaneseq
      %v1451 = vshrl.u32 %v1450, 7
      %v1452 = vsub.s32 %v1449, %v1451
      %v1453 = vrot.slane %v1439, %v1452
      %v1454 = vcombine.high %v1446, %v1446
      %v1455 = vcombine.high %v1453, %v1453
      %v1456 = vcombine.high %v1398, %v1398
      %v1458 = vunpack.c.l.s4 1983009808
      %v1459 = vunpack.c.0.s8 %v1458
      %v1460 = vlaneseq
      %v1461 = vshrl.u32 %v1460, 7
      %v1462 = vsub.s32 %v1459, %v1461
      %v1463 = vrot.slane %v1398, %v1462
      %v1465 = vunpack.c.l.s4 1983009808
      %v1466 = vunpack.c.0.s8 %v1465
      %v1467 = vlaneseq
      %v1468 = vshrl.u32 %v1467, 7
      %v1469 = vsub.s32 %v1466, %v1468
      %v1470 = vrot.slane %v1456, %v1469
      %v1471 = vcombine.high %v1463, %v1463
      %v1472 = vcombine.high %v1470, %v1470
      %v1473 = vcombine.high %v1401, %v1401
      %v1475 = vunpack.c.l.s4 1983009808
      %v1476 = vunpack.c.0.s8 %v1475
      %v1477 = vlaneseq
      %v1478 = vshrl.u32 %v1477, 7
      %v1479 = vsub.s32 %v1476, %v1478
      %v1480 = vrot.slane %v1401, %v1479
      %v1482 = vunpack.c.l.s4 1983009808
      %v1483 = vunpack.c.0.s8 %v1482
      %v1484 = vlaneseq
      %v1485 = vshrl.u32 %v1484, 7
      %v1486 = vsub.s32 %v1483, %v1485
      %v1487 = vrot.slane %v1473, %v1486
      %v1488 = vcombine.high %v1480, %v1480
      %v1489 = vcombine.high %v1487, %v1487
      %v1490 = vcombine.high %v1404, %v1404
      %v1492 = vunpack.c.l.s4 1983009808
      %v1493 = vunpack.c.0.s8 %v1492
      %v1494 = vlaneseq
      %v1495 = vshrl.u32 %v1494, 7
      %v1496 = vsub.s32 %v1493, %v1495
      %v1497 = vrot.slane %v1404, %v1496
      %v1499 = vunpack.c.l.s4 1983009808
      %v1500 = vunpack.c.0.s8 %v1499
      %v1501 = vlaneseq
      %v1502 = vshrl.u32 %v1501, 7
      %v1503 = vsub.s32 %v1500, %v1502
      %v1504 = vrot.slane %v1490, %v1503
      %v1505 = vcombine.high %v1497, %v1497
      %v1506 = vcombine.high %v1504, %v1504
      %v1507 = vcombine.high %v1407, %v1407
      %v1509 = vunpack.c.l.s4 1983009808
      %v1510 = vunpack.c.0.s8 %v1509
      %v1511 = vlaneseq
      %v1512 = vshrl.u32 %v1511, 7
      %v1513 = vsub.s32 %v1510, %v1512
      %v1514 = vrot.slane %v1407, %v1513
      %v1516 = vunpack.c.l.s4 1983009808
      %v1517 = vunpack.c.0.s8 %v1516
      %v1518 = vlaneseq
      %v1519 = vshrl.u32 %v1518, 7
      %v1520 = vsub.s32 %v1517, %v1519
      %v1521 = vrot.slane %v1507, %v1520
      %v1522 = vcombine.high %v1514, %v1514
      %v1523 = vcombine.high %v1521, %v1521
      %v1524 = vcombine.high %v1410, %v1410
      %v1526 = vunpack.c.l.s4 1983009808
      %v1527 = vunpack.c.0.s8 %v1526
      %v1528 = vlaneseq
      %v1529 = vshrl.u32 %v1528, 7
      %v1530 = vsub.s32 %v1527, %v1529
      %v1531 = vrot.slane %v1410, %v1530
      %v1533 = vunpack.c.l.s4 1983009808
      %v1534 = vunpack.c.0.s8 %v1533
      %v1535 = vlaneseq
      %v1536 = vshrl.u32 %v1535, 7
      %v1537 = vsub.s32 %v1534, %v1536
      %v1538 = vrot.slane %v1524, %v1537
      %v1539 = vcombine.high %v1531, %v1531
      %v1540 = vcombine.high %v1538, %v1538
      %v1541 = vcombine.high %v1413, %v1413
      %v1543 = vunpack.c.l.s4 1983009808
      %v1544 = vunpack.c.0.s8 %v1543
      %v1545 = vlaneseq
      %v1546 = vshrl.u32 %v1545, 7
      %v1547 = vsub.s32 %v1544, %v1546
      %v1548 = vrot.slane %v1413, %v1547
      %v1550 = vunpack.c.l.s4 1983009808
      %v1551 = vunpack.c.0.s8 %v1550
      %v1552 = vlaneseq
      %v1553 = vshrl.u32 %v1552, 7
      %v1554 = vsub.s32 %v1551, %v1553
      %v1555 = vrot.slane %v1541, %v1554
      %v1556 = vcombine.high %v1548, %v1548
      %v1557 = vcombine.high %v1555, %v1555
      %vm1590 = vcmask 58368
      %v1591 = vsel %vm1590, %v1429, 0.0
      %v1592 = vrot.slane %v1591, 4
      %v1593 = vadd.f32 %v1591, %v1592
      %v1594 = vrot.slane %v1593, 2
      %v1595 = vadd.f32 %v1593, %v1594
      %v1596 = vrot.slane %v1595, 1
      %v1597 = vadd.f32 %v1595, %v1596
      %v1598 = vsel %vm1590, %v1437, 0.0
      %v1599 = vrot.slane %v1598, 4
      %v1600 = vadd.f32 %v1598, %v1599
      %v1601 = vrot.slane %v1600, 2
      %v1602 = vadd.f32 %v1600, %v1601
      %v1603 = vrot.slane %v1602, 1
      %v1604 = vadd.f32 %v1602, %v1603
      %v1605 = vsel %vm1590, %v1436, 0.0
      %v1606 = vrot.slane %v1605, 4
      %v1607 = vadd.f32 %v1605, %v1606
      %v1608 = vrot.slane %v1607, 2
      %v1609 = vadd.f32 %v1607, %v1608
      %v1610 = vrot.slane %v1609, 1
      %v1611 = vadd.f32 %v1609, %v1610
      %v1612 = vsel %vm1590, %v1438, 0.0
      %v1613 = vrot.slane %v1612, 4
      %v1614 = vadd.f32 %v1612, %v1613
      %v1615 = vrot.slane %v1614, 2
      %v1616 = vadd.f32 %v1614, %v1615
      %v1617 = vrot.slane %v1616, 1
      %v1618 = vadd.f32 %v1616, %v1617
      %v1619 = vsel %vm1590, %v1446, 0.0
      %v1620 = vrot.slane %v1619, 4
      %v1621 = vadd.f32 %v1619, %v1620
      %v1622 = vrot.slane %v1621, 2
      %v1623 = vadd.f32 %v1621, %v1622
      %v1624 = vrot.slane %v1623, 1
      %v1625 = vadd.f32 %v1623, %v1624
      %v1626 = vsel %vm1590, %v1454, 0.0
      %v1627 = vrot.slane %v1626, 4
      %v1628 = vadd.f32 %v1626, %v1627
      %v1629 = vrot.slane %v1628, 2
      %v1630 = vadd.f32 %v1628, %v1629
      %v1631 = vrot.slane %v1630, 1
      %v1632 = vadd.f32 %v1630, %v1631
      %v1633 = vsel %vm1590, %v1453, 0.0
      %v1634 = vrot.slane %v1633, 4
      %v1635 = vadd.f32 %v1633, %v1634
      %v1636 = vrot.slane %v1635, 2
      %v1637 = vadd.f32 %v1635, %v1636
      %v1638 = vrot.slane %v1637, 1
      %v1639 = vadd.f32 %v1637, %v1638
      %v1640 = vsel %vm1590, %v1455, 0.0
      %v1641 = vrot.slane %v1640, 4
      %v1642 = vadd.f32 %v1640, %v1641
      %v1643 = vrot.slane %v1642, 2
      %v1644 = vadd.f32 %v1642, %v1643
      %v1645 = vrot.slane %v1644, 1
      %v1646 = vadd.f32 %v1644, %v1645
      %v1647 = vsel %vm1590, %v1463, 0.0
      %v1648 = vrot.slane %v1647, 4
      %v1649 = vadd.f32 %v1647, %v1648
      %v1650 = vrot.slane %v1649, 2
      %v1651 = vadd.f32 %v1649, %v1650
      %v1652 = vrot.slane %v1651, 1
      %v1653 = vadd.f32 %v1651, %v1652
      %v1654 = vsel %vm1590, %v1471, 0.0
      %v1655 = vrot.slane %v1654, 4
      %v1656 = vadd.f32 %v1654, %v1655
      %v1657 = vrot.slane %v1656, 2
      %v1658 = vadd.f32 %v1656, %v1657
      %v1659 = vrot.slane %v1658, 1
      %v1660 = vadd.f32 %v1658, %v1659
      %v1661 = vsel %vm1590, %v1470, 0.0
      %v1662 = vrot.slane %v1661, 4
      %v1663 = vadd.f32 %v1661, %v1662
      %v1664 = vrot.slane %v1663, 2
      %v1665 = vadd.f32 %v1663, %v1664
      %v1666 = vrot.slane %v1665, 1
      %v1667 = vadd.f32 %v1665, %v1666
      %v1668 = vsel %vm1590, %v1472, 0.0
      %v1669 = vrot.slane %v1668, 4
      %v1670 = vadd.f32 %v1668, %v1669
      %v1671 = vrot.slane %v1670, 2
      %v1672 = vadd.f32 %v1670, %v1671
      %v1673 = vrot.slane %v1672, 1
      %v1674 = vadd.f32 %v1672, %v1673
      %v1675 = vsel %vm1590, %v1480, 0.0
      %v1676 = vrot.slane %v1675, 4
      %v1677 = vadd.f32 %v1675, %v1676
      %v1678 = vrot.slane %v1677, 2
      %v1679 = vadd.f32 %v1677, %v1678
      %v1680 = vrot.slane %v1679, 1
      %v1681 = vadd.f32 %v1679, %v1680
      %v1682 = vsel %vm1590, %v1488, 0.0
      %v1683 = vrot.slane %v1682, 4
      %v1684 = vadd.f32 %v1682, %v1683
      %v1685 = vrot.slane %v1684, 2
      %v1686 = vadd.f32 %v1684, %v1685
      %v1687 = vrot.slane %v1686, 1
      %v1688 = vadd.f32 %v1686, %v1687
      %v1689 = vsel %vm1590, %v1487, 0.0
      %v1690 = vrot.slane %v1689, 4
      %v1691 = vadd.f32 %v1689, %v1690
      %v1692 = vrot.slane %v1691, 2
      %v1693 = vadd.f32 %v1691, %v1692
      %v1694 = vrot.slane %v1693, 1
      %v1695 = vadd.f32 %v1693, %v1694
      %v1696 = vsel %vm1590, %v1489, 0.0
      %v1697 = vrot.slane %v1696, 4
      %v1698 = vadd.f32 %v1696, %v1697
      %v1699 = vrot.slane %v1698, 2
      %v1700 = vadd.f32 %v1698, %v1699
      %v1701 = vrot.slane %v1700, 1
      %v1702 = vadd.f32 %v1700, %v1701
      %v1703 = vsel %vm1590, %v1497, 0.0
      %v1704 = vrot.slane %v1703, 4
      %v1705 = vadd.f32 %v1703, %v1704
      %v1706 = vrot.slane %v1705, 2
      %v1707 = vadd.f32 %v1705, %v1706
      %v1708 = vrot.slane %v1707, 1
      %v1709 = vadd.f32 %v1707, %v1708
      %v1710 = vsel %vm1590, %v1505, 0.0
      %v1711 = vrot.slane %v1710, 4
      %v1712 = vadd.f32 %v1710, %v1711
      %v1713 = vrot.slane %v1712, 2
      %v1714 = vadd.f32 %v1712, %v1713
      %v1715 = vrot.slane %v1714, 1
      %v1716 = vadd.f32 %v1714, %v1715
      %v1717 = vsel %vm1590, %v1504, 0.0
      %v1718 = vrot.slane %v1717, 4
      %v1719 = vadd.f32 %v1717, %v1718
      %v1720 = vrot.slane %v1719, 2
      %v1721 = vadd.f32 %v1719, %v1720
      %v1722 = vrot.slane %v1721, 1
      %v1723 = vadd.f32 %v1721, %v1722
      %v1724 = vsel %vm1590, %v1506, 0.0
      %v1725 = vrot.slane %v1724, 4
      %v1726 = vadd.f32 %v1724, %v1725
      %v1727 = vrot.slane %v1726, 2
      %v1728 = vadd.f32 %v1726, %v1727
      %v1729 = vrot.slane %v1728, 1
      %v1730 = vadd.f32 %v1728, %v1729
      %v1731 = vsel %vm1590, %v1514, 0.0
      %v1732 = vrot.slane %v1731, 4
      %v1733 = vadd.f32 %v1731, %v1732
      %v1734 = vrot.slane %v1733, 2
      %v1735 = vadd.f32 %v1733, %v1734
      %v1736 = vrot.slane %v1735, 1
      %v1737 = vadd.f32 %v1735, %v1736
      %v1738 = vsel %vm1590, %v1522, 0.0
      %v1739 = vrot.slane %v1738, 4
      %v1740 = vadd.f32 %v1738, %v1739
      %v1741 = vrot.slane %v1740, 2
      %v1742 = vadd.f32 %v1740, %v1741
      %v1743 = vrot.slane %v1742, 1
      %v1744 = vadd.f32 %v1742, %v1743
      %v1745 = vsel %vm1590, %v1521, 0.0
      %v1746 = vrot.slane %v1745, 4
      %v1747 = vadd.f32 %v1745, %v1746
      %v1748 = vrot.slane %v1747, 2
      %v1749 = vadd.f32 %v1747, %v1748
      %v1750 = vrot.slane %v1749, 1
      %v1751 = vadd.f32 %v1749, %v1750
      %v1752 = vsel %vm1590, %v1523, 0.0
      %v1753 = vrot.slane %v1752, 4
      %v1754 = vadd.f32 %v1752, %v1753
      %v1755 = vrot.slane %v1754, 2
      %v1756 = vadd.f32 %v1754, %v1755
      %v1757 = vrot.slane %v1756, 1
      %v1758 = vadd.f32 %v1756, %v1757
      %v1759 = vsel %vm1590, %v1531, 0.0
      %v1760 = vrot.slane %v1759, 4
      %v1761 = vadd.f32 %v1759, %v1760
      %v1762 = vrot.slane %v1761, 2
      %v1763 = vadd.f32 %v1761, %v1762
      %v1764 = vrot.slane %v1763, 1
      %v1765 = vadd.f32 %v1763, %v1764
      %v1766 = vsel %vm1590, %v1539, 0.0
      %v1767 = vrot.slane %v1766, 4
      %v1768 = vadd.f32 %v1766, %v1767
      %v1769 = vrot.slane %v1768, 2
      %v1770 = vadd.f32 %v1768, %v1769
      %v1771 = vrot.slane %v1770, 1
      %v1772 = vadd.f32 %v1770, %v1771
      %v1773 = vsel %vm1590, %v1538, 0.0
      %v1774 = vrot.slane %v1773, 4
      %v1775 = vadd.f32 %v1773, %v1774
      %v1776 = vrot.slane %v1775, 2
      %v1777 = vadd.f32 %v1775, %v1776
      %v1778 = vrot.slane %v1777, 1
      %v1779 = vadd.f32 %v1777, %v1778
      %v1780 = vsel %vm1590, %v1540, 0.0
      %v1781 = vrot.slane %v1780, 4
      %v1782 = vadd.f32 %v1780, %v1781
      %v1783 = vrot.slane %v1782, 2
      %v1784 = vadd.f32 %v1782, %v1783
      %v1785 = vrot.slane %v1784, 1
      %v1786 = vadd.f32 %v1784, %v1785
      %v1787 = vsel %vm1590, %v1548, 0.0
      %v1788 = vrot.slane %v1787, 4
      %v1789 = vadd.f32 %v1787, %v1788
      %v1790 = vrot.slane %v1789, 2
      %v1791 = vadd.f32 %v1789, %v1790
      %v1792 = vrot.slane %v1791, 1
      %v1793 = vadd.f32 %v1791, %v1792
      %v1794 = vsel %vm1590, %v1556, 0.0
      %v1795 = vrot.slane %v1794, 4
      %v1796 = vadd.f32 %v1794, %v1795
      %v1797 = vrot.slane %v1796, 2
      %v1798 = vadd.f32 %v1796, %v1797
      %v1799 = vrot.slane %v1798, 1
      %v1800 = vadd.f32 %v1798, %v1799
      %v1801 = vsel %vm1590, %v1555, 0.0
      %v1802 = vrot.slane %v1801, 4
      %v1803 = vadd.f32 %v1801, %v1802
      %v1804 = vrot.slane %v1803, 2
      %v1805 = vadd.f32 %v1803, %v1804
      %v1806 = vrot.slane %v1805, 1
      %v1807 = vadd.f32 %v1805, %v1806
      %v1808 = vsel %vm1590, %v1557, 0.0
      %v1809 = vrot.slane %v1808, 4
      %v1810 = vadd.f32 %v1808, %v1809
      %v1811 = vrot.slane %v1810, 2
      %v1812 = vadd.f32 %v1810, %v1811
      %v1813 = vrot.slane %v1812, 1
      %v1814 = vadd.f32 %v1812, %v1813
      %v1815 = vmul.f32 %v1597, 0.25
      %v1816 = vmul.f32 %v1604, 0.25
      %v1817 = vmul.f32 %v1611, 0.25
      %v1818 = vmul.f32 %v1618, 0.25
      %v1819 = vmul.f32 %v1625, 0.25
      %v1820 = vmul.f32 %v1632, 0.25
      %v1821 = vmul.f32 %v1639, 0.25
      %v1822 = vmul.f32 %v1646, 0.25
      %v1823 = vmul.f32 %v1653, 0.25
      %v1824 = vmul.f32 %v1660, 0.25
      %v1825 = vmul.f32 %v1667, 0.25
      %v1826 = vmul.f32 %v1674, 0.25
      %v1827 = vmul.f32 %v1681, 0.25
      %v1828 = vmul.f32 %v1688, 0.25
      %v1829 = vmul.f32 %v1695, 0.25
      %v1830 = vmul.f32 %v1702, 0.25
      %v1831 = vmul.f32 %v1709, 0.25
      %v1832 = vmul.f32 %v1716, 0.25
      %v1833 = vmul.f32 %v1723, 0.25
      %v1834 = vmul.f32 %v1730, 0.25
      %v1835 = vmul.f32 %v1737, 0.25
      %v1836 = vmul.f32 %v1744, 0.25
      %v1837 = vmul.f32 %v1751, 0.25
      %v1838 = vmul.f32 %v1758, 0.25
      %v1839 = vmul.f32 %v1765, 0.25
      %v1840 = vmul.f32 %v1772, 0.25
      %v1841 = vmul.f32 %v1779, 0.25
      %v1842 = vmul.f32 %v1786, 0.25
      %v1843 = vmul.f32 %v1793, 0.25
      %v1844 = vmul.f32 %v1800, 0.25
      %v1845 = vmul.f32 %v1807, 0.25
      %v1846 = vmul.f32 %v1814, 0.25
      %vm1879 = vcmask 1041409
      %v1880 = vsel %vm1879, %v1816, %v1815
      %vm1881 = vcmask 1042434
      %v1882 = vsel %vm1881, %v1817, %v1880
      %vm1883 = vcmask 1043459
      %v1884 = vsel %vm1883, %v1818, %v1882
      %vm1885 = vcmask 1044484
      %v1886 = vsel %vm1885, %v1819, %v1884
      %vm1887 = vcmask 1045509
      %v1888 = vsel %vm1887, %v1820, %v1886
      %vm1889 = vcmask 1046534
      %v1890 = vsel %vm1889, %v1821, %v1888
      %vm1891 = vcmask 1047559
      %v1892 = vsel %vm1891, %v1822, %v1890
      %v1893 = vsel %vm1879, %v1824, %v1823
      %v1894 = vsel %vm1881, %v1825, %v1893
      %v1895 = vsel %vm1883, %v1826, %v1894
      %v1896 = vsel %vm1885, %v1827, %v1895
      %v1897 = vsel %vm1887, %v1828, %v1896
      %v1898 = vsel %vm1889, %v1829, %v1897
      %v1899 = vsel %vm1891, %v1830, %v1898
      %v1900 = vsel %vm1879, %v1832, %v1831
      %v1901 = vsel %vm1881, %v1833, %v1900
      %v1902 = vsel %vm1883, %v1834, %v1901
      %v1903 = vsel %vm1885, %v1835, %v1902
      %v1904 = vsel %vm1887, %v1836, %v1903
      %v1905 = vsel %vm1889, %v1837, %v1904
      %v1906 = vsel %vm1891, %v1838, %v1905
      %v1907 = vsel %vm1879, %v1840, %v1839
      %v1908 = vsel %vm1881, %v1841, %v1907
      %v1909 = vsel %vm1883, %v1842, %v1908
      %v1910 = vsel %vm1885, %v1843, %v1909
      %v1911 = vsel %vm1887, %v1844, %v1910
      %v1912 = vsel %vm1889, %v1845, %v1911
      %v1913 = vsel %vm1891, %v1846, %v1912
      %1918 = vst.msk [vmem:[%s389] sm:$0xff] %vm1028, %v1892
      %1919 = vst.msk [vmem:[%s389 + $0x8] sm:$0xff] %vm1028, %v1899
      %1920 = vst.msk [vmem:[%s389 + $0x10] sm:$0xff] %vm1028, %v1906
      %1921 = vst.msk [vmem:[%s389 + $0x18] sm:$0xff] %vm1028, %v1913
      %s1922 = smul.u32 4, %s21
      %p1923 = scmp.lt.s32.totalorder %s20, 1
      %s1924 = scalar_select %p1923, %s20, 1
      %p1925 = scmp.lt.s32.totalorder %s1922, 7
      %s1926 = scalar_select %p1925, %s1922, 7
      %s1927 = smul.addr %s1924, 8
      %s1928 = sadd.s32 %s1926, %s1927
      %s1929 = smul.addr %s1928, 8
      %s1930 = scalar_lea.vmem %s5, %s1929
      // Predicated region
      $region41: #{bottleneck_forward.5} parent=39 // pred_check
        %p1931 = pneg %p190
      $region42: #{bottleneck_forward.5} parent=39 // pred_check_branch
        %1933 = sbr.rel (%p1931) target = $region44
      $region43: #{bottleneck_forward.5} parent=39 // pred_region
        %s1934 = smul.u32 4, %s21
      $region44: #{bottleneck_forward.5} parent=39 // pred_fallthru
        _
    $region40: #{bottleneck_forward.5} parent=5 // pred_fallthru
      _
    %p1935 = scmp.le.s32.totalorder 2, %s11
    // Predicated region
    $region45: #{bottleneck_forward.5} parent=5 // pred_check
      %p1936 = pneg %p1935
    $region46: #{bottleneck_forward.5} parent=5 // pred_check_branch
      %1938 = sbr.rel (%p1936) target = $region48
    $region47: #{bottleneck_forward.5} parent=5 // pred_region
      %s1939 = ssub.s32 %s11, 2
      // Predicated region
      $region49: #{bottleneck_forward.5} parent=47 // pred_check
        %p1940 = pneg %p196
      $region50: #{bottleneck_forward.5} parent=47 // pred_check_branch
        %1942 = sbr.rel (%p1940) target = $region52
      $region51: #{bottleneck_forward.5} parent=47 // pred_region
        %s1943 = smul.u32 4, %s23
        %p1944 = scmp.lt.s32.totalorder %s22, 1
        %s1945 = scalar_select %p1944, %s22, 1
        %p1946 = scmp.lt.s32.totalorder %s1943, 7
        %s1947 = scalar_select %p1946, %s1943, 7
        %s1948 = smul.addr %s1945, 8
        %s1949 = sadd.s32 %s1947, %s1948
        %s1950 = smul.addr %s1949, 8
        %s1951 = scalar_lea.vmem %s5, %s1950
      $region52: #{bottleneck_forward.5} parent=47 // pred_fallthru
        _
    $region48: #{bottleneck_forward.5} parent=5 // pred_fallthru
      _
  $region6: #{bottleneck_forward.5} parent=0 // loop_footer
    %s15 = sadd.s32 1, %s11
  $region7: #{bottleneck_forward.5} parent=0 // loop_footer_branch
    %10 = sbr.rel target = $region3
  $region8: #{bottleneck_forward.5} parent=0 // loop_exit
    _

</llo_original>
